<compile_context>
chip_gen: v6e
topology: v6e:2x2x1
jax: 0.10.0
libtpu: 0.0.40
codegen_flags: <defaults>
</compile_context>

<pallas_src>
import functools

import jax
import jax.numpy as jnp
from jax.experimental import pallas as pl
from jax.experimental.pallas import tpu as pltpu


# Geometry: input must be 5x5 so that two (k=2, s=1) pools give 3x3 and the
# flattened feature size is 32*3*3 = 288, matching dense1's declared input.
H = W = 5
HP = H + 2                       # padded height = 7
WP = 8                           # padded width 7, rounded up to 8 (sublane-friendly)
S = HP * WP                      # 56 rows per image on the padded grid (multiple of 8)
C = 32                           # channel lanes carried through the conv stages
MARGIN = 16                      # sublane margin >= max |tap offset| (= WP+1 = 9)

# Row offsets on the flattened padded grid.
CONV_OFFS = tuple((kh - 1) * WP + (kw - 1) for kh in range(3) for kw in range(3))
POOL_OFFS = (0, 1, WP, WP + 1)
DENSE_OFFS = tuple(h * WP + w for h in range(3) for w in range(3))


def _mynet2_kernel(x_ref, mask_ref, w1_ref, b1_ref, w2_ref, b2_ref,
                   wd1_ref, bd1_ref, wd2_ref, bd2_ref, out_ref,
                   canvas, col, *, batch):
    rows = batch * S             # live data rows in the canvas
    lo = MARGIN                  # first data row (sublane-aligned)

    def im2col(src_ref):
        # Pack the 9 shifted tap slices into lane blocks of the bf16 scratch so
        # the conv is ONE (rows, 288) @ (288, 32) MXU pass (was 9 K=32 dots).
        for j, d in enumerate(CONV_OFFS):
            col[:, j * C:(j + 1) * C] = (
                src_ref[lo + d:lo + d + rows, :].astype(jnp.bfloat16))

    def pool_max():
        a, b, c2, d2 = (canvas[lo + d:lo + d + rows, :] for d in POOL_OFFS)
        return jnp.maximum(jnp.maximum(a, b), jnp.maximum(c2, d2))

    # Zero only the margin rows (tap/pool reads run up to 9 rows past the data);
    # the data rows are written by conv1 before they are ever read.
    canvas[0:lo, :] = jnp.zeros((lo, C), canvas.dtype)
    canvas[lo + rows:lo + rows + MARGIN, :] = jnp.zeros((MARGIN, C), canvas.dtype)

    # conv1 (3x3, same padding) + bias + ReLU — taps read straight from the
    # zero-padded input, so there is no canvas zero-fill / copy pass.
    im2col(x_ref)
    y = jnp.dot(col[...], w1_ref[...], preferred_element_type=jnp.float32)
    canvas[lo:lo + rows, :] = jnp.maximum(y + b1_ref[...], 0.0)

    # TODO(synk): original code is `F.max_pool2d(2, 1)` (missing tensor arg);
    # interpreted as F.max_pool2d(x, kernel_size=2, stride=1).
    # The mask keeps the valid 4x4 pool-1 region and also provides conv2's
    # zero-padding ring.
    canvas[lo:lo + rows, :] = pool_max() * mask_ref[...]

    # conv2 (3x3, same padding) + bias + ReLU — single wide matmul again.
    im2col(canvas)
    y = jnp.dot(col[...], w2_ref[...], preferred_element_type=jnp.float32)
    canvas[lo:lo + rows, :] = jnp.maximum(y + b2_ref[...], 0.0)

    # second max_pool2d(k=2, s=1) -> valid 3x3x32 feature block per image
    # (garbage rows outside the valid block are never read again).
    canvas[lo:lo + rows, :] = pool_max()

    # Dense head on the `batch` surviving rows only: strided gather of the 9
    # feature positions per image (row stride S between images) into the first
    # `batch` rows of the im2col scratch, then two small MXU passes and ONE
    # lane-dense output store (dense2 is zero-padded to 128 output lanes).
    base = WP + 1
    for j, d in enumerate(DENSE_OFFS):
        col[0:batch, j * C:(j + 1) * C] = (
            canvas[pl.ds(lo + base + d, batch, stride=S), :].astype(jnp.bfloat16))
    feat = col[0:batch, :]                                   # (batch, 288) bf16
    h1 = jnp.dot(feat, wd1_ref[...],
                 preferred_element_type=jnp.float32) + bd1_ref[...]
    logits = jnp.dot(h1.astype(jnp.bfloat16), wd2_ref[...],
                     preferred_element_type=jnp.float32) + bd2_ref[...]
    out_ref[...] = logits                                    # (batch, 128), f32


def mynet2_forward(params, x_nchw):
    n = x_nchw.shape[0]
    assert x_nchw.shape[1:] == (3, H, W)

    # Only per-call layout work left: NCHW -> padded NHWC rows with channels on
    # 32 lanes plus MARGIN guard rows, cast once to bf16 (matmul operand dtype).
    # These tiny ops fuse under jit; all weight reshuffles live in prep_params.
    x = jnp.transpose(x_nchw, (0, 2, 3, 1))                       # (N, 5, 5, 3)
    x = jnp.pad(x, ((0, 0), (1, 1), (1, WP - 1 - W), (0, C - x.shape[-1])))
    x_rows = x.reshape(n * S, C)
    x_rows = jnp.pad(x_rows, ((MARGIN, MARGIN), (0, 0))).astype(jnp.bfloat16)

    # Constant validity mask of the first pool's 4x4 output (folded by XLA).
    hp = jnp.arange(S) // WP
    wp = jnp.arange(S) % WP
    valid = (hp >= 1) & (hp <= H - 1) & (wp >= 1) & (wp <= W - 1)
    mask = jnp.tile(valid.astype(jnp.float32), n).reshape(n * S, 1)

    # NOTE: one gridless call is the right shape while the whole batch fits in
    # VMEM (~40 KB/image incl. the im2col scratch => hundreds of images per
    # call; scaling the batch is the main way to amortize the ~µs launch/DMA
    # overhead).  Past that, add a 1-D grid over image blocks (row counts a
    # multiple of 8) with dimension_semantics=("parallel",) so v7x's two
    # TensorCores share the work.
    out = pl.pallas_call(
        functools.partial(_mynet2_kernel, batch=n),
        out_shape=jax.ShapeDtypeStruct((n, 128), jnp.float32),
        in_specs=[pl.BlockSpec(memory_space=pltpu.MemorySpace.VMEM)] * 10,
        out_specs=pl.BlockSpec(memory_space=pltpu.MemorySpace.VMEM),
        scratch_shapes=[
            pltpu.VMEM((2 * MARGIN + n * S, C), jnp.float32),     # stage canvas
            pltpu.VMEM((n * S, 9 * C), jnp.bfloat16),             # shared im2col
        ],
    )(x_rows, mask,
      params["conv1_w"], params["conv1_b"],
      params["conv2_w"], params["conv2_b"],
      params["dense1_w"], params["dense1_b"],
      params["dense2_w"], params["dense2_b"])
    return out[:, :10]                                            # (N, 10)


def init_params(key):
    """Synthetic parameters in the original PyTorch layouts."""
    keys = jax.random.split(key, 8)
    s = 0.1
    return {
        "conv1_w": jax.random.normal(keys[0], (32, 3, 3, 3), jnp.float32) * s,
        "conv1_b": jax.random.normal(keys[1], (32,), jnp.float32) * s,
        # TODO(synk): __init__ declares nn.Conv2d(3, 32, ...) for conv2, but the
        # forward feeds it 32 channels; in_channels corrected to 32 to be runnable.
        "conv2_w": jax.random.normal(keys[2], (32, 32, 3, 3), jnp.float32) * s,
        "conv2_b": jax.random.normal(keys[3], (32,), jnp.float32) * s,
        "dense1_w": jax.random.normal(keys[4], (128, 32 * 3 * 3), jnp.float32) * s,
        "dense1_b": jax.random.normal(keys[5], (128,), jnp.float32) * s,
        "dense2_w": jax.random.normal(keys[6], (10, 128), jnp.float32) * s,
        "dense2_b": jax.random.normal(keys[7], (10,), jnp.float32) * s,
    }


def prep_params(p):
    """One-time weight layout prep (hoisted out of the forward pass)."""
    def conv_w(w_oihw):
        o, i, kh, kw = w_oihw.shape
        w = jnp.transpose(w_oihw, (2, 3, 1, 0)).reshape(kh * kw, i, o)  # (9, I, O)
        w = jnp.pad(w, ((0, 0), (0, C - i), (0, 0)))                    # Cin -> 32
        return w.reshape(kh * kw * C, o).astype(jnp.bfloat16)           # (288, O)

    # dense1 rows permuted so the kernel's (h, w, c) im2col feature layout
    # matches the PyTorch NCHW flatten; dense2 zero-padded to 128 output lanes
    # so the final store is lane-dense.
    # TODO(synk): flatten is missing in the original forward; it is inserted
    # (in PyTorch NCHW order) so dense1 (32*3*3 -> 128) applies.
    wd1 = p["dense1_w"].reshape(128, C, 3, 3)            # (O, C, H, W) NCHW flatten
    wd1 = jnp.transpose(wd1, (2, 3, 1, 0)).reshape(9 * C, 128)          # (288, 128)
    wd2 = jnp.zeros((128, 128), jnp.float32).at[:, :10].set(p["dense2_w"].T)
    bd2 = jnp.zeros((128,), jnp.float32).at[:10].set(p["dense2_b"])
    return {
        "conv1_w": conv_w(p["conv1_w"]),
        "conv1_b": p["conv1_b"].reshape(1, C).astype(jnp.float32),
        "conv2_w": conv_w(p["conv2_w"]),
        "conv2_b": p["conv2_b"].reshape(1, C).astype(jnp.float32),
        "dense1_w": wd1.astype(jnp.bfloat16),
        "dense1_b": p["dense1_b"].reshape(1, 128).astype(jnp.float32),
        "dense2_w": wd2.astype(jnp.bfloat16),
        "dense2_b": bd2.reshape(1, 128).astype(jnp.float32),
    }


if __name__ == "__main__":
    key = jax.random.PRNGKey(0)
    pkey, xkey = jax.random.split(key)
    params = prep_params(init_params(pkey))      # weight layout work done once
    # 5x5 spatial input: after two (k=2, s=1) max-pools the map is 3x3, so the
    # flattened feature size is 32*3*3 = 288, matching dense1's declared input.
    x = jax.random.normal(xkey, (2, 3, H, W), jnp.float32)
    out = jax.jit(mynet2_forward)(params, x)
    out = jax.block_until_ready(out)
    assert out.shape == (2, 10) and out.dtype == jnp.float32
    print("KERNEL_OK")
</pallas_src>

<mosaic_0001>
module attributes {stable_mosaic.version = 11 : i64} {
  func.func @_mynet2_kernel(%arg0: memref<144x32xbf16, #tpu.memory_space<vmem>>, %arg1: memref<112x1xf32, #tpu.memory_space<vmem>>, %arg2: memref<288x32xbf16, #tpu.memory_space<vmem>>, %arg3: memref<1x32xf32, #tpu.memory_space<vmem>>, %arg4: memref<288x32xbf16, #tpu.memory_space<vmem>>, %arg5: memref<1x32xf32, #tpu.memory_space<vmem>>, %arg6: memref<288x128xbf16, #tpu.memory_space<vmem>>, %arg7: memref<1x128xf32, #tpu.memory_space<vmem>>, %arg8: memref<128x128xbf16, #tpu.memory_space<vmem>>, %arg9: memref<1x128xf32, #tpu.memory_space<vmem>>, %arg10: memref<2x128xf32, #tpu.memory_space<vmem>>, %arg11: memref<144x32xf32, #tpu.memory_space<vmem>>, %arg12: memref<112x288xbf16, #tpu.memory_space<vmem>>) attributes {dimension_semantics = [], scalar_prefetch = 0 : i64, scratch_operands = 2 : i64, tpu.core_type = #tpu.core_type<tc>} {
    %cst = arith.constant 0.000000e+00 : f32
    %0 = vector.broadcast %cst : f32 to vector<16x32xf32>
    %c0 = arith.constant 0 : index
    %c0_0 = arith.constant 0 : index
    %1 = vector.load %arg11[%c0, %c0_0] : memref<144x32xf32, #tpu.memory_space<vmem>>, vector<16x32xf32>
    tpu.vector_store %arg11[%c0, %c0_0], %0 {strides = array<i32>} : memref<144x32xf32, #tpu.memory_space<vmem>>, vector<16x32xf32>,
    %cst_1 = arith.constant 0.000000e+00 : f32
    %2 = vector.broadcast %cst_1 : f32 to vector<16x32xf32>
    %c128 = arith.constant 128 : index
    %c0_2 = arith.constant 0 : index
    %3 = vector.load %arg11[%c128, %c0_2] : memref<144x32xf32, #tpu.memory_space<vmem>>, vector<16x32xf32>
    tpu.vector_store %arg11[%c128, %c0_2], %2 {strides = array<i32>} : memref<144x32xf32, #tpu.memory_space<vmem>>, vector<16x32xf32>,
    %c7 = arith.constant 7 : index
    %c0_3 = arith.constant 0 : index
    %4 = vector.load %arg0[%c7, %c0_3] : memref<144x32xbf16, #tpu.memory_space<vmem>>, vector<112x32xbf16>
    %c0_4 = arith.constant 0 : index
    %c0_5 = arith.constant 0 : index
    %5 = vector.load %arg12[%c0_4, %c0_5] : memref<112x288xbf16, #tpu.memory_space<vmem>>, vector<112x32xbf16>
    tpu.vector_store %arg12[%c0_4, %c0_5], %4 {strides = array<i32>} : memref<112x288xbf16, #tpu.memory_space<vmem>>, vector<112x32xbf16>,
    %c8 = arith.constant 8 : index
    %c0_6 = arith.constant 0 : index
    %6 = vector.load %arg0[%c8, %c0_6] : memref<144x32xbf16, #tpu.memory_space<vmem>>, vector<112x32xbf16>
    %c0_7 = arith.constant 0 : index
    %c32 = arith.constant 32 : index
    %7 = vector.load %arg12[%c0_7, %c32] : memref<112x288xbf16, #tpu.memory_space<vmem>>, vector<112x32xbf16>
    tpu.vector_store %arg12[%c0_7, %c32], %6 {strides = array<i32>} : memref<112x288xbf16, #tpu.memory_space<vmem>>, vector<112x32xbf16>,
    %c9 = arith.constant 9 : index
    %c0_8 = arith.constant 0 : index
    %8 = vector.load %arg0[%c9, %c0_8] : memref<144x32xbf16, #tpu.memory_space<vmem>>, vector<112x32xbf16>
    %c0_9 = arith.constant 0 : index
    %c64 = arith.constant 64 : index
    %9 = vector.load %arg12[%c0_9, %c64] : memref<112x288xbf16, #tpu.memory_space<vmem>>, vector<112x32xbf16>
    tpu.vector_store %arg12[%c0_9, %c64], %8 {strides = array<i32>} : memref<112x288xbf16, #tpu.memory_space<vmem>>, vector<112x32xbf16>,
    %c15 = arith.constant 15 : index
    %c0_10 = arith.constant 0 : index
    %10 = vector.load %arg0[%c15, %c0_10] : memref<144x32xbf16, #tpu.memory_space<vmem>>, vector<112x32xbf16>
    %c0_11 = arith.constant 0 : index
    %c96 = arith.constant 96 : index
    %11 = vector.load %arg12[%c0_11, %c96] : memref<112x288xbf16, #tpu.memory_space<vmem>>, vector<112x32xbf16>
    tpu.vector_store %arg12[%c0_11, %c96], %10 {strides = array<i32>} : memref<112x288xbf16, #tpu.memory_space<vmem>>, vector<112x32xbf16>,
    %c16 = arith.constant 16 : index
    %c0_12 = arith.constant 0 : index
    %12 = vector.load %arg0[%c16, %c0_12] : memref<144x32xbf16, #tpu.memory_space<vmem>>, vector<112x32xbf16>
    %c0_13 = arith.constant 0 : index
    %c128_14 = arith.constant 128 : index
    %13 = vector.load %arg12[%c0_13, %c128_14] : memref<112x288xbf16, #tpu.memory_space<vmem>>, vector<112x32xbf16>
    tpu.vector_store %arg12[%c0_13, %c128_14], %12 {strides = array<i32>} : memref<112x288xbf16, #tpu.memory_space<vmem>>, vector<112x32xbf16>,
    %c17 = arith.constant 17 : index
    %c0_15 = arith.constant 0 : index
    %14 = vector.load %arg0[%c17, %c0_15] : memref<144x32xbf16, #tpu.memory_space<vmem>>, vector<112x32xbf16>
    %c0_16 = arith.constant 0 : index
    %c160 = arith.constant 160 : index
    %15 = vector.load %arg12[%c0_16, %c160] : memref<112x288xbf16, #tpu.memory_space<vmem>>, vector<112x32xbf16>
    tpu.vector_store %arg12[%c0_16, %c160], %14 {strides = array<i32>} : memref<112x288xbf16, #tpu.memory_space<vmem>>, vector<112x32xbf16>,
    %c23 = arith.constant 23 : index
    %c0_17 = arith.constant 0 : index
    %16 = vector.load %arg0[%c23, %c0_17] : memref<144x32xbf16, #tpu.memory_space<vmem>>, vector<112x32xbf16>
    %c0_18 = arith.constant 0 : index
    %c192 = arith.constant 192 : index
    %17 = vector.load %arg12[%c0_18, %c192] : memref<112x288xbf16, #tpu.memory_space<vmem>>, vector<112x32xbf16>
    tpu.vector_store %arg12[%c0_18, %c192], %16 {strides = array<i32>} : memref<112x288xbf16, #tpu.memory_space<vmem>>, vector<112x32xbf16>,
    %c24 = arith.constant 24 : index
    %c0_19 = arith.constant 0 : index
    %18 = vector.load %arg0[%c24, %c0_19] : memref<144x32xbf16, #tpu.memory_space<vmem>>, vector<112x32xbf16>
    %c0_20 = arith.constant 0 : index
    %c224 = arith.constant 224 : index
    %19 = vector.load %arg12[%c0_20, %c224] : memref<112x288xbf16, #tpu.memory_space<vmem>>, vector<112x32xbf16>
    tpu.vector_store %arg12[%c0_20, %c224], %18 {strides = array<i32>} : memref<112x288xbf16, #tpu.memory_space<vmem>>, vector<112x32xbf16>,
    %c25 = arith.constant 25 : index
    %c0_21 = arith.constant 0 : index
    %20 = vector.load %arg0[%c25, %c0_21] : memref<144x32xbf16, #tpu.memory_space<vmem>>, vector<112x32xbf16>
    %c0_22 = arith.constant 0 : index
    %c256 = arith.constant 256 : index
    %21 = vector.load %arg12[%c0_22, %c256] : memref<112x288xbf16, #tpu.memory_space<vmem>>, vector<112x32xbf16>
    tpu.vector_store %arg12[%c0_22, %c256], %20 {strides = array<i32>} : memref<112x288xbf16, #tpu.memory_space<vmem>>, vector<112x32xbf16>,
    %c0_23 = arith.constant 0 : index
    %c0_24 = arith.constant 0 : index
    %22 = vector.load %arg12[%c0_23, %c0_24] : memref<112x288xbf16, #tpu.memory_space<vmem>>, vector<112x288xbf16>
    %c0_25 = arith.constant 0 : index
    %c0_26 = arith.constant 0 : index
    %23 = vector.load %arg2[%c0_25, %c0_26] : memref<288x32xbf16, #tpu.memory_space<vmem>>, vector<288x32xbf16>
    %cst_27 = arith.constant dense<0.000000e+00> : vector<112x32xf32>
    %24 = tpu.matmul %22, %23, %cst_27 {dimension_numbers = #tpu.dot_dimension_numbers<[1], [0], [0], [1], [0, 0, 1, 1], [], []>} : vector<112x288xbf16>, vector<288x32xbf16>, vector<112x32xf32> -> vector<112x32xf32>
    %c0_28 = arith.constant 0 : index
    %c0_29 = arith.constant 0 : index
    %25 = vector.load %arg3[%c0_28, %c0_29] : memref<1x32xf32, #tpu.memory_space<vmem>>, vector<1x32xf32>
    %26 = vector.broadcast %25 : vector<1x32xf32> to vector<112x32xf32>
    %27 = arith.addf %24, %26 : vector<112x32xf32>
    %cst_30 = arith.constant 0.000000e+00 : f32
    %28 = vector.broadcast %cst_30 : f32 to vector<112x32xf32>
    %29 = arith.maximumf %27, %28 : vector<112x32xf32>
    %c16_31 = arith.constant 16 : index
    %c0_32 = arith.constant 0 : index
    %30 = vector.load %arg11[%c16_31, %c0_32] : memref<144x32xf32, #tpu.memory_space<vmem>>, vector<112x32xf32>
    tpu.vector_store %arg11[%c16_31, %c0_32], %29 {strides = array<i32>} : memref<144x32xf32, #tpu.memory_space<vmem>>, vector<112x32xf32>,
    %c16_33 = arith.constant 16 : index
    %c0_34 = arith.constant 0 : index
    %31 = vector.load %arg11[%c16_33, %c0_34] : memref<144x32xf32, #tpu.memory_space<vmem>>, vector<112x32xf32>
    %c17_35 = arith.constant 17 : index
    %c0_36 = arith.constant 0 : index
    %32 = vector.load %arg11[%c17_35, %c0_36] : memref<144x32xf32, #tpu.memory_space<vmem>>, vector<112x32xf32>
    %c24_37 = arith.constant 24 : index
    %c0_38 = arith.constant 0 : index
    %33 = vector.load %arg11[%c24_37, %c0_38] : memref<144x32xf32, #tpu.memory_space<vmem>>, vector<112x32xf32>
    %c25_39 = arith.constant 25 : index
    %c0_40 = arith.constant 0 : index
    %34 = vector.load %arg11[%c25_39, %c0_40] : memref<144x32xf32, #tpu.memory_space<vmem>>, vector<112x32xf32>
    %35 = arith.maximumf %31, %32 : vector<112x32xf32>
    %36 = arith.maximumf %33, %34 : vector<112x32xf32>
    %37 = arith.maximumf %35, %36 : vector<112x32xf32>
    %c0_41 = arith.constant 0 : index
    %c0_42 = arith.constant 0 : index
    %38 = vector.load %arg1[%c0_41, %c0_42] : memref<112x1xf32, #tpu.memory_space<vmem>>, vector<112x1xf32>
    %39 = vector.broadcast %38 : vector<112x1xf32> to vector<112x32xf32>
    %40 = arith.mulf %37, %39 : vector<112x32xf32>
    %c16_43 = arith.constant 16 : index
    %c0_44 = arith.constant 0 : index
    %41 = vector.load %arg11[%c16_43, %c0_44] : memref<144x32xf32, #tpu.memory_space<vmem>>, vector<112x32xf32>
    tpu.vector_store %arg11[%c16_43, %c0_44], %40 {strides = array<i32>} : memref<144x32xf32, #tpu.memory_space<vmem>>, vector<112x32xf32>,
    %c7_45 = arith.constant 7 : index
    %c0_46 = arith.constant 0 : index
    %42 = vector.load %arg11[%c7_45, %c0_46] : memref<144x32xf32, #tpu.memory_space<vmem>>, vector<112x32xf32>
    %43 = arith.truncf %42 : vector<112x32xf32> to vector<112x32xbf16>
    %c0_47 = arith.constant 0 : index
    %c0_48 = arith.constant 0 : index
    %44 = vector.load %arg12[%c0_47, %c0_48] : memref<112x288xbf16, #tpu.memory_space<vmem>>, vector<112x32xbf16>
    tpu.vector_store %arg12[%c0_47, %c0_48], %43 {strides = array<i32>} : memref<112x288xbf16, #tpu.memory_space<vmem>>, vector<112x32xbf16>,
    %c8_49 = arith.constant 8 : index
    %c0_50 = arith.constant 0 : index
    %45 = vector.load %arg11[%c8_49, %c0_50] : memref<144x32xf32, #tpu.memory_space<vmem>>, vector<112x32xf32>
    %46 = arith.truncf %45 : vector<112x32xf32> to vector<112x32xbf16>
    %c0_51 = arith.constant 0 : index
    %c32_52 = arith.constant 32 : index
    %47 = vector.load %arg12[%c0_51, %c32_52] : memref<112x288xbf16, #tpu.memory_space<vmem>>, vector<112x32xbf16>
    tpu.vector_store %arg12[%c0_51, %c32_52], %46 {strides = array<i32>} : memref<112x288xbf16, #tpu.memory_space<vmem>>, vector<112x32xbf16>,
    %c9_53 = arith.constant 9 : index
    %c0_54 = arith.constant 0 : index
    %48 = vector.load %arg11[%c9_53, %c0_54] : memref<144x32xf32, #tpu.memory_space<vmem>>, vector<112x32xf32>
    %49 = arith.truncf %48 : vector<112x32xf32> to vector<112x32xbf16>
    %c0_55 = arith.constant 0 : index
    %c64_56 = arith.constant 64 : index
    %50 = vector.load %arg12[%c0_55, %c64_56] : memref<112x288xbf16, #tpu.memory_space<vmem>>, vector<112x32xbf16>
    tpu.vector_store %arg12[%c0_55, %c64_56], %49 {strides = array<i32>} : memref<112x288xbf16, #tpu.memory_space<vmem>>, vector<112x32xbf16>,
    %c15_57 = arith.constant 15 : index
    %c0_58 = arith.constant 0 : index
    %51 = vector.load %arg11[%c15_57, %c0_58] : memref<144x32xf32, #tpu.memory_space<vmem>>, vector<112x32xf32>
    %52 = arith.truncf %51 : vector<112x32xf32> to vector<112x32xbf16>
    %c0_59 = arith.constant 0 : index
    %c96_60 = arith.constant 96 : index
    %53 = vector.load %arg12[%c0_59, %c96_60] : memref<112x288xbf16, #tpu.memory_space<vmem>>, vector<112x32xbf16>
    tpu.vector_store %arg12[%c0_59, %c96_60], %52 {strides = array<i32>} : memref<112x288xbf16, #tpu.memory_space<vmem>>, vector<112x32xbf16>,
    %c16_61 = arith.constant 16 : index
    %c0_62 = arith.constant 0 : index
    %54 = vector.load %arg11[%c16_61, %c0_62] : memref<144x32xf32, #tpu.memory_space<vmem>>, vector<112x32xf32>
    %55 = arith.truncf %54 : vector<112x32xf32> to vector<112x32xbf16>
    %c0_63 = arith.constant 0 : index
    %c128_64 = arith.constant 128 : index
    %56 = vector.load %arg12[%c0_63, %c128_64] : memref<112x288xbf16, #tpu.memory_space<vmem>>, vector<112x32xbf16>
    tpu.vector_store %arg12[%c0_63, %c128_64], %55 {strides = array<i32>} : memref<112x288xbf16, #tpu.memory_space<vmem>>, vector<112x32xbf16>,
    %c17_65 = arith.constant 17 : index
    %c0_66 = arith.constant 0 : index
    %57 = vector.load %arg11[%c17_65, %c0_66] : memref<144x32xf32, #tpu.memory_space<vmem>>, vector<112x32xf32>
    %58 = arith.truncf %57 : vector<112x32xf32> to vector<112x32xbf16>
    %c0_67 = arith.constant 0 : index
    %c160_68 = arith.constant 160 : index
    %59 = vector.load %arg12[%c0_67, %c160_68] : memref<112x288xbf16, #tpu.memory_space<vmem>>, vector<112x32xbf16>
    tpu.vector_store %arg12[%c0_67, %c160_68], %58 {strides = array<i32>} : memref<112x288xbf16, #tpu.memory_space<vmem>>, vector<112x32xbf16>,
    %c23_69 = arith.constant 23 : index
    %c0_70 = arith.constant 0 : index
    %60 = vector.load %arg11[%c23_69, %c0_70] : memref<144x32xf32, #tpu.memory_space<vmem>>, vector<112x32xf32>
    %61 = arith.truncf %60 : vector<112x32xf32> to vector<112x32xbf16>
    %c0_71 = arith.constant 0 : index
    %c192_72 = arith.constant 192 : index
    %62 = vector.load %arg12[%c0_71, %c192_72] : memref<112x288xbf16, #tpu.memory_space<vmem>>, vector<112x32xbf16>
    tpu.vector_store %arg12[%c0_71, %c192_72], %61 {strides = array<i32>} : memref<112x288xbf16, #tpu.memory_space<vmem>>, vector<112x32xbf16>,
    %c24_73 = arith.constant 24 : index
    %c0_74 = arith.constant 0 : index
    %63 = vector.load %arg11[%c24_73, %c0_74] : memref<144x32xf32, #tpu.memory_space<vmem>>, vector<112x32xf32>
    %64 = arith.truncf %63 : vector<112x32xf32> to vector<112x32xbf16>
    %c0_75 = arith.constant 0 : index
    %c224_76 = arith.constant 224 : index
    %65 = vector.load %arg12[%c0_75, %c224_76] : memref<112x288xbf16, #tpu.memory_space<vmem>>, vector<112x32xbf16>
    tpu.vector_store %arg12[%c0_75, %c224_76], %64 {strides = array<i32>} : memref<112x288xbf16, #tpu.memory_space<vmem>>, vector<112x32xbf16>,
    %c25_77 = arith.constant 25 : index
    %c0_78 = arith.constant 0 : index
    %66 = vector.load %arg11[%c25_77, %c0_78] : memref<144x32xf32, #tpu.memory_space<vmem>>, vector<112x32xf32>
    %67 = arith.truncf %66 : vector<112x32xf32> to vector<112x32xbf16>
    %c0_79 = arith.constant 0 : index
    %c256_80 = arith.constant 256 : index
    %68 = vector.load %arg12[%c0_79, %c256_80] : memref<112x288xbf16, #tpu.memory_space<vmem>>, vector<112x32xbf16>
    tpu.vector_store %arg12[%c0_79, %c256_80], %67 {strides = array<i32>} : memref<112x288xbf16, #tpu.memory_space<vmem>>, vector<112x32xbf16>,
    %c0_81 = arith.constant 0 : index
    %c0_82 = arith.constant 0 : index
    %69 = vector.load %arg12[%c0_81, %c0_82] : memref<112x288xbf16, #tpu.memory_space<vmem>>, vector<112x288xbf16>
    %c0_83 = arith.constant 0 : index
    %c0_84 = arith.constant 0 : index
    %70 = vector.load %arg4[%c0_83, %c0_84] : memref<288x32xbf16, #tpu.memory_space<vmem>>, vector<288x32xbf16>
    %cst_85 = arith.constant dense<0.000000e+00> : vector<112x32xf32>
    %71 = tpu.matmul %69, %70, %cst_85 {dimension_numbers = #tpu.dot_dimension_numbers<[1], [0], [0], [1], [0, 0, 1, 1], [], []>} : vector<112x288xbf16>, vector<288x32xbf16>, vector<112x32xf32> -> vector<112x32xf32>
    %c0_86 = arith.constant 0 : index
    %c0_87 = arith.constant 0 : index
    %72 = vector.load %arg5[%c0_86, %c0_87] : memref<1x32xf32, #tpu.memory_space<vmem>>, vector<1x32xf32>
    %73 = vector.broadcast %72 : vector<1x32xf32> to vector<112x32xf32>
    %74 = arith.addf %71, %73 : vector<112x32xf32>
    %cst_88 = arith.constant 0.000000e+00 : f32
    %75 = vector.broadcast %cst_88 : f32 to vector<112x32xf32>
    %76 = arith.maximumf %74, %75 : vector<112x32xf32>
    %c16_89 = arith.constant 16 : index
    %c0_90 = arith.constant 0 : index
    %77 = vector.load %arg11[%c16_89, %c0_90] : memref<144x32xf32, #tpu.memory_space<vmem>>, vector<112x32xf32>
    tpu.vector_store %arg11[%c16_89, %c0_90], %76 {strides = array<i32>} : memref<144x32xf32, #tpu.memory_space<vmem>>, vector<112x32xf32>,
    %c16_91 = arith.constant 16 : index
    %c0_92 = arith.constant 0 : index
    %78 = vector.load %arg11[%c16_91, %c0_92] : memref<144x32xf32, #tpu.memory_space<vmem>>, vector<112x32xf32>
    %c17_93 = arith.constant 17 : index
    %c0_94 = arith.constant 0 : index
    %79 = vector.load %arg11[%c17_93, %c0_94] : memref<144x32xf32, #tpu.memory_space<vmem>>, vector<112x32xf32>
    %c24_95 = arith.constant 24 : index
    %c0_96 = arith.constant 0 : index
    %80 = vector.load %arg11[%c24_95, %c0_96] : memref<144x32xf32, #tpu.memory_space<vmem>>, vector<112x32xf32>
    %c25_97 = arith.constant 25 : index
    %c0_98 = arith.constant 0 : index
    %81 = vector.load %arg11[%c25_97, %c0_98] : memref<144x32xf32, #tpu.memory_space<vmem>>, vector<112x32xf32>
    %82 = arith.maximumf %78, %79 : vector<112x32xf32>
    %83 = arith.maximumf %80, %81 : vector<112x32xf32>
    %84 = arith.maximumf %82, %83 : vector<112x32xf32>
    %c16_99 = arith.constant 16 : index
    %c0_100 = arith.constant 0 : index
    %85 = vector.load %arg11[%c16_99, %c0_100] : memref<144x32xf32, #tpu.memory_space<vmem>>, vector<112x32xf32>
    tpu.vector_store %arg11[%c16_99, %c0_100], %84 {strides = array<i32>} : memref<144x32xf32, #tpu.memory_space<vmem>>, vector<112x32xf32>,
    %c25_101 = arith.constant 25 : index
    %c0_102 = arith.constant 0 : index
    %86 = tpu.strided_load %arg11[%c25_101, %c0_102] {strides = array<i32: 56, 1>} : memref<144x32xf32, #tpu.memory_space<vmem>>, vector<2x32xf32>
    %87 = arith.truncf %86 : vector<2x32xf32> to vector<2x32xbf16>
    %c0_103 = arith.constant 0 : index
    %c0_104 = arith.constant 0 : index
    %88 = vector.load %arg12[%c0_103, %c0_104] : memref<112x288xbf16, #tpu.memory_space<vmem>>, vector<2x32xbf16>
    tpu.vector_store %arg12[%c0_103, %c0_104], %87 {strides = array<i32>} : memref<112x288xbf16, #tpu.memory_space<vmem>>, vector<2x32xbf16>,
    %c26 = arith.constant 26 : index
    %c0_105 = arith.constant 0 : index
    %89 = tpu.strided_load %arg11[%c26, %c0_105] {strides = array<i32: 56, 1>} : memref<144x32xf32, #tpu.memory_space<vmem>>, vector<2x32xf32>
    %90 = arith.truncf %89 : vector<2x32xf32> to vector<2x32xbf16>
    %c0_106 = arith.constant 0 : index
    %c32_107 = arith.constant 32 : index
    %91 = vector.load %arg12[%c0_106, %c32_107] : memref<112x288xbf16, #tpu.memory_space<vmem>>, vector<2x32xbf16>
    tpu.vector_store %arg12[%c0_106, %c32_107], %90 {strides = array<i32>} : memref<112x288xbf16, #tpu.memory_space<vmem>>, vector<2x32xbf16>,
    %c27 = arith.constant 27 : index
    %c0_108 = arith.constant 0 : index
    %92 = tpu.strided_load %arg11[%c27, %c0_108] {strides = array<i32: 56, 1>} : memref<144x32xf32, #tpu.memory_space<vmem>>, vector<2x32xf32>
    %93 = arith.truncf %92 : vector<2x32xf32> to vector<2x32xbf16>
    %c0_109 = arith.constant 0 : index
    %c64_110 = arith.constant 64 : index
    %94 = vector.load %arg12[%c0_109, %c64_110] : memref<112x288xbf16, #tpu.memory_space<vmem>>, vector<2x32xbf16>
    tpu.vector_store %arg12[%c0_109, %c64_110], %93 {strides = array<i32>} : memref<112x288xbf16, #tpu.memory_space<vmem>>, vector<2x32xbf16>,
    %c33 = arith.constant 33 : index
    %c0_111 = arith.constant 0 : index
    %95 = tpu.strided_load %arg11[%c33, %c0_111] {strides = array<i32: 56, 1>} : memref<144x32xf32, #tpu.memory_space<vmem>>, vector<2x32xf32>
    %96 = arith.truncf %95 : vector<2x32xf32> to vector<2x32xbf16>
    %c0_112 = arith.constant 0 : index
    %c96_113 = arith.constant 96 : index
    %97 = vector.load %arg12[%c0_112, %c96_113] : memref<112x288xbf16, #tpu.memory_space<vmem>>, vector<2x32xbf16>
    tpu.vector_store %arg12[%c0_112, %c96_113], %96 {strides = array<i32>} : memref<112x288xbf16, #tpu.memory_space<vmem>>, vector<2x32xbf16>,
    %c34 = arith.constant 34 : index
    %c0_114 = arith.constant 0 : index
    %98 = tpu.strided_load %arg11[%c34, %c0_114] {strides = array<i32: 56, 1>} : memref<144x32xf32, #tpu.memory_space<vmem>>, vector<2x32xf32>
    %99 = arith.truncf %98 : vector<2x32xf32> to vector<2x32xbf16>
    %c0_115 = arith.constant 0 : index
    %c128_116 = arith.constant 128 : index
    %100 = vector.load %arg12[%c0_115, %c128_116] : memref<112x288xbf16, #tpu.memory_space<vmem>>, vector<2x32xbf16>
    tpu.vector_store %arg12[%c0_115, %c128_116], %99 {strides = array<i32>} : memref<112x288xbf16, #tpu.memory_space<vmem>>, vector<2x32xbf16>,
    %c35 = arith.constant 35 : index
    %c0_117 = arith.constant 0 : index
    %101 = tpu.strided_load %arg11[%c35, %c0_117] {strides = array<i32: 56, 1>} : memref<144x32xf32, #tpu.memory_space<vmem>>, vector<2x32xf32>
    %102 = arith.truncf %101 : vector<2x32xf32> to vector<2x32xbf16>
    %c0_118 = arith.constant 0 : index
    %c160_119 = arith.constant 160 : index
    %103 = vector.load %arg12[%c0_118, %c160_119] : memref<112x288xbf16, #tpu.memory_space<vmem>>, vector<2x32xbf16>
    tpu.vector_store %arg12[%c0_118, %c160_119], %102 {strides = array<i32>} : memref<112x288xbf16, #tpu.memory_space<vmem>>, vector<2x32xbf16>,
    %c41 = arith.constant 41 : index
    %c0_120 = arith.constant 0 : index
    %104 = tpu.strided_load %arg11[%c41, %c0_120] {strides = array<i32: 56, 1>} : memref<144x32xf32, #tpu.memory_space<vmem>>, vector<2x32xf32>
    %105 = arith.truncf %104 : vector<2x32xf32> to vector<2x32xbf16>
    %c0_121 = arith.constant 0 : index
    %c192_122 = arith.constant 192 : index
    %106 = vector.load %arg12[%c0_121, %c192_122] : memref<112x288xbf16, #tpu.memory_space<vmem>>, vector<2x32xbf16>
    tpu.vector_store %arg12[%c0_121, %c192_122], %105 {strides = array<i32>} : memref<112x288xbf16, #tpu.memory_space<vmem>>, vector<2x32xbf16>,
    %c42 = arith.constant 42 : index
    %c0_123 = arith.constant 0 : index
    %107 = tpu.strided_load %arg11[%c42, %c0_123] {strides = array<i32: 56, 1>} : memref<144x32xf32, #tpu.memory_space<vmem>>, vector<2x32xf32>
    %108 = arith.truncf %107 : vector<2x32xf32> to vector<2x32xbf16>
    %c0_124 = arith.constant 0 : index
    %c224_125 = arith.constant 224 : index
    %109 = vector.load %arg12[%c0_124, %c224_125] : memref<112x288xbf16, #tpu.memory_space<vmem>>, vector<2x32xbf16>
    tpu.vector_store %arg12[%c0_124, %c224_125], %108 {strides = array<i32>} : memref<112x288xbf16, #tpu.memory_space<vmem>>, vector<2x32xbf16>,
    %c43 = arith.constant 43 : index
    %c0_126 = arith.constant 0 : index
    %110 = tpu.strided_load %arg11[%c43, %c0_126] {strides = array<i32: 56, 1>} : memref<144x32xf32, #tpu.memory_space<vmem>>, vector<2x32xf32>
    %111 = arith.truncf %110 : vector<2x32xf32> to vector<2x32xbf16>
    %c0_127 = arith.constant 0 : index
    %c256_128 = arith.constant 256 : index
    %112 = vector.load %arg12[%c0_127, %c256_128] : memref<112x288xbf16, #tpu.memory_space<vmem>>, vector<2x32xbf16>
    tpu.vector_store %arg12[%c0_127, %c256_128], %111 {strides = array<i32>} : memref<112x288xbf16, #tpu.memory_space<vmem>>, vector<2x32xbf16>,
    %c0_129 = arith.constant 0 : index
    %c0_130 = arith.constant 0 : index
    %113 = vector.load %arg12[%c0_129, %c0_130] : memref<112x288xbf16, #tpu.memory_space<vmem>>, vector<2x288xbf16>
    %c0_131 = arith.constant 0 : index
    %c0_132 = arith.constant 0 : index
    %114 = vector.load %arg6[%c0_131, %c0_132] : memref<288x128xbf16, #tpu.memory_space<vmem>>, vector<288x128xbf16>
    %cst_133 = arith.constant dense<0.000000e+00> : vector<2x128xf32>
    %115 = tpu.matmul %113, %114, %cst_133 {dimension_numbers = #tpu.dot_dimension_numbers<[1], [0], [0], [1], [0, 0, 1, 1], [], []>} : vector<2x288xbf16>, vector<288x128xbf16>, vector<2x128xf32> -> vector<2x128xf32>
    %c0_134 = arith.constant 0 : index
    %c0_135 = arith.constant 0 : index
    %116 = vector.load %arg7[%c0_134, %c0_135] : memref<1x128xf32, #tpu.memory_space<vmem>>, vector<1x128xf32>
    %117 = vector.broadcast %116 : vector<1x128xf32> to vector<2x128xf32>
    %118 = arith.addf %115, %117 : vector<2x128xf32>
    %119 = arith.truncf %118 : vector<2x128xf32> to vector<2x128xbf16>
    %c0_136 = arith.constant 0 : index
    %c0_137 = arith.constant 0 : index
    %120 = vector.load %arg8[%c0_136, %c0_137] : memref<128x128xbf16, #tpu.memory_space<vmem>>, vector<128x128xbf16>
    %cst_138 = arith.constant dense<0.000000e+00> : vector<2x128xf32>
    %121 = tpu.matmul %119, %120, %cst_138 {dimension_numbers = #tpu.dot_dimension_numbers<[1], [0], [0], [1], [0, 0, 1, 1], [], []>} : vector<2x128xbf16>, vector<128x128xbf16>, vector<2x128xf32> -> vector<2x128xf32>
    %c0_139 = arith.constant 0 : index
    %c0_140 = arith.constant 0 : index
    %122 = vector.load %arg9[%c0_139, %c0_140] : memref<1x128xf32, #tpu.memory_space<vmem>>, vector<1x128xf32>
    %123 = vector.broadcast %122 : vector<1x128xf32> to vector<2x128xf32>
    %124 = arith.addf %121, %123 : vector<2x128xf32>
    %c0_141 = arith.constant 0 : index
    %c0_142 = arith.constant 0 : index
    %125 = vector.load %arg10[%c0_141, %c0_142] : memref<2x128xf32, #tpu.memory_space<vmem>>, vector<2x128xf32>
    tpu.vector_store %arg10[%c0_141, %c0_142], %124 {strides = array<i32>} : memref<2x128xf32, #tpu.memory_space<vmem>>, vector<2x128xf32>,
    return
  }
}

</mosaic_0001>

<llo_original>
// kernel: tile.8
$region0: #{tile.8}
  #allocation0 [shape = 's32[1]{0}', space=sflag, size = 0x4, scoped, tag = 'scoped memory for tile.8']
  %s0 = inlined_call_operand.vmem [shape: f32[56], index: 0, kind: input, shape index: {}]
  %s1 = inlined_call_operand.vmem [shape: f32[2,56], index: 1, kind: output, shape index: {}]
  // Predicated region
  $region2: #{tile.8} parent=0 // pred_check
    _
  $region3: #{tile.8} parent=0 // pred_check_branch
    %3 = sbr.rel (0) target = $region5
  $region4: #{tile.8} parent=0 // pred_region
    _
  $region5: #{tile.8} parent=0 // pred_fallthru
    _
  %v4 = vld [vmem:[%s0] ss:$0 sm:$0xff]
  %5 = vst [vmem:[%s1] sm:$0x3] %v4

// kernel: tile.0
$region0: #{tile.0}
  %s0 = inlined_call_operand.vmem [shape: f32[2,56], index: 0, kind: input, shape index: {}]
  %s1 = inlined_call_operand.vmem [shape: f32[112,1], index: 1, kind: output, shape index: {}]
  $region1: #{tile.0} parent=0
    #allocation0 [shape = 'u8[4096]{0}', space=vmem, size = 0x1000, scoped, tag = 'scoped mem for input reshape']
    %s3 = sshll.u32 1, 2
    %s4 = ssub.s32 %s3, 1
    %v5 = vld [vmem:[%s0] sm:%s4]
    %6 = vst [vmem:[#allocation0] sm:%s4] %v5
    %v7 = vld [vmem:[#allocation0] sm:$0x3]
    %vm8 = vcmask 7168
    %9 = vst.msk [vmem:[%s1] ss:$56 sm:$0x3] %vm8, %v7
    %v10 = vld [vmem:[#allocation0] sm:$0x3]
    %11 = vrot.lane.b32.xlu0 %v10, 127
    %v12 = vpop.permute.xlu0 %11
    %vm13 = vcmask 7168
    %s14 = scalar_lea.vmem %s1, 1
    %15 = vst.msk [vmem:[%s14] ss:$56 sm:$0x3] %vm13, %v12
    %v16 = vld [vmem:[#allocation0] sm:$0x3]
    %17 = vrot.lane.b32.xlu0 %v16, 126
    %v18 = vpop.permute.xlu0 %17
    %vm19 = vcmask 7168
    %s20 = scalar_lea.vmem %s1, 2
    %21 = vst.msk [vmem:[%s20] ss:$56 sm:$0x3] %vm19, %v18
    %v22 = vld [vmem:[#allocation0] sm:$0x3]
    %23 = vrot.lane.b32.xlu0 %v22, 125
    %v24 = vpop.permute.xlu0 %23
    %vm25 = vcmask 7168
    %s26 = scalar_lea.vmem %s1, 3
    %27 = vst.msk [vmem:[%s26] ss:$56 sm:$0x3] %vm25, %v24
    %v28 = vld [vmem:[#allocation0] sm:$0x3]
    %29 = vrot.lane.b32.xlu0 %v28, 124
    %v30 = vpop.permute.xlu0 %29
    %vm31 = vcmask 7168
    %s32 = scalar_lea.vmem %s1, 4
    %33 = vst.msk [vmem:[%s32] ss:$56 sm:$0x3] %vm31, %v30
    %v34 = vld [vmem:[#allocation0] sm:$0x3]
    %35 = vrot.lane.b32.xlu0 %v34, 123
    %v36 = vpop.permute.xlu0 %35
    %vm37 = vcmask 7168
    %s38 = scalar_lea.vmem %s1, 5
    %39 = vst.msk [vmem:[%s38] ss:$56 sm:$0x3] %vm37, %v36
    %v40 = vld [vmem:[#allocation0] sm:$0x3]
    %41 = vrot.lane.b32.xlu0 %v40, 122
    %v42 = vpop.permute.xlu0 %41
    %vm43 = vcmask 7168
    %s44 = scalar_lea.vmem %s1, 6
    %45 = vst.msk [vmem:[%s44] ss:$56 sm:$0x3] %vm43, %v42
    %v46 = vld [vmem:[#allocation0] sm:$0x3]
    %47 = vrot.lane.b32.xlu0 %v46, 121
    %v48 = vpop.permute.xlu0 %47
    %vm49 = vcmask 7168
    %s50 = scalar_lea.vmem %s1, 7
    %51 = vst.msk [vmem:[%s50] ss:$56 sm:$0x3] %vm49, %v48
    %s52 = scalar_lea.vmem [#allocation0], 1
    %s53 = smov 3
    %v54 = vld [vmem:[%s52] ss:$-1 sm:%s53]
    %55 = vrot.lane.b32.xlu0 %v54, 120
    %v56 = vpop.permute.xlu0 %55
    %vm57 = vcmask 7168
    %s58 = scalar_lea.vmem %s1, 64
    %59 = vst.msk [vmem:[%s58] ss:$-56 sm:$0x3] %vm57, %v56
    %s60 = scalar_lea.vmem [#allocation0], 1
    %s61 = smov 3
    %v62 = vld [vmem:[%s60] ss:$-1 sm:%s61]
    %63 = vrot.lane.b32.xlu0 %v62, 119
    %v64 = vpop.permute.xlu0 %63
    %vm65 = vcmask 7168
    %s66 = scalar_lea.vmem %s1, 65
    %67 = vst.msk [vmem:[%s66] ss:$-56 sm:$0x3] %vm65, %v64
    %s68 = scalar_lea.vmem [#allocation0], 1
    %s69 = smov 3
    %v70 = vld [vmem:[%s68] ss:$-1 sm:%s69]
    %71 = vrot.lane.b32.xlu0 %v70, 118
    %v72 = vpop.permute.xlu0 %71
    %vm73 = vcmask 7168
    %s74 = scalar_lea.vmem %s1, 66
    %75 = vst.msk [vmem:[%s74] ss:$-56 sm:$0x3] %vm73, %v72
    %s76 = scalar_lea.vmem [#allocation0], 1
    %s77 = smov 3
    %v78 = vld [vmem:[%s76] ss:$-1 sm:%s77]
    %79 = vrot.lane.b32.xlu0 %v78, 117
    %v80 = vpop.permute.xlu0 %79
    %vm81 = vcmask 7168
    %s82 = scalar_lea.vmem %s1, 67
    %83 = vst.msk [vmem:[%s82] ss:$-56 sm:$0x3] %vm81, %v80
    %s84 = scalar_lea.vmem [#allocation0], 1
    %s85 = smov 3
    %v86 = vld [vmem:[%s84] ss:$-1 sm:%s85]
    %87 = vrot.lane.b32.xlu0 %v86, 116
    %v88 = vpop.permute.xlu0 %87
    %vm89 = vcmask 7168
    %s90 = scalar_lea.vmem %s1, 68
    %91 = vst.msk [vmem:[%s90] ss:$-56 sm:$0x3] %vm89, %v88
    %s92 = scalar_lea.vmem [#allocation0], 1
    %s93 = smov 3
    %v94 = vld [vmem:[%s92] ss:$-1 sm:%s93]
    %95 = vrot.lane.b32.xlu0 %v94, 115
    %v96 = vpop.permute.xlu0 %95
    %vm97 = vcmask 7168
    %s98 = scalar_lea.vmem %s1, 69
    %99 = vst.msk [vmem:[%s98] ss:$-56 sm:$0x3] %vm97, %v96
    %s100 = scalar_lea.vmem [#allocation0], 1
    %s101 = smov 3
    %v102 = vld [vmem:[%s100] ss:$-1 sm:%s101]
    %103 = vrot.lane.b32.xlu0 %v102, 114
    %v104 = vpop.permute.xlu0 %103
    %vm105 = vcmask 7168
    %s106 = scalar_lea.vmem %s1, 70
    %107 = vst.msk [vmem:[%s106] ss:$-56 sm:$0x3] %vm105, %v104
    %s108 = scalar_lea.vmem [#allocation0], 1
    %s109 = smov 3
    %v110 = vld [vmem:[%s108] ss:$-1 sm:%s109]
    %111 = vrot.lane.b32.xlu0 %v110, 113
    %v112 = vpop.permute.xlu0 %111
    %vm113 = vcmask 7168
    %s114 = scalar_lea.vmem %s1, 71
    %115 = vst.msk [vmem:[%s114] ss:$-56 sm:$0x3] %vm113, %v112
    %s116 = scalar_lea.vmem [#allocation0], 1
    %s117 = smov 3
    %v118 = vld [vmem:[%s116] ss:$-1 sm:%s117]
    %119 = vrot.lane.b32.xlu0 %v118, 112
    %v120 = vpop.permute.xlu0 %119
    %vm121 = vcmask 7168
    %s122 = scalar_lea.vmem %s1, 72
    %123 = vst.msk [vmem:[%s122] ss:$-56 sm:$0x3] %vm121, %v120
    %s124 = scalar_lea.vmem [#allocation0], 1
    %s125 = smov 3
    %v126 = vld [vmem:[%s124] ss:$-1 sm:%s125]
    %127 = vrot.lane.b32.xlu0 %v126, 111
    %v128 = vpop.permute.xlu0 %127
    %vm129 = vcmask 7168
    %s130 = scalar_lea.vmem %s1, 73
    %131 = vst.msk [vmem:[%s130] ss:$-56 sm:$0x3] %vm129, %v128
    %s132 = scalar_lea.vmem [#allocation0], 1
    %s133 = smov 3
    %v134 = vld [vmem:[%s132] ss:$-1 sm:%s133]
    %135 = vrot.lane.b32.xlu0 %v134, 110
    %v136 = vpop.permute.xlu0 %135
    %vm137 = vcmask 7168
    %s138 = scalar_lea.vmem %s1, 74
    %139 = vst.msk [vmem:[%s138] ss:$-56 sm:$0x3] %vm137, %v136
    %s140 = scalar_lea.vmem [#allocation0], 1
    %s141 = smov 3
    %v142 = vld [vmem:[%s140] ss:$-1 sm:%s141]
    %143 = vrot.lane.b32.xlu0 %v142, 109
    %v144 = vpop.permute.xlu0 %143
    %vm145 = vcmask 7168
    %s146 = scalar_lea.vmem %s1, 75
    %147 = vst.msk [vmem:[%s146] ss:$-56 sm:$0x3] %vm145, %v144
    %s148 = scalar_lea.vmem [#allocation0], 1
    %s149 = smov 3
    %v150 = vld [vmem:[%s148] ss:$-1 sm:%s149]
    %151 = vrot.lane.b32.xlu0 %v150, 108
    %v152 = vpop.permute.xlu0 %151
    %vm153 = vcmask 7168
    %s154 = scalar_lea.vmem %s1, 76
    %155 = vst.msk [vmem:[%s154] ss:$-56 sm:$0x3] %vm153, %v152
    %s156 = scalar_lea.vmem [#allocation0], 1
    %s157 = smov 3
    %v158 = vld [vmem:[%s156] ss:$-1 sm:%s157]
    %159 = vrot.lane.b32.xlu0 %v158, 107
    %v160 = vpop.permute.xlu0 %159
    %vm161 = vcmask 7168
    %s162 = scalar_lea.vmem %s1, 77
    %163 = vst.msk [vmem:[%s162] ss:$-56 sm:$0x3] %vm161, %v160
    %s164 = scalar_lea.vmem [#allocation0], 1
    %s165 = smov 3
    %v166 = vld [vmem:[%s164] ss:$-1 sm:%s165]
    %167 = vrot.lane.b32.xlu0 %v166, 106
    %v168 = vpop.permute.xlu0 %167
    %vm169 = vcmask 7168
    %s170 = scalar_lea.vmem %s1, 78
    %171 = vst.msk [vmem:[%s170] ss:$-56 sm:$0x3] %vm169, %v168
    %s172 = scalar_lea.vmem [#allocation0], 1
    %s173 = smov 3
    %v174 = vld [vmem:[%s172] ss:$-1 sm:%s173]
    %175 = vrot.lane.b32.xlu0 %v174, 105
    %v176 = vpop.permute.xlu0 %175
    %vm177 = vcmask 7168
    %s178 = scalar_lea.vmem %s1, 79
    %179 = vst.msk [vmem:[%s178] ss:$-56 sm:$0x3] %vm177, %v176
    %s180 = scalar_lea.vmem [#allocation0], 1
    %s181 = smov 3
    %v182 = vld [vmem:[%s180] ss:$-1 sm:%s181]
    %183 = vrot.lane.b32.xlu0 %v182, 104
    %v184 = vpop.permute.xlu0 %183
    %vm185 = vcmask 7168
    %s186 = scalar_lea.vmem %s1, 80
    %187 = vst.msk [vmem:[%s186] ss:$-56 sm:$0x3] %vm185, %v184
    %s188 = scalar_lea.vmem [#allocation0], 1
    %s189 = smov 3
    %v190 = vld [vmem:[%s188] ss:$-1 sm:%s189]
    %191 = vrot.lane.b32.xlu0 %v190, 103
    %v192 = vpop.permute.xlu0 %191
    %vm193 = vcmask 7168
    %s194 = scalar_lea.vmem %s1, 81
    %195 = vst.msk [vmem:[%s194] ss:$-56 sm:$0x3] %vm193, %v192
    %s196 = scalar_lea.vmem [#allocation0], 1
    %s197 = smov 3
    %v198 = vld [vmem:[%s196] ss:$-1 sm:%s197]
    %199 = vrot.lane.b32.xlu0 %v198, 102
    %v200 = vpop.permute.xlu0 %199
    %vm201 = vcmask 7168
    %s202 = scalar_lea.vmem %s1, 82
    %203 = vst.msk [vmem:[%s202] ss:$-56 sm:$0x3] %vm201, %v200
    %s204 = scalar_lea.vmem [#allocation0], 1
    %s205 = smov 3
    %v206 = vld [vmem:[%s204] ss:$-1 sm:%s205]
    %207 = vrot.lane.b32.xlu0 %v206, 101
    %v208 = vpop.permute.xlu0 %207
    %vm209 = vcmask 7168
    %s210 = scalar_lea.vmem %s1, 83
    %211 = vst.msk [vmem:[%s210] ss:$-56 sm:$0x3] %vm209, %v208
    %s212 = scalar_lea.vmem [#allocation0], 1
    %s213 = smov 3
    %v214 = vld [vmem:[%s212] ss:$-1 sm:%s213]
    %215 = vrot.lane.b32.xlu0 %v214, 100
    %v216 = vpop.permute.xlu0 %215
    %vm217 = vcmask 7168
    %s218 = scalar_lea.vmem %s1, 84
    %219 = vst.msk [vmem:[%s218] ss:$-56 sm:$0x3] %vm217, %v216
    %s220 = scalar_lea.vmem [#allocation0], 1
    %s221 = smov 3
    %v222 = vld [vmem:[%s220] ss:$-1 sm:%s221]
    %223 = vrot.lane.b32.xlu0 %v222, 99
    %v224 = vpop.permute.xlu0 %223
    %vm225 = vcmask 7168
    %s226 = scalar_lea.vmem %s1, 85
    %227 = vst.msk [vmem:[%s226] ss:$-56 sm:$0x3] %vm225, %v224
    %s228 = scalar_lea.vmem [#allocation0], 1
    %s229 = smov 3
    %v230 = vld [vmem:[%s228] ss:$-1 sm:%s229]
    %231 = vrot.lane.b32.xlu0 %v230, 98
    %v232 = vpop.permute.xlu0 %231
    %vm233 = vcmask 7168
    %s234 = scalar_lea.vmem %s1, 86
    %235 = vst.msk [vmem:[%s234] ss:$-56 sm:$0x3] %vm233, %v232
    %s236 = scalar_lea.vmem [#allocation0], 1
    %s237 = smov 3
    %v238 = vld [vmem:[%s236] ss:$-1 sm:%s237]
    %239 = vrot.lane.b32.xlu0 %v238, 97
    %v240 = vpop.permute.xlu0 %239
    %vm241 = vcmask 7168
    %s242 = scalar_lea.vmem %s1, 87
    %243 = vst.msk [vmem:[%s242] ss:$-56 sm:$0x3] %vm241, %v240
    %v244 = vld [vmem:[#allocation0] sm:$0x3]
    %245 = vrot.lane.b32.xlu0 %v244, 96
    %v246 = vpop.permute.xlu0 %245
    %vm247 = vcmask 7168
    %s248 = scalar_lea.vmem %s1, 32
    %249 = vst.msk [vmem:[%s248] ss:$56 sm:$0x3] %vm247, %v246
    %v250 = vld [vmem:[#allocation0] sm:$0x3]
    %251 = vrot.lane.b32.xlu0 %v250, 95
    %v252 = vpop.permute.xlu0 %251
    %vm253 = vcmask 7168
    %s254 = scalar_lea.vmem %s1, 33
    %255 = vst.msk [vmem:[%s254] ss:$56 sm:$0x3] %vm253, %v252
    %v256 = vld [vmem:[#allocation0] sm:$0x3]
    %257 = vrot.lane.b32.xlu0 %v256, 94
    %v258 = vpop.permute.xlu0 %257
    %vm259 = vcmask 7168
    %s260 = scalar_lea.vmem %s1, 34
    %261 = vst.msk [vmem:[%s260] ss:$56 sm:$0x3] %vm259, %v258
    %v262 = vld [vmem:[#allocation0] sm:$0x3]
    %263 = vrot.lane.b32.xlu0 %v262, 93
    %v264 = vpop.permute.xlu0 %263
    %vm265 = vcmask 7168
    %s266 = scalar_lea.vmem %s1, 35
    %267 = vst.msk [vmem:[%s266] ss:$56 sm:$0x3] %vm265, %v264
    %v268 = vld [vmem:[#allocation0] sm:$0x3]
    %269 = vrot.lane.b32.xlu0 %v268, 92
    %v270 = vpop.permute.xlu0 %269
    %vm271 = vcmask 7168
    %s272 = scalar_lea.vmem %s1, 36
    %273 = vst.msk [vmem:[%s272] ss:$56 sm:$0x3] %vm271, %v270
    %v274 = vld [vmem:[#allocation0] sm:$0x3]
    %275 = vrot.lane.b32.xlu0 %v274, 91
    %v276 = vpop.permute.xlu0 %275
    %vm277 = vcmask 7168
    %s278 = scalar_lea.vmem %s1, 37
    %279 = vst.msk [vmem:[%s278] ss:$56 sm:$0x3] %vm277, %v276
    %v280 = vld [vmem:[#allocation0] sm:$0x3]
    %281 = vrot.lane.b32.xlu0 %v280, 90
    %v282 = vpop.permute.xlu0 %281
    %vm283 = vcmask 7168
    %s284 = scalar_lea.vmem %s1, 38
    %285 = vst.msk [vmem:[%s284] ss:$56 sm:$0x3] %vm283, %v282
    %v286 = vld [vmem:[#allocation0] sm:$0x3]
    %287 = vrot.lane.b32.xlu0 %v286, 89
    %v288 = vpop.permute.xlu0 %287
    %vm289 = vcmask 7168
    %s290 = scalar_lea.vmem %s1, 39
    %291 = vst.msk [vmem:[%s290] ss:$56 sm:$0x3] %vm289, %v288
    %s292 = scalar_lea.vmem [#allocation0], 1
    %s293 = smov 3
    %v294 = vld [vmem:[%s292] ss:$-1 sm:%s293]
    %295 = vrot.lane.b32.xlu0 %v294, 88
    %v296 = vpop.permute.xlu0 %295
    %vm297 = vcmask 7168
    %s298 = scalar_lea.vmem %s1, 96
    %299 = vst.msk [vmem:[%s298] ss:$-56 sm:$0x3] %vm297, %v296
    %s300 = scalar_lea.vmem [#allocation0], 1
    %s301 = smov 3
    %v302 = vld [vmem:[%s300] ss:$-1 sm:%s301]
    %303 = vrot.lane.b32.xlu0 %v302, 87
    %v304 = vpop.permute.xlu0 %303
    %vm305 = vcmask 7168
    %s306 = scalar_lea.vmem %s1, 97
    %307 = vst.msk [vmem:[%s306] ss:$-56 sm:$0x3] %vm305, %v304
    %s308 = scalar_lea.vmem [#allocation0], 1
    %s309 = smov 3
    %v310 = vld [vmem:[%s308] ss:$-1 sm:%s309]
    %311 = vrot.lane.b32.xlu0 %v310, 86
    %v312 = vpop.permute.xlu0 %311
    %vm313 = vcmask 7168
    %s314 = scalar_lea.vmem %s1, 98
    %315 = vst.msk [vmem:[%s314] ss:$-56 sm:$0x3] %vm313, %v312
    %s316 = scalar_lea.vmem [#allocation0], 1
    %s317 = smov 3
    %v318 = vld [vmem:[%s316] ss:$-1 sm:%s317]
    %319 = vrot.lane.b32.xlu0 %v318, 85
    %v320 = vpop.permute.xlu0 %319
    %vm321 = vcmask 7168
    %s322 = scalar_lea.vmem %s1, 99
    %323 = vst.msk [vmem:[%s322] ss:$-56 sm:$0x3] %vm321, %v320
    %s324 = scalar_lea.vmem [#allocation0], 1
    %s325 = smov 3
    %v326 = vld [vmem:[%s324] ss:$-1 sm:%s325]
    %327 = vrot.lane.b32.xlu0 %v326, 84
    %v328 = vpop.permute.xlu0 %327
    %vm329 = vcmask 7168
    %s330 = scalar_lea.vmem %s1, 100
    %331 = vst.msk [vmem:[%s330] ss:$-56 sm:$0x3] %vm329, %v328
    %s332 = scalar_lea.vmem [#allocation0], 1
    %s333 = smov 3
    %v334 = vld [vmem:[%s332] ss:$-1 sm:%s333]
    %335 = vrot.lane.b32.xlu0 %v334, 83
    %v336 = vpop.permute.xlu0 %335
    %vm337 = vcmask 7168
    %s338 = scalar_lea.vmem %s1, 101
    %339 = vst.msk [vmem:[%s338] ss:$-56 sm:$0x3] %vm337, %v336
    %s340 = scalar_lea.vmem [#allocation0], 1
    %s341 = smov 3
    %v342 = vld [vmem:[%s340] ss:$-1 sm:%s341]
    %343 = vrot.lane.b32.xlu0 %v342, 82
    %v344 = vpop.permute.xlu0 %343
    %vm345 = vcmask 7168
    %s346 = scalar_lea.vmem %s1, 102
    %347 = vst.msk [vmem:[%s346] ss:$-56 sm:$0x3] %vm345, %v344
    %s348 = scalar_lea.vmem [#allocation0], 1
    %s349 = smov 3
    %v350 = vld [vmem:[%s348] ss:$-1 sm:%s349]
    %351 = vrot.lane.b32.xlu0 %v350, 81
    %v352 = vpop.permute.xlu0 %351
    %vm353 = vcmask 7168
    %s354 = scalar_lea.vmem %s1, 103
    %355 = vst.msk [vmem:[%s354] ss:$-56 sm:$0x3] %vm353, %v352
    %s356 = scalar_lea.vmem [#allocation0], 1
    %s357 = smov 3
    %v358 = vld [vmem:[%s356] ss:$-1 sm:%s357]
    %359 = vrot.lane.b32.xlu0 %v358, 80
    %v360 = vpop.permute.xlu0 %359
    %vm361 = vcmask 7168
    %s362 = scalar_lea.vmem %s1, 104
    %363 = vst.msk [vmem:[%s362] ss:$-56 sm:$0x3] %vm361, %v360
    %s364 = scalar_lea.vmem [#allocation0], 1
    %s365 = smov 3
    %v366 = vld [vmem:[%s364] ss:$-1 sm:%s365]
    %367 = vrot.lane.b32.xlu0 %v366, 79
    %v368 = vpop.permute.xlu0 %367
    %vm369 = vcmask 7168
    %s370 = scalar_lea.vmem %s1, 105
    %371 = vst.msk [vmem:[%s370] ss:$-56 sm:$0x3] %vm369, %v368
    %s372 = scalar_lea.vmem [#allocation0], 1
    %s373 = smov 3
    %v374 = vld [vmem:[%s372] ss:$-1 sm:%s373]
    %375 = vrot.lane.b32.xlu0 %v374, 78
    %v376 = vpop.permute.xlu0 %375
    %vm377 = vcmask 7168
    %s378 = scalar_lea.vmem %s1, 106
    %379 = vst.msk [vmem:[%s378] ss:$-56 sm:$0x3] %vm377, %v376
    %s380 = scalar_lea.vmem [#allocation0], 1
    %s381 = smov 3
    %v382 = vld [vmem:[%s380] ss:$-1 sm:%s381]
    %383 = vrot.lane.b32.xlu0 %v382, 77
    %v384 = vpop.permute.xlu0 %383
    %vm385 = vcmask 7168
    %s386 = scalar_lea.vmem %s1, 107
    %387 = vst.msk [vmem:[%s386] ss:$-56 sm:$0x3] %vm385, %v384
    %s388 = scalar_lea.vmem [#allocation0], 1
    %s389 = smov 3
    %v390 = vld [vmem:[%s388] ss:$-1 sm:%s389]
    %391 = vrot.lane.b32.xlu0 %v390, 76
    %v392 = vpop.permute.xlu0 %391
    %vm393 = vcmask 7168
    %s394 = scalar_lea.vmem %s1, 108
    %395 = vst.msk [vmem:[%s394] ss:$-56 sm:$0x3] %vm393, %v392
    %s396 = scalar_lea.vmem [#allocation0], 1
    %s397 = smov 3
    %v398 = vld [vmem:[%s396] ss:$-1 sm:%s397]
    %399 = vrot.lane.b32.xlu0 %v398, 75
    %v400 = vpop.permute.xlu0 %399
    %vm401 = vcmask 7168
    %s402 = scalar_lea.vmem %s1, 109
    %403 = vst.msk [vmem:[%s402] ss:$-56 sm:$0x3] %vm401, %v400
    %s404 = scalar_lea.vmem [#allocation0], 1
    %s405 = smov 3
    %v406 = vld [vmem:[%s404] ss:$-1 sm:%s405]
    %407 = vrot.lane.b32.xlu0 %v406, 74
    %v408 = vpop.permute.xlu0 %407
    %vm409 = vcmask 7168
    %s410 = scalar_lea.vmem %s1, 110
    %411 = vst.msk [vmem:[%s410] ss:$-56 sm:$0x3] %vm409, %v408
    %s412 = scalar_lea.vmem [#allocation0], 1
    %s413 = smov 3
    %v414 = vld [vmem:[%s412] ss:$-1 sm:%s413]
    %415 = vrot.lane.b32.xlu0 %v414, 73
    %v416 = vpop.permute.xlu0 %415
    %vm417 = vcmask 7168
    %s418 = scalar_lea.vmem %s1, 111
    %419 = vst.msk [vmem:[%s418] ss:$-56 sm:$0x3] %vm417, %v416

// kernel: mynet2_forward.1
$region0: #{mynet2_forward.1}
  #allocation0 [shape = 'u32[]', space=smem, size = 0x4, offset = 0x4, fixed_abs, tag = 'smem constant byte address 0x4 - core index']
  #allocation1 [shape = 'u32[144,128]{1,0:T(1,128)}', space=vmem, size = 0x12000, scoped, tag = 'internal scratch']
  #allocation2 [shape = 'f32[144,32]{1,0:T(8,128)}', space=vmem, size = 0x12000, scoped, tag = 'scratch operand']
  #allocation3 [shape = 'bf16[112,288]{1,0:T(8,128)(2,1)}', space=vmem, size = 0x15000, scoped, tag = 'scratch operand']
  %s0 = inlined_call_operand.vmem [shape: bf16[144,32], index: 0, kind: input, shape index: {}]
  %s1 = inlined_call_operand.vmem [shape: f32[112,1], index: 1, kind: input, shape index: {}]
  %s2 = inlined_call_operand.vmem [shape: bf16[288,32], index: 2, kind: input, shape index: {}]
  %s3 = inlined_call_operand.vmem [shape: f32[1,32], index: 3, kind: input, shape index: {}]
  %s4 = inlined_call_operand.vmem [shape: bf16[288,32], index: 4, kind: input, shape index: {}]
  %s5 = inlined_call_operand.vmem [shape: f32[1,32], index: 5, kind: input, shape index: {}]
  %s6 = inlined_call_operand.vmem [shape: bf16[288,128], index: 6, kind: input, shape index: {}]
  %s7 = inlined_call_operand.vmem [shape: f32[1,128], index: 7, kind: input, shape index: {}]
  %s8 = inlined_call_operand.vmem [shape: bf16[128,128], index: 8, kind: input, shape index: {}]
  %s9 = inlined_call_operand.vmem [shape: f32[1,128], index: 9, kind: input, shape index: {}]
  %s10 = inlined_call_operand.hbm [shape: f32[2,128], index: 10, kind: output, shape index: {}]
  %s11 = sld [smem:[#allocation0]]
  $region50: #{mynet2_forward.1} parent=0
    _
  %s13 = ssub.s32 1, %s11
  %s14 = scalar_select 0, %s13, %s11
  $region1: #{mynet2_forward.1} parent=0
    #allocation4 [shape = 'u8[1024]{0}', space=vmem, size = 0x400, scoped, tag = 'output window, operand 0, single buffered']
    #allocation5 [shape = 's32[1]{0}', space=sflag, size = 0x4, scoped, tag = 'scoped memory for mynet2_forward.1']
    %15 = vsyncpa [#allocation5], 0
    // Predicated region
    $region2: #{mynet2_forward.1} parent=1 // pred_check
      _
    $region3: #{mynet2_forward.1} parent=1 // pred_check_branch
      %17 = sbr.rel (0) target = $region5
    $region4: #{mynet2_forward.1} parent=1 // pred_region
      _
    $region5: #{mynet2_forward.1} parent=1 // pred_fallthru
      _
    // Predicated region
    $region6: #{mynet2_forward.1} parent=1 // pred_check
      _
    $region7: #{mynet2_forward.1} parent=1 // pred_check_branch
      %19 = sbr.rel (0) target = $region9
    $region8: #{mynet2_forward.1} parent=1 // pred_region
      _
    $region9: #{mynet2_forward.1} parent=1 // pred_fallthru
      _
    // Predicated region
    $region10: #{mynet2_forward.1} parent=1 // pred_check
      _
    $region11: #{mynet2_forward.1} parent=1 // pred_check_branch
      %21 = sbr.rel (0) target = $region13
    $region12: #{mynet2_forward.1} parent=1 // pred_region
      _
    $region13: #{mynet2_forward.1} parent=1 // pred_fallthru
      _
    // Predicated region
    $region14: #{mynet2_forward.1} parent=1 // pred_check
      _
    $region15: #{mynet2_forward.1} parent=1 // pred_check_branch
      %23 = sbr.rel (0) target = $region17
    $region16: #{mynet2_forward.1} parent=1 // pred_region
      _
    $region17: #{mynet2_forward.1} parent=1 // pred_fallthru
      _
    // Predicated region
    $region18: #{mynet2_forward.1} parent=1 // pred_check
      _
    $region19: #{mynet2_forward.1} parent=1 // pred_check_branch
      %25 = sbr.rel (0) target = $region21
    $region20: #{mynet2_forward.1} parent=1 // pred_region
      _
    $region21: #{mynet2_forward.1} parent=1 // pred_fallthru
      _
    // Predicated region
    $region22: #{mynet2_forward.1} parent=1 // pred_check
      _
    $region23: #{mynet2_forward.1} parent=1 // pred_check_branch
      %27 = sbr.rel (0) target = $region25
    $region24: #{mynet2_forward.1} parent=1 // pred_region
      _
    $region25: #{mynet2_forward.1} parent=1 // pred_fallthru
      _
    // Predicated region
    $region26: #{mynet2_forward.1} parent=1 // pred_check
      _
    $region27: #{mynet2_forward.1} parent=1 // pred_check_branch
      %29 = sbr.rel (0) target = $region29
    $region28: #{mynet2_forward.1} parent=1 // pred_region
      _
    $region29: #{mynet2_forward.1} parent=1 // pred_fallthru
      _
    // Predicated region
    $region30: #{mynet2_forward.1} parent=1 // pred_check
      _
    $region31: #{mynet2_forward.1} parent=1 // pred_check_branch
      %31 = sbr.rel (0) target = $region33
    $region32: #{mynet2_forward.1} parent=1 // pred_region
      _
    $region33: #{mynet2_forward.1} parent=1 // pred_fallthru
      _
    // Predicated region
    $region34: #{mynet2_forward.1} parent=1 // pred_check
      _
    $region35: #{mynet2_forward.1} parent=1 // pred_check_branch
      %33 = sbr.rel (0) target = $region37
    $region36: #{mynet2_forward.1} parent=1 // pred_region
      _
    $region37: #{mynet2_forward.1} parent=1 // pred_fallthru
      _
    // Predicated region
    $region38: #{mynet2_forward.1} parent=1 // pred_check
      _
    $region39: #{mynet2_forward.1} parent=1 // pred_check_branch
      %35 = sbr.rel (0) target = $region41
    $region40: #{mynet2_forward.1} parent=1 // pred_region
      _
    $region41: #{mynet2_forward.1} parent=1 // pred_fallthru
      _
    %vm37 = vcmask 261120
    %38 = vst.msk [vmem:[#allocation2] sm:$0xff] %vm37, 0.0
    %39 = vst.msk [vmem:[#allocation2 + $0x8] sm:$0xff] %vm37, 0.0
    %40 = vst.msk [vmem:[#allocation2 + $0x80] sm:$0xff] %vm37, 0.0
    %41 = vst.msk [vmem:[#allocation2 + $0x88] sm:$0xff] %vm37, 0.0
    %v42 = vld [vmem:[%s0] sm:$0x8]
    %v43 = vld [vmem:[%s0 + $0x4] sm:$0xf]
    %v44 = vld [vmem:[%s0 + $0x8] sm:$0xf]
    %v45 = vld [vmem:[%s0 + $0xc] sm:$0xf]
    %v46 = vld [vmem:[%s0 + $0x10] sm:$0xf]
    %v47 = vld [vmem:[%s0 + $0x14] sm:$0xf]
    %v48 = vld [vmem:[%s0 + $0x18] sm:$0xf]
    %v49 = vld [vmem:[%s0 + $0x1c] sm:$0xf]
    %v50 = vld [vmem:[%s0 + $0x20] sm:$0xf]
    %v51 = vld [vmem:[%s0 + $0x24] sm:$0xf]
    %v52 = vld [vmem:[%s0 + $0x28] sm:$0xf]
    %v53 = vld [vmem:[%s0 + $0x2c] sm:$0xf]
    %v54 = vld [vmem:[%s0 + $0x30] sm:$0xf]
    %v55 = vld [vmem:[%s0 + $0x34] sm:$0xf]
    %v56 = vld [vmem:[%s0 + $0x38] sm:$0xf]
    %vm57 = vsmask.f32 256
    %vm58 = vsmask.f32 4368
    %vm59 = vmor %vm57, %vm58
    %v61 = vshrl.u32 %v42, 16
    %v63 = vrot.slane %v61, 7
    %v64 = vrot.slane %v63, 4
    %v66 = vshrl.u32 %v43, 16
    %v68 = vrot.slane %v66, 7
    %v69 = vshll.u32 %v43, 16
    %v71 = vor.u32 %v68, %v69
    %v72 = vsel %vm59, %v64, %v71
    %v73 = vrot.slane %v68, 4
    %v75 = vshrl.u32 %v44, 16
    %v77 = vrot.slane %v75, 7
    %v78 = vshll.u32 %v44, 16
    %v80 = vor.u32 %v77, %v78
    %v81 = vsel %vm59, %v73, %v80
    %v82 = vrot.slane %v77, 4
    %v84 = vshrl.u32 %v45, 16
    %v86 = vrot.slane %v84, 7
    %v87 = vshll.u32 %v45, 16
    %v89 = vor.u32 %v86, %v87
    %v90 = vsel %vm59, %v82, %v89
    %v91 = vrot.slane %v86, 4
    %v93 = vshrl.u32 %v46, 16
    %v95 = vrot.slane %v93, 7
    %v96 = vshll.u32 %v46, 16
    %v98 = vor.u32 %v95, %v96
    %v99 = vsel %vm59, %v91, %v98
    %v100 = vrot.slane %v95, 4
    %v102 = vshrl.u32 %v47, 16
    %v104 = vrot.slane %v102, 7
    %v105 = vshll.u32 %v47, 16
    %v107 = vor.u32 %v104, %v105
    %v108 = vsel %vm59, %v100, %v107
    %v109 = vrot.slane %v104, 4
    %v111 = vshrl.u32 %v48, 16
    %v113 = vrot.slane %v111, 7
    %v114 = vshll.u32 %v48, 16
    %v116 = vor.u32 %v113, %v114
    %v117 = vsel %vm59, %v109, %v116
    %v118 = vrot.slane %v113, 4
    %v120 = vshrl.u32 %v49, 16
    %v122 = vrot.slane %v120, 7
    %v123 = vshll.u32 %v49, 16
    %v125 = vor.u32 %v122, %v123
    %v126 = vsel %vm59, %v118, %v125
    %v127 = vrot.slane %v122, 4
    %v129 = vshrl.u32 %v50, 16
    %v131 = vrot.slane %v129, 7
    %v132 = vshll.u32 %v50, 16
    %v134 = vor.u32 %v131, %v132
    %v135 = vsel %vm59, %v127, %v134
    %v136 = vrot.slane %v131, 4
    %v138 = vshrl.u32 %v51, 16
    %v140 = vrot.slane %v138, 7
    %v141 = vshll.u32 %v51, 16
    %v143 = vor.u32 %v140, %v141
    %v144 = vsel %vm59, %v136, %v143
    %v145 = vrot.slane %v140, 4
    %v147 = vshrl.u32 %v52, 16
    %v149 = vrot.slane %v147, 7
    %v150 = vshll.u32 %v52, 16
    %v152 = vor.u32 %v149, %v150
    %v153 = vsel %vm59, %v145, %v152
    %v154 = vrot.slane %v149, 4
    %v156 = vshrl.u32 %v53, 16
    %v158 = vrot.slane %v156, 7
    %v159 = vshll.u32 %v53, 16
    %v161 = vor.u32 %v158, %v159
    %v162 = vsel %vm59, %v154, %v161
    %v163 = vrot.slane %v158, 4
    %v165 = vshrl.u32 %v54, 16
    %v167 = vrot.slane %v165, 7
    %v168 = vshll.u32 %v54, 16
    %v170 = vor.u32 %v167, %v168
    %v171 = vsel %vm59, %v163, %v170
    %v172 = vrot.slane %v167, 4
    %v174 = vshrl.u32 %v55, 16
    %v176 = vrot.slane %v174, 7
    %v177 = vshll.u32 %v55, 16
    %v179 = vor.u32 %v176, %v177
    %v180 = vsel %vm59, %v172, %v179
    %v181 = vrot.slane %v176, 4
    %v183 = vshrl.u32 %v56, 16
    %v185 = vrot.slane %v183, 7
    %v186 = vshll.u32 %v56, 16
    %v188 = vor.u32 %v185, %v186
    %v189 = vsel %vm59, %v181, %v188
    %vm204 = vcmask 257024
    %205 = vst.msk [vmem:[#allocation3] sm:$0xf] %vm204, %v72
    %206 = vst.msk [vmem:[#allocation3 + $0xc] sm:$0xf] %vm204, %v81
    %207 = vst.msk [vmem:[#allocation3 + $0x18] sm:$0xf] %vm204, %v90
    %208 = vst.msk [vmem:[#allocation3 + $0x24] sm:$0xf] %vm204, %v99
    %209 = vst.msk [vmem:[#allocation3 + $0x30] sm:$0xf] %vm204, %v108
    %210 = vst.msk [vmem:[#allocation3 + $0x3c] sm:$0xf] %vm204, %v117
    %211 = vst.msk [vmem:[#allocation3 + $0x48] sm:$0xf] %vm204, %v126
    %212 = vst.msk [vmem:[#allocation3 + $0x54] sm:$0xf] %vm204, %v135
    %213 = vst.msk [vmem:[#allocation3 + $0x60] sm:$0xf] %vm204, %v144
    %214 = vst.msk [vmem:[#allocation3 + $0x6c] sm:$0xf] %vm204, %v153
    %215 = vst.msk [vmem:[#allocation3 + $0x78] sm:$0xf] %vm204, %v162
    %216 = vst.msk [vmem:[#allocation3 + $0x84] sm:$0xf] %vm204, %v171
    %217 = vst.msk [vmem:[#allocation3 + $0x90] sm:$0xf] %vm204, %v180
    %218 = vst.msk [vmem:[#allocation3 + $0x9c] sm:$0xf] %vm204, %v189
    %v219 = vld [vmem:[%s0 + $0x4] sm:$0xf]
    %v220 = vld [vmem:[%s0 + $0x8] sm:$0xf]
    %v221 = vld [vmem:[%s0 + $0xc] sm:$0xf]
    %v222 = vld [vmem:[%s0 + $0x10] sm:$0xf]
    %v223 = vld [vmem:[%s0 + $0x14] sm:$0xf]
    %v224 = vld [vmem:[%s0 + $0x18] sm:$0xf]
    %v225 = vld [vmem:[%s0 + $0x1c] sm:$0xf]
    %v226 = vld [vmem:[%s0 + $0x20] sm:$0xf]
    %v227 = vld [vmem:[%s0 + $0x24] sm:$0xf]
    %v228 = vld [vmem:[%s0 + $0x28] sm:$0xf]
    %v229 = vld [vmem:[%s0 + $0x2c] sm:$0xf]
    %v230 = vld [vmem:[%s0 + $0x30] sm:$0xf]
    %v231 = vld [vmem:[%s0 + $0x34] sm:$0xf]
    %v232 = vld [vmem:[%s0 + $0x38] sm:$0xf]
    %247 = vrot.lane.b32.xlu0 %v219, 32
    %v248 = vpop.permute.xlu0 %247
    %249 = vrot.lane.b32.xlu0 %v220, 32
    %v250 = vpop.permute.xlu0 %249
    %251 = vrot.lane.b32.xlu0 %v221, 32
    %v252 = vpop.permute.xlu0 %251
    %253 = vrot.lane.b32.xlu0 %v222, 32
    %v254 = vpop.permute.xlu0 %253
    %255 = vrot.lane.b32.xlu0 %v223, 32
    %v256 = vpop.permute.xlu0 %255
    %257 = vrot.lane.b32.xlu0 %v224, 32
    %v258 = vpop.permute.xlu0 %257
    %259 = vrot.lane.b32.xlu0 %v225, 32
    %v260 = vpop.permute.xlu0 %259
    %261 = vrot.lane.b32.xlu0 %v226, 32
    %v262 = vpop.permute.xlu0 %261
    %263 = vrot.lane.b32.xlu0 %v227, 32
    %v264 = vpop.permute.xlu0 %263
    %265 = vrot.lane.b32.xlu0 %v228, 32
    %v266 = vpop.permute.xlu0 %265
    %267 = vrot.lane.b32.xlu0 %v229, 32
    %v268 = vpop.permute.xlu0 %267
    %269 = vrot.lane.b32.xlu0 %v230, 32
    %v270 = vpop.permute.xlu0 %269
    %271 = vrot.lane.b32.xlu0 %v231, 32
    %v272 = vpop.permute.xlu0 %271
    %273 = vrot.lane.b32.xlu0 %v232, 32
    %v274 = vpop.permute.xlu0 %273
    %vm289 = vcmask 519424
    %290 = vst.msk [vmem:[#allocation3] sm:$0xf] %vm289, %v248
    %291 = vst.msk [vmem:[#allocation3 + $0xc] sm:$0xf] %vm289, %v250
    %292 = vst.msk [vmem:[#allocation3 + $0x18] sm:$0xf] %vm289, %v252
    %293 = vst.msk [vmem:[#allocation3 + $0x24] sm:$0xf] %vm289, %v254
    %294 = vst.msk [vmem:[#allocation3 + $0x30] sm:$0xf] %vm289, %v256
    %295 = vst.msk [vmem:[#allocation3 + $0x3c] sm:$0xf] %vm289, %v258
    %296 = vst.msk [vmem:[#allocation3 + $0x48] sm:$0xf] %vm289, %v260
    %297 = vst.msk [vmem:[#allocation3 + $0x54] sm:$0xf] %vm289, %v262
    %298 = vst.msk [vmem:[#allocation3 + $0x60] sm:$0xf] %vm289, %v264
    %299 = vst.msk [vmem:[#allocation3 + $0x6c] sm:$0xf] %vm289, %v266
    %300 = vst.msk [vmem:[#allocation3 + $0x78] sm:$0xf] %vm289, %v268
    %301 = vst.msk [vmem:[#allocation3 + $0x84] sm:$0xf] %vm289, %v270
    %302 = vst.msk [vmem:[#allocation3 + $0x90] sm:$0xf] %vm289, %v272
    %303 = vst.msk [vmem:[#allocation3 + $0x9c] sm:$0xf] %vm289, %v274
    %v304 = vld [vmem:[%s0 + $0x4] sm:$0xf]
    %v305 = vld [vmem:[%s0 + $0x8] sm:$0xf]
    %v306 = vld [vmem:[%s0 + $0xc] sm:$0xf]
    %v307 = vld [vmem:[%s0 + $0x10] sm:$0xf]
    %v308 = vld [vmem:[%s0 + $0x14] sm:$0xf]
    %v309 = vld [vmem:[%s0 + $0x18] sm:$0xf]
    %v310 = vld [vmem:[%s0 + $0x1c] sm:$0xf]
    %v311 = vld [vmem:[%s0 + $0x20] sm:$0xf]
    %v312 = vld [vmem:[%s0 + $0x24] sm:$0xf]
    %v313 = vld [vmem:[%s0 + $0x28] sm:$0xf]
    %v314 = vld [vmem:[%s0 + $0x2c] sm:$0xf]
    %v315 = vld [vmem:[%s0 + $0x30] sm:$0xf]
    %v316 = vld [vmem:[%s0 + $0x34] sm:$0xf]
    %v317 = vld [vmem:[%s0 + $0x38] sm:$0xf]
    %v318 = vld [vmem:[%s0 + $0x3c] sm:$0x1]
    %vm319 = vsmask.f32 3328
    %vm320 = vsmask.f32 7440
    %vm321 = vmor %vm319, %vm320
    %v323 = vshrl.u32 %v304, 16
    %v325 = vrot.slane %v323, 4
    %v326 = vshll.u32 %v304, 16
    %v328 = vrot.slane %v326, 5
    %v329 = vor.u32 %v325, %v328
    %v330 = vrot.slane %v329, 4
    %v332 = vshll.u32 %v305, 16
    %v334 = vrot.slane %v332, 5
    %v335 = vsel %vm321, %v330, %v334
    %v336 = vshrl.u32 %v305, 16
    %v338 = vrot.slane %v336, 4
    %v339 = vor.u32 %v338, %v334
    %v340 = vrot.slane %v339, 4
    %v342 = vshll.u32 %v306, 16
    %v344 = vrot.slane %v342, 5
    %v345 = vsel %vm321, %v340, %v344
    %v346 = vshrl.u32 %v306, 16
    %v348 = vrot.slane %v346, 4
    %v349 = vor.u32 %v348, %v344
    %v350 = vrot.slane %v349, 4
    %v352 = vshll.u32 %v307, 16
    %v354 = vrot.slane %v352, 5
    %v355 = vsel %vm321, %v350, %v354
    %v356 = vshrl.u32 %v307, 16
    %v358 = vrot.slane %v356, 4
    %v359 = vor.u32 %v358, %v354
    %v360 = vrot.slane %v359, 4
    %v362 = vshll.u32 %v308, 16
    %v364 = vrot.slane %v362, 5
    %v365 = vsel %vm321, %v360, %v364
    %v366 = vshrl.u32 %v308, 16
    %v368 = vrot.slane %v366, 4
    %v369 = vor.u32 %v368, %v364
    %v370 = vrot.slane %v369, 4
    %v372 = vshll.u32 %v309, 16
    %v374 = vrot.slane %v372, 5
    %v375 = vsel %vm321, %v370, %v374
    %v376 = vshrl.u32 %v309, 16
    %v378 = vrot.slane %v376, 4
    %v379 = vor.u32 %v378, %v374
    %v380 = vrot.slane %v379, 4
    %v382 = vshll.u32 %v310, 16
    %v384 = vrot.slane %v382, 5
    %v385 = vsel %vm321, %v380, %v384
    %v386 = vshrl.u32 %v310, 16
    %v388 = vrot.slane %v386, 4
    %v389 = vor.u32 %v388, %v384
    %v390 = vrot.slane %v389, 4
    %v392 = vshll.u32 %v311, 16
    %v394 = vrot.slane %v392, 5
    %v395 = vsel %vm321, %v390, %v394
    %v396 = vshrl.u32 %v311, 16
    %v398 = vrot.slane %v396, 4
    %v399 = vor.u32 %v398, %v394
    %v400 = vrot.slane %v399, 4
    %v402 = vshll.u32 %v312, 16
    %v404 = vrot.slane %v402, 5
    %v405 = vsel %vm321, %v400, %v404
    %v406 = vshrl.u32 %v312, 16
    %v408 = vrot.slane %v406, 4
    %v409 = vor.u32 %v408, %v404
    %v410 = vrot.slane %v409, 4
    %v412 = vshll.u32 %v313, 16
    %v414 = vrot.slane %v412, 5
    %v415 = vsel %vm321, %v410, %v414
    %v416 = vshrl.u32 %v313, 16
    %v418 = vrot.slane %v416, 4
    %v419 = vor.u32 %v418, %v414
    %v420 = vrot.slane %v419, 4
    %v422 = vshll.u32 %v314, 16
    %v424 = vrot.slane %v422, 5
    %v425 = vsel %vm321, %v420, %v424
    %v426 = vshrl.u32 %v314, 16
    %v428 = vrot.slane %v426, 4
    %v429 = vor.u32 %v428, %v424
    %v430 = vrot.slane %v429, 4
    %v432 = vshll.u32 %v315, 16
    %v434 = vrot.slane %v432, 5
    %v435 = vsel %vm321, %v430, %v434
    %v436 = vshrl.u32 %v315, 16
    %v438 = vrot.slane %v436, 4
    %v439 = vor.u32 %v438, %v434
    %v440 = vrot.slane %v439, 4
    %v442 = vshll.u32 %v316, 16
    %v444 = vrot.slane %v442, 5
    %v445 = vsel %vm321, %v440, %v444
    %v446 = vshrl.u32 %v316, 16
    %v448 = vrot.slane %v446, 4
    %v449 = vor.u32 %v448, %v444
    %v450 = vrot.slane %v449, 4
    %v452 = vshll.u32 %v317, 16
    %v454 = vrot.slane %v452, 5
    %v455 = vsel %vm321, %v450, %v454
    %v456 = vshrl.u32 %v317, 16
    %v458 = vrot.slane %v456, 4
    %v459 = vor.u32 %v458, %v454
    %v460 = vrot.slane %v459, 4
    %v462 = vshll.u32 %v318, 16
    %v464 = vrot.slane %v462, 5
    %v465 = vsel %vm321, %v460, %v464
    %466 = vrot.lane.b32.xlu0 %v335, 64
    %v467 = vpop.permute.xlu0 %466
    %468 = vrot.lane.b32.xlu0 %v345, 64
    %v469 = vpop.permute.xlu0 %468
    %470 = vrot.lane.b32.xlu0 %v355, 64
    %v471 = vpop.permute.xlu0 %470
    %472 = vrot.lane.b32.xlu0 %v365, 64
    %v473 = vpop.permute.xlu0 %472
    %474 = vrot.lane.b32.xlu0 %v375, 64
    %v475 = vpop.permute.xlu0 %474
    %476 = vrot.lane.b32.xlu0 %v385, 64
    %v477 = vpop.permute.xlu0 %476
    %478 = vrot.lane.b32.xlu0 %v395, 64
    %v479 = vpop.permute.xlu0 %478
    %480 = vrot.lane.b32.xlu0 %v405, 64
    %v481 = vpop.permute.xlu0 %480
    %482 = vrot.lane.b32.xlu0 %v415, 64
    %v483 = vpop.permute.xlu0 %482
    %484 = vrot.lane.b32.xlu0 %v425, 64
    %v485 = vpop.permute.xlu0 %484
    %486 = vrot.lane.b32.xlu0 %v435, 64
    %v487 = vpop.permute.xlu0 %486
    %488 = vrot.lane.b32.xlu0 %v445, 64
    %v489 = vpop.permute.xlu0 %488
    %490 = vrot.lane.b32.xlu0 %v455, 64
    %v491 = vpop.permute.xlu0 %490
    %492 = vrot.lane.b32.xlu0 %v465, 64
    %v493 = vpop.permute.xlu0 %492
    %vm508 = vcmask 781824
    %509 = vst.msk [vmem:[#allocation3] sm:$0xf] %vm508, %v467
    %510 = vst.msk [vmem:[#allocation3 + $0xc] sm:$0xf] %vm508, %v469
    %511 = vst.msk [vmem:[#allocation3 + $0x18] sm:$0xf] %vm508, %v471
    %512 = vst.msk [vmem:[#allocation3 + $0x24] sm:$0xf] %vm508, %v473
    %513 = vst.msk [vmem:[#allocation3 + $0x30] sm:$0xf] %vm508, %v475
    %514 = vst.msk [vmem:[#allocation3 + $0x3c] sm:$0xf] %vm508, %v477
    %515 = vst.msk [vmem:[#allocation3 + $0x48] sm:$0xf] %vm508, %v479
    %516 = vst.msk [vmem:[#allocation3 + $0x54] sm:$0xf] %vm508, %v481
    %517 = vst.msk [vmem:[#allocation3 + $0x60] sm:$0xf] %vm508, %v483
    %518 = vst.msk [vmem:[#allocation3 + $0x6c] sm:$0xf] %vm508, %v485
    %519 = vst.msk [vmem:[#allocation3 + $0x78] sm:$0xf] %vm508, %v487
    %520 = vst.msk [vmem:[#allocation3 + $0x84] sm:$0xf] %vm508, %v489
    %521 = vst.msk [vmem:[#allocation3 + $0x90] sm:$0xf] %vm508, %v491
    %522 = vst.msk [vmem:[#allocation3 + $0x9c] sm:$0xf] %vm508, %v493
    %v523 = vld [vmem:[%s0 + $0x4] sm:$0x8]
    %v524 = vld [vmem:[%s0 + $0x8] sm:$0xf]
    %v525 = vld [vmem:[%s0 + $0xc] sm:$0xf]
    %v526 = vld [vmem:[%s0 + $0x10] sm:$0xf]
    %v527 = vld [vmem:[%s0 + $0x14] sm:$0xf]
    %v528 = vld [vmem:[%s0 + $0x18] sm:$0xf]
    %v529 = vld [vmem:[%s0 + $0x1c] sm:$0xf]
    %v530 = vld [vmem:[%s0 + $0x20] sm:$0xf]
    %v531 = vld [vmem:[%s0 + $0x24] sm:$0xf]
    %v532 = vld [vmem:[%s0 + $0x28] sm:$0xf]
    %v533 = vld [vmem:[%s0 + $0x2c] sm:$0xf]
    %v534 = vld [vmem:[%s0 + $0x30] sm:$0xf]
    %v535 = vld [vmem:[%s0 + $0x34] sm:$0xf]
    %v536 = vld [vmem:[%s0 + $0x38] sm:$0xf]
    %v537 = vld [vmem:[%s0 + $0x3c] sm:$0xf]
    %v539 = vshrl.u32 %v523, 16
    %v541 = vrot.slane %v539, 7
    %v542 = vrot.slane %v541, 4
    %v544 = vshrl.u32 %v524, 16
    %v546 = vrot.slane %v544, 7
    %v547 = vshll.u32 %v524, 16
    %v549 = vor.u32 %v546, %v547
    %v550 = vsel %vm59, %v542, %v549
    %v551 = vrot.slane %v546, 4
    %v553 = vshrl.u32 %v525, 16
    %v555 = vrot.slane %v553, 7
    %v556 = vshll.u32 %v525, 16
    %v558 = vor.u32 %v555, %v556
    %v559 = vsel %vm59, %v551, %v558
    %v560 = vrot.slane %v555, 4
    %v562 = vshrl.u32 %v526, 16
    %v564 = vrot.slane %v562, 7
    %v565 = vshll.u32 %v526, 16
    %v567 = vor.u32 %v564, %v565
    %v568 = vsel %vm59, %v560, %v567
    %v569 = vrot.slane %v564, 4
    %v571 = vshrl.u32 %v527, 16
    %v573 = vrot.slane %v571, 7
    %v574 = vshll.u32 %v527, 16
    %v576 = vor.u32 %v573, %v574
    %v577 = vsel %vm59, %v569, %v576
    %v578 = vrot.slane %v573, 4
    %v580 = vshrl.u32 %v528, 16
    %v582 = vrot.slane %v580, 7
    %v583 = vshll.u32 %v528, 16
    %v585 = vor.u32 %v582, %v583
    %v586 = vsel %vm59, %v578, %v585
    %v587 = vrot.slane %v582, 4
    %v589 = vshrl.u32 %v529, 16
    %v591 = vrot.slane %v589, 7
    %v592 = vshll.u32 %v529, 16
    %v594 = vor.u32 %v591, %v592
    %v595 = vsel %vm59, %v587, %v594
    %v596 = vrot.slane %v591, 4
    %v598 = vshrl.u32 %v530, 16
    %v600 = vrot.slane %v598, 7
    %v601 = vshll.u32 %v530, 16
    %v603 = vor.u32 %v600, %v601
    %v604 = vsel %vm59, %v596, %v603
    %v605 = vrot.slane %v600, 4
    %v607 = vshrl.u32 %v531, 16
    %v609 = vrot.slane %v607, 7
    %v610 = vshll.u32 %v531, 16
    %v612 = vor.u32 %v609, %v610
    %v613 = vsel %vm59, %v605, %v612
    %v614 = vrot.slane %v609, 4
    %v616 = vshrl.u32 %v532, 16
    %v618 = vrot.slane %v616, 7
    %v619 = vshll.u32 %v532, 16
    %v621 = vor.u32 %v618, %v619
    %v622 = vsel %vm59, %v614, %v621
    %v623 = vrot.slane %v618, 4
    %v625 = vshrl.u32 %v533, 16
    %v627 = vrot.slane %v625, 7
    %v628 = vshll.u32 %v533, 16
    %v630 = vor.u32 %v627, %v628
    %v631 = vsel %vm59, %v623, %v630
    %v632 = vrot.slane %v627, 4
    %v634 = vshrl.u32 %v534, 16
    %v636 = vrot.slane %v634, 7
    %v637 = vshll.u32 %v534, 16
    %v639 = vor.u32 %v636, %v637
    %v640 = vsel %vm59, %v632, %v639
    %v641 = vrot.slane %v636, 4
    %v643 = vshrl.u32 %v535, 16
    %v645 = vrot.slane %v643, 7
    %v646 = vshll.u32 %v535, 16
    %v648 = vor.u32 %v645, %v646
    %v649 = vsel %vm59, %v641, %v648
    %v650 = vrot.slane %v645, 4
    %v652 = vshrl.u32 %v536, 16
    %v654 = vrot.slane %v652, 7
    %v655 = vshll.u32 %v536, 16
    %v657 = vor.u32 %v654, %v655
    %v658 = vsel %vm59, %v650, %v657
    %v659 = vrot.slane %v654, 4
    %v661 = vshrl.u32 %v537, 16
    %v663 = vrot.slane %v661, 7
    %v664 = vshll.u32 %v537, 16
    %v666 = vor.u32 %v663, %v664
    %v667 = vsel %vm59, %v659, %v666
    %668 = vrot.lane.b32.xlu0 %v550, 96
    %v669 = vpop.permute.xlu0 %668
    %670 = vrot.lane.b32.xlu0 %v559, 96
    %v671 = vpop.permute.xlu0 %670
    %672 = vrot.lane.b32.xlu0 %v568, 96
    %v673 = vpop.permute.xlu0 %672
    %674 = vrot.lane.b32.xlu0 %v577, 96
    %v675 = vpop.permute.xlu0 %674
    %676 = vrot.lane.b32.xlu0 %v586, 96
    %v677 = vpop.permute.xlu0 %676
    %678 = vrot.lane.b32.xlu0 %v595, 96
    %v679 = vpop.permute.xlu0 %678
    %680 = vrot.lane.b32.xlu0 %v604, 96
    %v681 = vpop.permute.xlu0 %680
    %682 = vrot.lane.b32.xlu0 %v613, 96
    %v683 = vpop.permute.xlu0 %682
    %684 = vrot.lane.b32.xlu0 %v622, 96
    %v685 = vpop.permute.xlu0 %684
    %686 = vrot.lane.b32.xlu0 %v631, 96
    %v687 = vpop.permute.xlu0 %686
    %688 = vrot.lane.b32.xlu0 %v640, 96
    %v689 = vpop.permute.xlu0 %688
    %690 = vrot.lane.b32.xlu0 %v649, 96
    %v691 = vpop.permute.xlu0 %690
    %692 = vrot.lane.b32.xlu0 %v658, 96
    %v693 = vpop.permute.xlu0 %692
    %694 = vrot.lane.b32.xlu0 %v667, 96
    %v695 = vpop.permute.xlu0 %694
    %vm710 = vcmask 1044224
    %711 = vst.msk [vmem:[#allocation3] sm:$0xf] %vm710, %v669
    %712 = vst.msk [vmem:[#allocation3 + $0xc] sm:$0xf] %vm710, %v671
    %713 = vst.msk [vmem:[#allocation3 + $0x18] sm:$0xf] %vm710, %v673
    %714 = vst.msk [vmem:[#allocation3 + $0x24] sm:$0xf] %vm710, %v675
    %715 = vst.msk [vmem:[#allocation3 + $0x30] sm:$0xf] %vm710, %v677
    %716 = vst.msk [vmem:[#allocation3 + $0x3c] sm:$0xf] %vm710, %v679
    %717 = vst.msk [vmem:[#allocation3 + $0x48] sm:$0xf] %vm710, %v681
    %718 = vst.msk [vmem:[#allocation3 + $0x54] sm:$0xf] %vm710, %v683
    %719 = vst.msk [vmem:[#allocation3 + $0x60] sm:$0xf] %vm710, %v685
    %720 = vst.msk [vmem:[#allocation3 + $0x6c] sm:$0xf] %vm710, %v687
    %721 = vst.msk [vmem:[#allocation3 + $0x78] sm:$0xf] %vm710, %v689
    %722 = vst.msk [vmem:[#allocation3 + $0x84] sm:$0xf] %vm710, %v691
    %723 = vst.msk [vmem:[#allocation3 + $0x90] sm:$0xf] %vm710, %v693
    %724 = vst.msk [vmem:[#allocation3 + $0x9c] sm:$0xf] %vm710, %v695
    %v725 = vld [vmem:[%s0 + $0x8] sm:$0xf]
    %v726 = vld [vmem:[%s0 + $0xc] sm:$0xf]
    %v727 = vld [vmem:[%s0 + $0x10] sm:$0xf]
    %v728 = vld [vmem:[%s0 + $0x14] sm:$0xf]
    %v729 = vld [vmem:[%s0 + $0x18] sm:$0xf]
    %v730 = vld [vmem:[%s0 + $0x1c] sm:$0xf]
    %v731 = vld [vmem:[%s0 + $0x20] sm:$0xf]
    %v732 = vld [vmem:[%s0 + $0x24] sm:$0xf]
    %v733 = vld [vmem:[%s0 + $0x28] sm:$0xf]
    %v734 = vld [vmem:[%s0 + $0x2c] sm:$0xf]
    %v735 = vld [vmem:[%s0 + $0x30] sm:$0xf]
    %v736 = vld [vmem:[%s0 + $0x34] sm:$0xf]
    %v737 = vld [vmem:[%s0 + $0x38] sm:$0xf]
    %v738 = vld [vmem:[%s0 + $0x3c] sm:$0xf]
    %739 = vst.msk [vmem:[#allocation3 + $0x4] sm:$0xf] %vm204, %v725
    %740 = vst.msk [vmem:[#allocation3 + $0x10] sm:$0xf] %vm204, %v726
    %741 = vst.msk [vmem:[#allocation3 + $0x1c] sm:$0xf] %vm204, %v727
    %742 = vst.msk [vmem:[#allocation3 + $0x28] sm:$0xf] %vm204, %v728
    %743 = vst.msk [vmem:[#allocation3 + $0x34] sm:$0xf] %vm204, %v729
    %744 = vst.msk [vmem:[#allocation3 + $0x40] sm:$0xf] %vm204, %v730
    %745 = vst.msk [vmem:[#allocation3 + $0x4c] sm:$0xf] %vm204, %v731
    %746 = vst.msk [vmem:[#allocation3 + $0x58] sm:$0xf] %vm204, %v732
    %747 = vst.msk [vmem:[#allocation3 + $0x64] sm:$0xf] %vm204, %v733
    %748 = vst.msk [vmem:[#allocation3 + $0x70] sm:$0xf] %vm204, %v734
    %749 = vst.msk [vmem:[#allocation3 + $0x7c] sm:$0xf] %vm204, %v735
    %750 = vst.msk [vmem:[#allocation3 + $0x88] sm:$0xf] %vm204, %v736
    %751 = vst.msk [vmem:[#allocation3 + $0x94] sm:$0xf] %vm204, %v737
    %752 = vst.msk [vmem:[#allocation3 + $0xa0] sm:$0xf] %vm204, %v738
    %v753 = vld [vmem:[%s0 + $0x8] sm:$0xf]
    %v754 = vld [vmem:[%s0 + $0xc] sm:$0xf]
    %v755 = vld [vmem:[%s0 + $0x10] sm:$0xf]
    %v756 = vld [vmem:[%s0 + $0x14] sm:$0xf]
    %v757 = vld [vmem:[%s0 + $0x18] sm:$0xf]
    %v758 = vld [vmem:[%s0 + $0x1c] sm:$0xf]
    %v759 = vld [vmem:[%s0 + $0x20] sm:$0xf]
    %v760 = vld [vmem:[%s0 + $0x24] sm:$0xf]
    %v761 = vld [vmem:[%s0 + $0x28] sm:$0xf]
    %v762 = vld [vmem:[%s0 + $0x2c] sm:$0xf]
    %v763 = vld [vmem:[%s0 + $0x30] sm:$0xf]
    %v764 = vld [vmem:[%s0 + $0x34] sm:$0xf]
    %v765 = vld [vmem:[%s0 + $0x38] sm:$0xf]
    %v766 = vld [vmem:[%s0 + $0x3c] sm:$0xf]
    %v767 = vld [vmem:[%s0 + $0x40] sm:$0x1]
    %v769 = vshrl.u32 %v753, 16
    %v771 = vrot.slane %v769, 4
    %v772 = vshll.u32 %v753, 16
    %v774 = vrot.slane %v772, 5
    %v775 = vor.u32 %v771, %v774
    %v776 = vrot.slane %v775, 4
    %v778 = vshll.u32 %v754, 16
    %v780 = vrot.slane %v778, 5
    %v781 = vsel %vm321, %v776, %v780
    %v782 = vshrl.u32 %v754, 16
    %v784 = vrot.slane %v782, 4
    %v785 = vor.u32 %v784, %v780
    %v786 = vrot.slane %v785, 4
    %v788 = vshll.u32 %v755, 16
    %v790 = vrot.slane %v788, 5
    %v791 = vsel %vm321, %v786, %v790
    %v792 = vshrl.u32 %v755, 16
    %v794 = vrot.slane %v792, 4
    %v795 = vor.u32 %v794, %v790
    %v796 = vrot.slane %v795, 4
    %v798 = vshll.u32 %v756, 16
    %v800 = vrot.slane %v798, 5
    %v801 = vsel %vm321, %v796, %v800
    %v802 = vshrl.u32 %v756, 16
    %v804 = vrot.slane %v802, 4
    %v805 = vor.u32 %v804, %v800
    %v806 = vrot.slane %v805, 4
    %v808 = vshll.u32 %v757, 16
    %v810 = vrot.slane %v808, 5
    %v811 = vsel %vm321, %v806, %v810
    %v812 = vshrl.u32 %v757, 16
    %v814 = vrot.slane %v812, 4
    %v815 = vor.u32 %v814, %v810
    %v816 = vrot.slane %v815, 4
    %v818 = vshll.u32 %v758, 16
    %v820 = vrot.slane %v818, 5
    %v821 = vsel %vm321, %v816, %v820
    %v822 = vshrl.u32 %v758, 16
    %v824 = vrot.slane %v822, 4
    %v825 = vor.u32 %v824, %v820
    %v826 = vrot.slane %v825, 4
    %v828 = vshll.u32 %v759, 16
    %v830 = vrot.slane %v828, 5
    %v831 = vsel %vm321, %v826, %v830
    %v832 = vshrl.u32 %v759, 16
    %v834 = vrot.slane %v832, 4
    %v835 = vor.u32 %v834, %v830
    %v836 = vrot.slane %v835, 4
    %v838 = vshll.u32 %v760, 16
    %v840 = vrot.slane %v838, 5
    %v841 = vsel %vm321, %v836, %v840
    %v842 = vshrl.u32 %v760, 16
    %v844 = vrot.slane %v842, 4
    %v845 = vor.u32 %v844, %v840
    %v846 = vrot.slane %v845, 4
    %v848 = vshll.u32 %v761, 16
    %v850 = vrot.slane %v848, 5
    %v851 = vsel %vm321, %v846, %v850
    %v852 = vshrl.u32 %v761, 16
    %v854 = vrot.slane %v852, 4
    %v855 = vor.u32 %v854, %v850
    %v856 = vrot.slane %v855, 4
    %v858 = vshll.u32 %v762, 16
    %v860 = vrot.slane %v858, 5
    %v861 = vsel %vm321, %v856, %v860
    %v862 = vshrl.u32 %v762, 16
    %v864 = vrot.slane %v862, 4
    %v865 = vor.u32 %v864, %v860
    %v866 = vrot.slane %v865, 4
    %v868 = vshll.u32 %v763, 16
    %v870 = vrot.slane %v868, 5
    %v871 = vsel %vm321, %v866, %v870
    %v872 = vshrl.u32 %v763, 16
    %v874 = vrot.slane %v872, 4
    %v875 = vor.u32 %v874, %v870
    %v876 = vrot.slane %v875, 4
    %v878 = vshll.u32 %v764, 16
    %v880 = vrot.slane %v878, 5
    %v881 = vsel %vm321, %v876, %v880
    %v882 = vshrl.u32 %v764, 16
    %v884 = vrot.slane %v882, 4
    %v885 = vor.u32 %v884, %v880
    %v886 = vrot.slane %v885, 4
    %v888 = vshll.u32 %v765, 16
    %v890 = vrot.slane %v888, 5
    %v891 = vsel %vm321, %v886, %v890
    %v892 = vshrl.u32 %v765, 16
    %v894 = vrot.slane %v892, 4
    %v895 = vor.u32 %v894, %v890
    %v896 = vrot.slane %v895, 4
    %v898 = vshll.u32 %v766, 16
    %v900 = vrot.slane %v898, 5
    %v901 = vsel %vm321, %v896, %v900
    %v902 = vshrl.u32 %v766, 16
    %v904 = vrot.slane %v902, 4
    %v905 = vor.u32 %v904, %v900
    %v906 = vrot.slane %v905, 4
    %v908 = vshll.u32 %v767, 16
    %v910 = vrot.slane %v908, 5
    %v911 = vsel %vm321, %v906, %v910
    %912 = vrot.lane.b32.xlu0 %v781, 32
    %v913 = vpop.permute.xlu0 %912
    %914 = vrot.lane.b32.xlu0 %v791, 32
    %v915 = vpop.permute.xlu0 %914
    %916 = vrot.lane.b32.xlu0 %v801, 32
    %v917 = vpop.permute.xlu0 %916
    %918 = vrot.lane.b32.xlu0 %v811, 32
    %v919 = vpop.permute.xlu0 %918
    %920 = vrot.lane.b32.xlu0 %v821, 32
    %v921 = vpop.permute.xlu0 %920
    %922 = vrot.lane.b32.xlu0 %v831, 32
    %v923 = vpop.permute.xlu0 %922
    %924 = vrot.lane.b32.xlu0 %v841, 32
    %v925 = vpop.permute.xlu0 %924
    %926 = vrot.lane.b32.xlu0 %v851, 32
    %v927 = vpop.permute.xlu0 %926
    %928 = vrot.lane.b32.xlu0 %v861, 32
    %v929 = vpop.permute.xlu0 %928
    %930 = vrot.lane.b32.xlu0 %v871, 32
    %v931 = vpop.permute.xlu0 %930
    %932 = vrot.lane.b32.xlu0 %v881, 32
    %v933 = vpop.permute.xlu0 %932
    %934 = vrot.lane.b32.xlu0 %v891, 32
    %v935 = vpop.permute.xlu0 %934
    %936 = vrot.lane.b32.xlu0 %v901, 32
    %v937 = vpop.permute.xlu0 %936
    %938 = vrot.lane.b32.xlu0 %v911, 32
    %v939 = vpop.permute.xlu0 %938
    %954 = vst.msk [vmem:[#allocation3 + $0x4] sm:$0xf] %vm289, %v913
    %955 = vst.msk [vmem:[#allocation3 + $0x10] sm:$0xf] %vm289, %v915
    %956 = vst.msk [vmem:[#allocation3 + $0x1c] sm:$0xf] %vm289, %v917
    %957 = vst.msk [vmem:[#allocation3 + $0x28] sm:$0xf] %vm289, %v919
    %958 = vst.msk [vmem:[#allocation3 + $0x34] sm:$0xf] %vm289, %v921
    %959 = vst.msk [vmem:[#allocation3 + $0x40] sm:$0xf] %vm289, %v923
    %960 = vst.msk [vmem:[#allocation3 + $0x4c] sm:$0xf] %vm289, %v925
    %961 = vst.msk [vmem:[#allocation3 + $0x58] sm:$0xf] %vm289, %v927
    %962 = vst.msk [vmem:[#allocation3 + $0x64] sm:$0xf] %vm289, %v929
    %963 = vst.msk [vmem:[#allocation3 + $0x70] sm:$0xf] %vm289, %v931
    %964 = vst.msk [vmem:[#allocation3 + $0x7c] sm:$0xf] %vm289, %v933
    %965 = vst.msk [vmem:[#allocation3 + $0x88] sm:$0xf] %vm289, %v935
    %966 = vst.msk [vmem:[#allocation3 + $0x94] sm:$0xf] %vm289, %v937
    %967 = vst.msk [vmem:[#allocation3 + $0xa0] sm:$0xf] %vm289, %v939
    %v968 = vld [vmem:[%s0 + $0x8] sm:$0x8]
    %v969 = vld [vmem:[%s0 + $0xc] sm:$0xf]
    %v970 = vld [vmem:[%s0 + $0x10] sm:$0xf]
    %v971 = vld [vmem:[%s0 + $0x14] sm:$0xf]
    %v972 = vld [vmem:[%s0 + $0x18] sm:$0xf]
    %v973 = vld [vmem:[%s0 + $0x1c] sm:$0xf]
    %v974 = vld [vmem:[%s0 + $0x20] sm:$0xf]
    %v975 = vld [vmem:[%s0 + $0x24] sm:$0xf]
    %v976 = vld [vmem:[%s0 + $0x28] sm:$0xf]
    %v977 = vld [vmem:[%s0 + $0x2c] sm:$0xf]
    %v978 = vld [vmem:[%s0 + $0x30] sm:$0xf]
    %v979 = vld [vmem:[%s0 + $0x34] sm:$0xf]
    %v980 = vld [vmem:[%s0 + $0x38] sm:$0xf]
    %v981 = vld [vmem:[%s0 + $0x3c] sm:$0xf]
    %v982 = vld [vmem:[%s0 + $0x40] sm:$0xf]
    %v984 = vshrl.u32 %v968, 16
    %v986 = vrot.slane %v984, 7
    %v987 = vrot.slane %v986, 4
    %v989 = vshrl.u32 %v969, 16
    %v991 = vrot.slane %v989, 7
    %v992 = vshll.u32 %v969, 16
    %v994 = vor.u32 %v991, %v992
    %v995 = vsel %vm59, %v987, %v994
    %v996 = vrot.slane %v991, 4
    %v998 = vshrl.u32 %v970, 16
    %v1000 = vrot.slane %v998, 7
    %v1001 = vshll.u32 %v970, 16
    %v1003 = vor.u32 %v1000, %v1001
    %v1004 = vsel %vm59, %v996, %v1003
    %v1005 = vrot.slane %v1000, 4
    %v1007 = vshrl.u32 %v971, 16
    %v1009 = vrot.slane %v1007, 7
    %v1010 = vshll.u32 %v971, 16
    %v1012 = vor.u32 %v1009, %v1010
    %v1013 = vsel %vm59, %v1005, %v1012
    %v1014 = vrot.slane %v1009, 4
    %v1016 = vshrl.u32 %v972, 16
    %v1018 = vrot.slane %v1016, 7
    %v1019 = vshll.u32 %v972, 16
    %v1021 = vor.u32 %v1018, %v1019
    %v1022 = vsel %vm59, %v1014, %v1021
    %v1023 = vrot.slane %v1018, 4
    %v1025 = vshrl.u32 %v973, 16
    %v1027 = vrot.slane %v1025, 7
    %v1028 = vshll.u32 %v973, 16
    %v1030 = vor.u32 %v1027, %v1028
    %v1031 = vsel %vm59, %v1023, %v1030
    %v1032 = vrot.slane %v1027, 4
    %v1034 = vshrl.u32 %v974, 16
    %v1036 = vrot.slane %v1034, 7
    %v1037 = vshll.u32 %v974, 16
    %v1039 = vor.u32 %v1036, %v1037
    %v1040 = vsel %vm59, %v1032, %v1039
    %v1041 = vrot.slane %v1036, 4
    %v1043 = vshrl.u32 %v975, 16
    %v1045 = vrot.slane %v1043, 7
    %v1046 = vshll.u32 %v975, 16
    %v1048 = vor.u32 %v1045, %v1046
    %v1049 = vsel %vm59, %v1041, %v1048
    %v1050 = vrot.slane %v1045, 4
    %v1052 = vshrl.u32 %v976, 16
    %v1054 = vrot.slane %v1052, 7
    %v1055 = vshll.u32 %v976, 16
    %v1057 = vor.u32 %v1054, %v1055
    %v1058 = vsel %vm59, %v1050, %v1057
    %v1059 = vrot.slane %v1054, 4
    %v1061 = vshrl.u32 %v977, 16
    %v1063 = vrot.slane %v1061, 7
    %v1064 = vshll.u32 %v977, 16
    %v1066 = vor.u32 %v1063, %v1064
    %v1067 = vsel %vm59, %v1059, %v1066
    %v1068 = vrot.slane %v1063, 4
    %v1070 = vshrl.u32 %v978, 16
    %v1072 = vrot.slane %v1070, 7
    %v1073 = vshll.u32 %v978, 16
    %v1075 = vor.u32 %v1072, %v1073
    %v1076 = vsel %vm59, %v1068, %v1075
    %v1077 = vrot.slane %v1072, 4
    %v1079 = vshrl.u32 %v979, 16
    %v1081 = vrot.slane %v1079, 7
    %v1082 = vshll.u32 %v979, 16
    %v1084 = vor.u32 %v1081, %v1082
    %v1085 = vsel %vm59, %v1077, %v1084
    %v1086 = vrot.slane %v1081, 4
    %v1088 = vshrl.u32 %v980, 16
    %v1090 = vrot.slane %v1088, 7
    %v1091 = vshll.u32 %v980, 16
    %v1093 = vor.u32 %v1090, %v1091
    %v1094 = vsel %vm59, %v1086, %v1093
    %v1095 = vrot.slane %v1090, 4
    %v1097 = vshrl.u32 %v981, 16
    %v1099 = vrot.slane %v1097, 7
    %v1100 = vshll.u32 %v981, 16
    %v1102 = vor.u32 %v1099, %v1100
    %v1103 = vsel %vm59, %v1095, %v1102
    %v1104 = vrot.slane %v1099, 4
    %v1106 = vshrl.u32 %v982, 16
    %v1108 = vrot.slane %v1106, 7
    %v1109 = vshll.u32 %v982, 16
    %v1111 = vor.u32 %v1108, %v1109
    %v1112 = vsel %vm59, %v1104, %v1111
    %1113 = vrot.lane.b32.xlu0 %v995, 64
    %v1114 = vpop.permute.xlu0 %1113
    %1115 = vrot.lane.b32.xlu0 %v1004, 64
    %v1116 = vpop.permute.xlu0 %1115
    %1117 = vrot.lane.b32.xlu0 %v1013, 64
    %v1118 = vpop.permute.xlu0 %1117
    %1119 = vrot.lane.b32.xlu0 %v1022, 64
    %v1120 = vpop.permute.xlu0 %1119
    %1121 = vrot.lane.b32.xlu0 %v1031, 64
    %v1122 = vpop.permute.xlu0 %1121
    %1123 = vrot.lane.b32.xlu0 %v1040, 64
    %v1124 = vpop.permute.xlu0 %1123
    %1125 = vrot.lane.b32.xlu0 %v1049, 64
    %v1126 = vpop.permute.xlu0 %1125
    %1127 = vrot.lane.b32.xlu0 %v1058, 64
    %v1128 = vpop.permute.xlu0 %1127
    %1129 = vrot.lane.b32.xlu0 %v1067, 64
    %v1130 = vpop.permute.xlu0 %1129
    %1131 = vrot.lane.b32.xlu0 %v1076, 64
    %v1132 = vpop.permute.xlu0 %1131
    %1133 = vrot.lane.b32.xlu0 %v1085, 64
    %v1134 = vpop.permute.xlu0 %1133
    %1135 = vrot.lane.b32.xlu0 %v1094, 64
    %v1136 = vpop.permute.xlu0 %1135
    %1137 = vrot.lane.b32.xlu0 %v1103, 64
    %v1138 = vpop.permute.xlu0 %1137
    %1139 = vrot.lane.b32.xlu0 %v1112, 64
    %v1140 = vpop.permute.xlu0 %1139
    %1155 = vst.msk [vmem:[#allocation3 + $0x4] sm:$0xf] %vm508, %v1114
    %1156 = vst.msk [vmem:[#allocation3 + $0x10] sm:$0xf] %vm508, %v1116
    %1157 = vst.msk [vmem:[#allocation3 + $0x1c] sm:$0xf] %vm508, %v1118
    %1158 = vst.msk [vmem:[#allocation3 + $0x28] sm:$0xf] %vm508, %v1120
    %1159 = vst.msk [vmem:[#allocation3 + $0x34] sm:$0xf] %vm508, %v1122
    %1160 = vst.msk [vmem:[#allocation3 + $0x40] sm:$0xf] %vm508, %v1124
    %1161 = vst.msk [vmem:[#allocation3 + $0x4c] sm:$0xf] %vm508, %v1126
    %1162 = vst.msk [vmem:[#allocation3 + $0x58] sm:$0xf] %vm508, %v1128
    %1163 = vst.msk [vmem:[#allocation3 + $0x64] sm:$0xf] %vm508, %v1130
    %1164 = vst.msk [vmem:[#allocation3 + $0x70] sm:$0xf] %vm508, %v1132
    %1165 = vst.msk [vmem:[#allocation3 + $0x7c] sm:$0xf] %vm508, %v1134
    %1166 = vst.msk [vmem:[#allocation3 + $0x88] sm:$0xf] %vm508, %v1136
    %1167 = vst.msk [vmem:[#allocation3 + $0x94] sm:$0xf] %vm508, %v1138
    %1168 = vst.msk [vmem:[#allocation3 + $0xa0] sm:$0xf] %vm508, %v1140
    %v1169 = vld [vmem:[%s0 + $0xc] sm:$0xf]
    %v1170 = vld [vmem:[%s0 + $0x10] sm:$0xf]
    %v1171 = vld [vmem:[%s0 + $0x14] sm:$0xf]
    %v1172 = vld [vmem:[%s0 + $0x18] sm:$0xf]
    %v1173 = vld [vmem:[%s0 + $0x1c] sm:$0xf]
    %v1174 = vld [vmem:[%s0 + $0x20] sm:$0xf]
    %v1175 = vld [vmem:[%s0 + $0x24] sm:$0xf]
    %v1176 = vld [vmem:[%s0 + $0x28] sm:$0xf]
    %v1177 = vld [vmem:[%s0 + $0x2c] sm:$0xf]
    %v1178 = vld [vmem:[%s0 + $0x30] sm:$0xf]
    %v1179 = vld [vmem:[%s0 + $0x34] sm:$0xf]
    %v1180 = vld [vmem:[%s0 + $0x38] sm:$0xf]
    %v1181 = vld [vmem:[%s0 + $0x3c] sm:$0xf]
    %v1182 = vld [vmem:[%s0 + $0x40] sm:$0xf]
    %1197 = vrot.lane.b32.xlu0 %v1169, 96
    %v1198 = vpop.permute.xlu0 %1197
    %1199 = vrot.lane.b32.xlu0 %v1170, 96
    %v1200 = vpop.permute.xlu0 %1199
    %1201 = vrot.lane.b32.xlu0 %v1171, 96
    %v1202 = vpop.permute.xlu0 %1201
    %1203 = vrot.lane.b32.xlu0 %v1172, 96
    %v1204 = vpop.permute.xlu0 %1203
    %1205 = vrot.lane.b32.xlu0 %v1173, 96
    %v1206 = vpop.permute.xlu0 %1205
    %1207 = vrot.lane.b32.xlu0 %v1174, 96
    %v1208 = vpop.permute.xlu0 %1207
    %1209 = vrot.lane.b32.xlu0 %v1175, 96
    %v1210 = vpop.permute.xlu0 %1209
    %1211 = vrot.lane.b32.xlu0 %v1176, 96
    %v1212 = vpop.permute.xlu0 %1211
    %1213 = vrot.lane.b32.xlu0 %v1177, 96
    %v1214 = vpop.permute.xlu0 %1213
    %1215 = vrot.lane.b32.xlu0 %v1178, 96
    %v1216 = vpop.permute.xlu0 %1215
    %1217 = vrot.lane.b32.xlu0 %v1179, 96
    %v1218 = vpop.permute.xlu0 %1217
    %1219 = vrot.lane.b32.xlu0 %v1180, 96
    %v1220 = vpop.permute.xlu0 %1219
    %1221 = vrot.lane.b32.xlu0 %v1181, 96
    %v1222 = vpop.permute.xlu0 %1221
    %1223 = vrot.lane.b32.xlu0 %v1182, 96
    %v1224 = vpop.permute.xlu0 %1223
    %1239 = vst.msk [vmem:[#allocation3 + $0x4] sm:$0xf] %vm710, %v1198
    %1240 = vst.msk [vmem:[#allocation3 + $0x10] sm:$0xf] %vm710, %v1200
    %1241 = vst.msk [vmem:[#allocation3 + $0x1c] sm:$0xf] %vm710, %v1202
    %1242 = vst.msk [vmem:[#allocation3 + $0x28] sm:$0xf] %vm710, %v1204
    %1243 = vst.msk [vmem:[#allocation3 + $0x34] sm:$0xf] %vm710, %v1206
    %1244 = vst.msk [vmem:[#allocation3 + $0x40] sm:$0xf] %vm710, %v1208
    %1245 = vst.msk [vmem:[#allocation3 + $0x4c] sm:$0xf] %vm710, %v1210
    %1246 = vst.msk [vmem:[#allocation3 + $0x58] sm:$0xf] %vm710, %v1212
    %1247 = vst.msk [vmem:[#allocation3 + $0x64] sm:$0xf] %vm710, %v1214
    %1248 = vst.msk [vmem:[#allocation3 + $0x70] sm:$0xf] %vm710, %v1216
    %1249 = vst.msk [vmem:[#allocation3 + $0x7c] sm:$0xf] %vm710, %v1218
    %1250 = vst.msk [vmem:[#allocation3 + $0x88] sm:$0xf] %vm710, %v1220
    %1251 = vst.msk [vmem:[#allocation3 + $0x94] sm:$0xf] %vm710, %v1222
    %1252 = vst.msk [vmem:[#allocation3 + $0xa0] sm:$0xf] %vm710, %v1224
    %v1253 = vld [vmem:[%s0 + $0xc] sm:$0xf]
    %v1254 = vld [vmem:[%s0 + $0x10] sm:$0xf]
    %v1255 = vld [vmem:[%s0 + $0x14] sm:$0xf]
    %v1256 = vld [vmem:[%s0 + $0x18] sm:$0xf]
    %v1257 = vld [vmem:[%s0 + $0x1c] sm:$0xf]
    %v1258 = vld [vmem:[%s0 + $0x20] sm:$0xf]
    %v1259 = vld [vmem:[%s0 + $0x24] sm:$0xf]
    %v1260 = vld [vmem:[%s0 + $0x28] sm:$0xf]
    %v1261 = vld [vmem:[%s0 + $0x2c] sm:$0xf]
    %v1262 = vld [vmem:[%s0 + $0x30] sm:$0xf]
    %v1263 = vld [vmem:[%s0 + $0x34] sm:$0xf]
    %v1264 = vld [vmem:[%s0 + $0x38] sm:$0xf]
    %v1265 = vld [vmem:[%s0 + $0x3c] sm:$0xf]
    %v1266 = vld [vmem:[%s0 + $0x40] sm:$0xf]
    %v1267 = vld [vmem:[%s0 + $0x44] sm:$0x1]
    %v1269 = vshrl.u32 %v1253, 16
    %v1271 = vrot.slane %v1269, 4
    %v1272 = vshll.u32 %v1253, 16
    %v1274 = vrot.slane %v1272, 5
    %v1275 = vor.u32 %v1271, %v1274
    %v1276 = vrot.slane %v1275, 4
    %v1278 = vshll.u32 %v1254, 16
    %v1280 = vrot.slane %v1278, 5
    %v1281 = vsel %vm321, %v1276, %v1280
    %v1282 = vshrl.u32 %v1254, 16
    %v1284 = vrot.slane %v1282, 4
    %v1285 = vor.u32 %v1284, %v1280
    %v1286 = vrot.slane %v1285, 4
    %v1288 = vshll.u32 %v1255, 16
    %v1290 = vrot.slane %v1288, 5
    %v1291 = vsel %vm321, %v1286, %v1290
    %v1292 = vshrl.u32 %v1255, 16
    %v1294 = vrot.slane %v1292, 4
    %v1295 = vor.u32 %v1294, %v1290
    %v1296 = vrot.slane %v1295, 4
    %v1298 = vshll.u32 %v1256, 16
    %v1300 = vrot.slane %v1298, 5
    %v1301 = vsel %vm321, %v1296, %v1300
    %v1302 = vshrl.u32 %v1256, 16
    %v1304 = vrot.slane %v1302, 4
    %v1305 = vor.u32 %v1304, %v1300
    %v1306 = vrot.slane %v1305, 4
    %v1308 = vshll.u32 %v1257, 16
    %v1310 = vrot.slane %v1308, 5
    %v1311 = vsel %vm321, %v1306, %v1310
    %v1312 = vshrl.u32 %v1257, 16
    %v1314 = vrot.slane %v1312, 4
    %v1315 = vor.u32 %v1314, %v1310
    %v1316 = vrot.slane %v1315, 4
    %v1318 = vshll.u32 %v1258, 16
    %v1320 = vrot.slane %v1318, 5
    %v1321 = vsel %vm321, %v1316, %v1320
    %v1322 = vshrl.u32 %v1258, 16
    %v1324 = vrot.slane %v1322, 4
    %v1325 = vor.u32 %v1324, %v1320
    %v1326 = vrot.slane %v1325, 4
    %v1328 = vshll.u32 %v1259, 16
    %v1330 = vrot.slane %v1328, 5
    %v1331 = vsel %vm321, %v1326, %v1330
    %v1332 = vshrl.u32 %v1259, 16
    %v1334 = vrot.slane %v1332, 4
    %v1335 = vor.u32 %v1334, %v1330
    %v1336 = vrot.slane %v1335, 4
    %v1338 = vshll.u32 %v1260, 16
    %v1340 = vrot.slane %v1338, 5
    %v1341 = vsel %vm321, %v1336, %v1340
    %v1342 = vshrl.u32 %v1260, 16
    %v1344 = vrot.slane %v1342, 4
    %v1345 = vor.u32 %v1344, %v1340
    %v1346 = vrot.slane %v1345, 4
    %v1348 = vshll.u32 %v1261, 16
    %v1350 = vrot.slane %v1348, 5
    %v1351 = vsel %vm321, %v1346, %v1350
    %v1352 = vshrl.u32 %v1261, 16
    %v1354 = vrot.slane %v1352, 4
    %v1355 = vor.u32 %v1354, %v1350
    %v1356 = vrot.slane %v1355, 4
    %v1358 = vshll.u32 %v1262, 16
    %v1360 = vrot.slane %v1358, 5
    %v1361 = vsel %vm321, %v1356, %v1360
    %v1362 = vshrl.u32 %v1262, 16
    %v1364 = vrot.slane %v1362, 4
    %v1365 = vor.u32 %v1364, %v1360
    %v1366 = vrot.slane %v1365, 4
    %v1368 = vshll.u32 %v1263, 16
    %v1370 = vrot.slane %v1368, 5
    %v1371 = vsel %vm321, %v1366, %v1370
    %v1372 = vshrl.u32 %v1263, 16
    %v1374 = vrot.slane %v1372, 4
    %v1375 = vor.u32 %v1374, %v1370
    %v1376 = vrot.slane %v1375, 4
    %v1378 = vshll.u32 %v1264, 16
    %v1380 = vrot.slane %v1378, 5
    %v1381 = vsel %vm321, %v1376, %v1380
    %v1382 = vshrl.u32 %v1264, 16
    %v1384 = vrot.slane %v1382, 4
    %v1385 = vor.u32 %v1384, %v1380
    %v1386 = vrot.slane %v1385, 4
    %v1388 = vshll.u32 %v1265, 16
    %v1390 = vrot.slane %v1388, 5
    %v1391 = vsel %vm321, %v1386, %v1390
    %v1392 = vshrl.u32 %v1265, 16
    %v1394 = vrot.slane %v1392, 4
    %v1395 = vor.u32 %v1394, %v1390
    %v1396 = vrot.slane %v1395, 4
    %v1398 = vshll.u32 %v1266, 16
    %v1400 = vrot.slane %v1398, 5
    %v1401 = vsel %vm321, %v1396, %v1400
    %v1402 = vshrl.u32 %v1266, 16
    %v1404 = vrot.slane %v1402, 4
    %v1405 = vor.u32 %v1404, %v1400
    %v1406 = vrot.slane %v1405, 4
    %v1408 = vshll.u32 %v1267, 16
    %v1410 = vrot.slane %v1408, 5
    %v1411 = vsel %vm321, %v1406, %v1410
    %1426 = vst.msk [vmem:[#allocation3 + $0x8] sm:$0xf] %vm204, %v1281
    %1427 = vst.msk [vmem:[#allocation3 + $0x14] sm:$0xf] %vm204, %v1291
    %1428 = vst.msk [vmem:[#allocation3 + $0x20] sm:$0xf] %vm204, %v1301
    %1429 = vst.msk [vmem:[#allocation3 + $0x2c] sm:$0xf] %vm204, %v1311
    %1430 = vst.msk [vmem:[#allocation3 + $0x38] sm:$0xf] %vm204, %v1321
    %1431 = vst.msk [vmem:[#allocation3 + $0x44] sm:$0xf] %vm204, %v1331
    %1432 = vst.msk [vmem:[#allocation3 + $0x50] sm:$0xf] %vm204, %v1341
    %1433 = vst.msk [vmem:[#allocation3 + $0x5c] sm:$0xf] %vm204, %v1351
    %1434 = vst.msk [vmem:[#allocation3 + $0x68] sm:$0xf] %vm204, %v1361
    %1435 = vst.msk [vmem:[#allocation3 + $0x74] sm:$0xf] %vm204, %v1371
    %1436 = vst.msk [vmem:[#allocation3 + $0x80] sm:$0xf] %vm204, %v1381
    %1437 = vst.msk [vmem:[#allocation3 + $0x8c] sm:$0xf] %vm204, %v1391
    %1438 = vst.msk [vmem:[#allocation3 + $0x98] sm:$0xf] %vm204, %v1401
    %1439 = vst.msk [vmem:[#allocation3 + $0xa4] sm:$0xf] %vm204, %v1411
    %v1440 = vld [vmem:[#allocation3] sm:$0xff]
    %v1441 = vld [vmem:[#allocation3 + $0x8] sm:$0xf]
    %v1442 = vld [vmem:[#allocation3 + $0xc] sm:$0xff]
    %v1443 = vld [vmem:[#allocation3 + $0x14] sm:$0xf]
    %v1444 = vld [vmem:[#allocation3 + $0x18] sm:$0xff]
    %v1445 = vld [vmem:[#allocation3 + $0x20] sm:$0xf]
    %v1446 = vld [vmem:[#allocation3 + $0x24] sm:$0xff]
    %v1447 = vld [vmem:[#allocation3 + $0x2c] sm:$0xf]
    %v1448 = vld [vmem:[#allocation3 + $0x30] sm:$0xff]
    %v1449 = vld [vmem:[#allocation3 + $0x38] sm:$0xf]
    %v1450 = vld [vmem:[#allocation3 + $0x3c] sm:$0xff]
    %v1451 = vld [vmem:[#allocation3 + $0x44] sm:$0xf]
    %v1452 = vld [vmem:[#allocation3 + $0x48] sm:$0xff]
    %v1453 = vld [vmem:[#allocation3 + $0x50] sm:$0xf]
    %v1454 = vld [vmem:[#allocation3 + $0x54] sm:$0xff]
    %v1455 = vld [vmem:[#allocation3 + $0x5c] sm:$0xf]
    %v1456 = vld [vmem:[#allocation3 + $0x60] sm:$0xff]
    %v1457 = vld [vmem:[#allocation3 + $0x68] sm:$0xf]
    %v1458 = vld [vmem:[#allocation3 + $0x6c] sm:$0xff]
    %v1459 = vld [vmem:[#allocation3 + $0x74] sm:$0xf]
    %v1460 = vld [vmem:[#allocation3 + $0x78] sm:$0xff]
    %v1461 = vld [vmem:[#allocation3 + $0x80] sm:$0xf]
    %v1462 = vld [vmem:[#allocation3 + $0x84] sm:$0xff]
    %v1463 = vld [vmem:[#allocation3 + $0x8c] sm:$0xf]
    %v1464 = vld [vmem:[#allocation3 + $0x90] sm:$0xff]
    %v1465 = vld [vmem:[#allocation3 + $0x98] sm:$0xf]
    %v1466 = vld [vmem:[#allocation3 + $0x9c] sm:$0xff]
    %v1467 = vld [vmem:[#allocation3 + $0xa4] sm:$0xf]
    %v1468 = vld [vmem:[%s2] sm:$0xf]
    %v1469 = vld [vmem:[%s2 + $0x4] sm:$0xf]
    %v1470 = vld [vmem:[%s2 + $0x8] sm:$0xf]
    %v1471 = vld [vmem:[%s2 + $0xc] sm:$0xf]
    %v1472 = vld [vmem:[%s2 + $0x10] sm:$0xf]
    %v1473 = vld [vmem:[%s2 + $0x14] sm:$0xf]
    %v1474 = vld [vmem:[%s2 + $0x18] sm:$0xf]
    %v1475 = vld [vmem:[%s2 + $0x1c] sm:$0xf]
    %v1476 = vld [vmem:[%s2 + $0x20] sm:$0xf]
    %v1477 = vld [vmem:[%s2 + $0x24] sm:$0xf]
    %v1478 = vld [vmem:[%s2 + $0x28] sm:$0xf]
    %v1479 = vld [vmem:[%s2 + $0x2c] sm:$0xf]
    %v1480 = vld [vmem:[%s2 + $0x30] sm:$0xf]
    %v1481 = vld [vmem:[%s2 + $0x34] sm:$0xf]
    %v1482 = vld [vmem:[%s2 + $0x38] sm:$0xf]
    %v1483 = vld [vmem:[%s2 + $0x3c] sm:$0xf]
    %v1484 = vld [vmem:[%s2 + $0x40] sm:$0xf]
    %v1485 = vld [vmem:[%s2 + $0x44] sm:$0xf]
    %v1486 = vld [vmem:[%s2 + $0x48] sm:$0xf]
    %v1487 = vld [vmem:[%s2 + $0x4c] sm:$0xf]
    %v1488 = vld [vmem:[%s2 + $0x50] sm:$0xf]
    %v1489 = vld [vmem:[%s2 + $0x54] sm:$0xf]
    %v1490 = vld [vmem:[%s2 + $0x58] sm:$0xf]
    %v1491 = vld [vmem:[%s2 + $0x5c] sm:$0xf]
    %v1492 = vld [vmem:[%s2 + $0x60] sm:$0xf]
    %v1493 = vld [vmem:[%s2 + $0x64] sm:$0xf]
    %v1494 = vld [vmem:[%s2 + $0x68] sm:$0xf]
    %v1495 = vld [vmem:[%s2 + $0x6c] sm:$0xf]
    %v1496 = vld [vmem:[%s2 + $0x70] sm:$0xf]
    %v1497 = vld [vmem:[%s2 + $0x74] sm:$0xf]
    %v1498 = vld [vmem:[%s2 + $0x78] sm:$0xf]
    %v1499 = vld [vmem:[%s2 + $0x7c] sm:$0xf]
    %v1500 = vld [vmem:[%s2 + $0x80] sm:$0xf]
    %v1501 = vld [vmem:[%s2 + $0x84] sm:$0xf]
    %v1502 = vld [vmem:[%s2 + $0x88] sm:$0xf]
    %v1503 = vld [vmem:[%s2 + $0x8c] sm:$0xf]
    %v1504 = vld [vmem:[%s3] sm:$0x1]
    %v1506 = vlaneseq
    %v1507 = vshrl.u32 %v1506, 7
    %v1508 = vsub.s32 0, %v1507
    %v1509 = vrot.slane %v1504, %v1508
    %v1539 = vunpack.c.l.b16 %v1440
    %v1540 = vunpack.c.h.b16 %v1440
    %v1541 = vunpack.c.l.b16 %v1441
    %v1542 = vunpack.c.l.b16 %v1442
    %v1543 = vunpack.c.h.b16 %v1442
    %v1544 = vunpack.c.l.b16 %v1443
    %v1545 = vunpack.c.l.b16 %v1444
    %v1546 = vunpack.c.h.b16 %v1444
    %v1547 = vunpack.c.l.b16 %v1445
    %v1548 = vunpack.c.l.b16 %v1446
    %v1549 = vunpack.c.h.b16 %v1446
    %v1550 = vunpack.c.l.b16 %v1447
    %v1551 = vunpack.c.l.b16 %v1448
    %v1552 = vunpack.c.h.b16 %v1448
    %v1553 = vunpack.c.l.b16 %v1449
    %v1554 = vunpack.c.l.b16 %v1450
    %v1555 = vunpack.c.h.b16 %v1450
    %v1556 = vunpack.c.l.b16 %v1451
    %v1557 = vunpack.c.l.b16 %v1452
    %v1558 = vunpack.c.h.b16 %v1452
    %v1559 = vunpack.c.l.b16 %v1453
    %v1560 = vunpack.c.l.b16 %v1454
    %v1561 = vunpack.c.h.b16 %v1454
    %v1562 = vunpack.c.l.b16 %v1455
    %v1563 = vunpack.c.l.b16 %v1456
    %v1564 = vunpack.c.h.b16 %v1456
    %v1565 = vunpack.c.l.b16 %v1457
    %v1566 = vunpack.c.l.b16 %v1458
    %v1567 = vunpack.c.h.b16 %v1458
    %v1568 = vunpack.c.l.b16 %v1459
    %v1569 = vunpack.c.l.b16 %v1460
    %v1570 = vunpack.c.h.b16 %v1460
    %v1571 = vunpack.c.l.b16 %v1461
    %v1572 = vunpack.c.l.b16 %v1462
    %v1573 = vunpack.c.h.b16 %v1462
    %v1574 = vunpack.c.l.b16 %v1463
    %v1575 = vunpack.c.l.b16 %v1464
    %v1576 = vunpack.c.h.b16 %v1464
    %v1577 = vunpack.c.l.b16 %v1465
    %v1578 = vunpack.c.l.b16 %v1466
    %v1579 = vunpack.c.h.b16 %v1466
    %v1580 = vunpack.c.l.b16 %v1467
    %v1581 = vpack.c.b16 %v1542, %v1539
    %v1582 = vpack.c.b16 %v1543, %v1540
    %v1583 = vpack.c.b16 %v1544, %v1541
    %v1584 = vpack.c.b16 %v1548, %v1545
    %v1585 = vpack.c.b16 %v1549, %v1546
    %v1586 = vpack.c.b16 %v1550, %v1547
    %v1587 = vpack.c.b16 %v1554, %v1551
    %v1588 = vpack.c.b16 %v1555, %v1552
    %v1589 = vpack.c.b16 %v1556, %v1553
    %v1590 = vpack.c.b16 %v1560, %v1557
    %v1591 = vpack.c.b16 %v1561, %v1558
    %v1592 = vpack.c.b16 %v1562, %v1559
    %v1593 = vpack.c.b16 %v1566, %v1563
    %v1594 = vpack.c.b16 %v1567, %v1564
    %v1595 = vpack.c.b16 %v1568, %v1565
    %v1596 = vpack.c.b16 %v1572, %v1569
    %v1597 = vpack.c.b16 %v1573, %v1570
    %v1598 = vpack.c.b16 %v1574, %v1571
    %v1599 = vpack.c.b16 %v1578, %v1575
    %v1600 = vpack.c.b16 %v1579, %v1576
    %v1601 = vpack.c.b16 %v1580, %v1577
    %v1652 = vunpack.c.l.b16 %v1468
    %v1653 = vunpack.c.l.b16 %v1469
    %v1654 = vunpack.c.l.b16 %v1470
    %v1655 = vunpack.c.l.b16 %v1471
    %v1656 = vunpack.c.l.b16 %v1472
    %v1657 = vunpack.c.l.b16 %v1473
    %v1658 = vunpack.c.l.b16 %v1474
    %v1659 = vunpack.c.l.b16 %v1475
    %v1660 = vunpack.c.l.b16 %v1476
    %v1661 = vunpack.c.l.b16 %v1477
    %v1662 = vunpack.c.l.b16 %v1478
    %v1663 = vunpack.c.l.b16 %v1479
    %v1664 = vunpack.c.l.b16 %v1480
    %v1665 = vunpack.c.l.b16 %v1481
    %v1666 = vunpack.c.l.b16 %v1482
    %v1667 = vunpack.c.l.b16 %v1483
    %v1668 = vunpack.c.l.b16 %v1484
    %v1669 = vunpack.c.l.b16 %v1485
    %v1670 = vunpack.c.l.b16 %v1486
    %v1671 = vunpack.c.l.b16 %v1487
    %v1672 = vunpack.c.l.b16 %v1488
    %v1673 = vunpack.c.l.b16 %v1489
    %v1674 = vunpack.c.l.b16 %v1490
    %v1675 = vunpack.c.l.b16 %v1491
    %v1676 = vunpack.c.l.b16 %v1492
    %v1677 = vunpack.c.l.b16 %v1493
    %v1678 = vunpack.c.l.b16 %v1494
    %v1679 = vunpack.c.l.b16 %v1495
    %v1680 = vunpack.c.l.b16 %v1496
    %v1681 = vunpack.c.l.b16 %v1497
    %v1682 = vunpack.c.l.b16 %v1498
    %v1683 = vunpack.c.l.b16 %v1499
    %v1684 = vunpack.c.l.b16 %v1500
    %v1685 = vunpack.c.l.b16 %v1501
    %v1686 = vunpack.c.l.b16 %v1502
    %v1687 = vunpack.c.l.b16 %v1503
    %v1688 = vpack.c.b16 %v1653, %v1652
    %v1689 = vpack.c.b16 %v1655, %v1654
    %v1690 = vpack.c.b16 %v1657, %v1656
    %v1691 = vpack.c.b16 %v1659, %v1658
    %v1692 = vpack.c.b16 %v1661, %v1660
    %v1693 = vpack.c.b16 %v1663, %v1662
    %v1694 = vpack.c.b16 %v1665, %v1664
    %v1695 = vpack.c.b16 %v1667, %v1666
    %v1696 = vpack.c.b16 %v1669, %v1668
    %v1697 = vpack.c.b16 %v1671, %v1670
    %v1698 = vpack.c.b16 %v1673, %v1672
    %v1699 = vpack.c.b16 %v1675, %v1674
    %v1700 = vpack.c.b16 %v1677, %v1676
    %v1701 = vpack.c.b16 %v1679, %v1678
    %v1702 = vpack.c.b16 %v1681, %v1680
    %v1703 = vpack.c.b16 %v1683, %v1682
    %v1704 = vpack.c.b16 %v1685, %v1684
    %v1705 = vpack.c.b16 %v1687, %v1686
    %v1725 = vsel %vm37, %v1583, 0
    %v1728 = vsel %vm37, %v1586, 0
    %v1731 = vsel %vm37, %v1589, 0
    %v1734 = vsel %vm37, %v1592, 0
    %v1737 = vsel %vm37, %v1595, 0
    %v1740 = vsel %vm37, %v1598, 0
    %v1743 = vsel %vm37, %v1601, 0
    %1745 = vmatprep.subr.bf16.mxu0 0
    %1746 = vmatpush1.bf16.msra.mxu0 %v1695
    %1747 = vmatprep.subr.bf16.mxu0 0
    %1748 = vmatpush1.bf16.msra.mxu0 %v1694
    %1749 = vmatprep.subr.bf16.mxu0 0
    %1750 = vmatpush1.bf16.msra.mxu0 %v1693
    %1751 = vmatprep.subr.bf16.mxu0 0
    %1752 = vmatpush1.bf16.msra.mxu0 %v1692
    %1753 = vmatprep.subr.bf16.mxu0 0
    %1754 = vmatpush1.bf16.msra.mxu0 %v1691
    %1755 = vmatprep.subr.bf16.mxu0 0
    %1756 = vmatpush1.bf16.msra.mxu0 %v1690
    %1757 = vmatprep.subr.bf16.mxu0 0
    %1758 = vmatpush1.bf16.msra.mxu0 %v1689
    %1759 = vmatprep.subr.bf16.mxu0 0
    %1760 = vmatpush1.bf16.msra.mxu0 %v1688
    %1761 = vmatprep.subr.bf16.mxu0 0
    %1762 = vmatpush2.bf16.msra.mxu0 %v1703
    %1763 = vmatprep.subr.bf16.mxu0 0
    %1764 = vmatpush2.bf16.msra.mxu0 %v1702
    %1765 = vmatprep.subr.bf16.mxu0 0
    %1766 = vmatpush2.bf16.msra.mxu0 %v1701
    %1767 = vmatprep.subr.bf16.mxu0 0
    %1768 = vmatpush2.bf16.msra.mxu0 %v1700
    %1769 = vmatprep.subr.bf16.mxu0 0
    %1770 = vmatpush2.bf16.msra.mxu0 %v1699
    %1771 = vmatprep.subr.bf16.mxu0 0
    %1772 = vmatpush2.bf16.msra.mxu0 %v1698
    %1773 = vmatprep.subr.bf16.mxu0 0
    %1774 = vmatpush2.bf16.msra.mxu0 %v1697
    %1775 = vmatprep.subr.bf16.mxu0 0
    %1776 = vmatpush2.bf16.msra.mxu0 %v1696
    %1777 = vmatprep.mubr.bf16.mxu0 %v1582
    %1778 = vmatmul.mubr.bf16.gmra.mxu0 %v1581
    %v1779 = vpop.f32.mrf.mxu0
    %v1780 = vadd.f32 %v1509, %v1779
    %v1781 = vpop.f32.mrf.mxu0
    %v1782 = vpop.f32.mrf.mxu0
    %v1783 = vadd.f32 %v1509, %v1782
    %v1784 = vpop.f32.mrf.mxu0
    %1785 = vmatprep.mubr.bf16.mxu0 %v1585
    %1786 = vmatmul.mubr.bf16.gmra.mxu0 %v1584
    %v1787 = vpop.f32.mrf.mxu0
    %v1788 = vadd.f32 %v1509, %v1787
    %v1789 = vpop.f32.mrf.mxu0
    %v1790 = vpop.f32.mrf.mxu0
    %v1791 = vadd.f32 %v1509, %v1790
    %v1792 = vpop.f32.mrf.mxu0
    %1793 = vmatprep.mubr.bf16.mxu0 %v1588
    %1794 = vmatmul.mubr.bf16.gmra.mxu0 %v1587
    %v1795 = vpop.f32.mrf.mxu0
    %v1796 = vadd.f32 %v1509, %v1795
    %v1797 = vpop.f32.mrf.mxu0
    %v1798 = vpop.f32.mrf.mxu0
    %v1799 = vadd.f32 %v1509, %v1798
    %v1800 = vpop.f32.mrf.mxu0
    %1801 = vmatprep.mubr.bf16.mxu0 %v1591
    %1802 = vmatmul.mubr.bf16.gmra.mxu0 %v1590
    %v1803 = vpop.f32.mrf.mxu0
    %v1804 = vadd.f32 %v1509, %v1803
    %v1805 = vpop.f32.mrf.mxu0
    %v1806 = vpop.f32.mrf.mxu0
    %v1807 = vadd.f32 %v1509, %v1806
    %v1808 = vpop.f32.mrf.mxu0
    %1809 = vmatprep.mubr.bf16.mxu0 %v1594
    %1810 = vmatmul.mubr.bf16.gmra.mxu0 %v1593
    %v1811 = vpop.f32.mrf.mxu0
    %v1812 = vadd.f32 %v1509, %v1811
    %v1813 = vpop.f32.mrf.mxu0
    %v1814 = vpop.f32.mrf.mxu0
    %v1815 = vadd.f32 %v1509, %v1814
    %v1816 = vpop.f32.mrf.mxu0
    %1817 = vmatprep.mubr.bf16.mxu0 %v1597
    %1818 = vmatmul.mubr.bf16.gmra.mxu0 %v1596
    %v1819 = vpop.f32.mrf.mxu0
    %v1820 = vadd.f32 %v1509, %v1819
    %v1821 = vpop.f32.mrf.mxu0
    %v1822 = vpop.f32.mrf.mxu0
    %v1823 = vadd.f32 %v1509, %v1822
    %v1824 = vpop.f32.mrf.mxu0
    %1825 = vmatprep.mubr.bf16.mxu0 %v1600
    %1826 = vmatmul.mubr.bf16.gmra.mxu0 %v1599
    %v1827 = vpop.f32.mrf.mxu0
    %v1828 = vadd.f32 %v1509, %v1827
    %v1829 = vpop.f32.mrf.mxu0
    %v1830 = vpop.f32.mrf.mxu0
    %v1831 = vadd.f32 %v1509, %v1830
    %v1832 = vpop.f32.mrf.mxu0
    %1833 = vdwg.mxu0
    %1834 = vmatprep.subr.bf16.mxu0 0
    %1835 = vmatpush1.bf16.msra.mxu0 0
    %1836 = vmatprep.subr.bf16.mxu0 0
    %1837 = vmatpush1.bf16.msra.mxu0 0
    %1838 = vmatprep.subr.bf16.mxu0 0
    %1839 = vmatpush1.bf16.msra.mxu0 0
    %1840 = vmatprep.subr.bf16.mxu0 0
    %1841 = vmatpush1.bf16.msra.mxu0 0
    %1842 = vmatprep.subr.bf16.mxu0 0
    %1843 = vmatpush1.bf16.msra.mxu0 0
    %1844 = vmatprep.subr.bf16.mxu0 0
    %1845 = vmatpush1.bf16.msra.mxu0 0
    %1846 = vmatprep.subr.bf16.mxu0 0
    %1847 = vmatpush1.bf16.msra.mxu0 %v1705
    %1848 = vmatprep.subr.bf16.mxu0 0
    %1849 = vmatpush1.bf16.msra.mxu0 %v1704
    %1850 = vmatprep.subr.bf16.mxu0 0
    %1851 = vmatpush2.bf16.msra.mxu0 0
    %1852 = vmatprep.subr.bf16.mxu0 0
    %1853 = vmatpush2.bf16.msra.mxu0 0
    %1854 = vmatprep.subr.bf16.mxu0 0
    %1855 = vmatpush2.bf16.msra.mxu0 0
    %1856 = vmatprep.subr.bf16.mxu0 0
    %1857 = vmatpush2.bf16.msra.mxu0 0
    %1858 = vmatprep.subr.bf16.mxu0 0
    %1859 = vmatpush2.bf16.msra.mxu0 0
    %1860 = vmatprep.subr.bf16.mxu0 0
    %1861 = vmatpush2.bf16.msra.mxu0 0
    %1862 = vmatprep.subr.bf16.mxu0 0
    %1863 = vmatpush2.bf16.msra.mxu0 0
    %1864 = vmatprep.subr.bf16.mxu0 0
    %1865 = vmatpush2.bf16.msra.mxu0 0
    %1866 = vmatprep.mubr.bf16.mxu0 0
    %1867 = vmatmul.mubr.bf16.gmra.mxu0 %v1725
    %v1868 = vpop.f32.mrf.mxu0
    %v1869 = vadd.f32 %v1780, %v1868
    %v1870 = vpop.f32.mrf.mxu0
    %v1871 = vpop.f32.mrf.mxu0
    %v1872 = vadd.f32 %v1783, %v1871
    %v1873 = vpop.f32.mrf.mxu0
    %1874 = vmatprep.mubr.bf16.mxu0 0
    %1875 = vmatmul.mubr.bf16.gmra.mxu0 %v1728
    %v1876 = vpop.f32.mrf.mxu0
    %v1877 = vadd.f32 %v1788, %v1876
    %v1878 = vpop.f32.mrf.mxu0
    %v1879 = vpop.f32.mrf.mxu0
    %v1880 = vadd.f32 %v1791, %v1879
    %v1881 = vpop.f32.mrf.mxu0
    %1882 = vmatprep.mubr.bf16.mxu0 0
    %1883 = vmatmul.mubr.bf16.gmra.mxu0 %v1731
    %v1884 = vpop.f32.mrf.mxu0
    %v1885 = vadd.f32 %v1796, %v1884
    %v1886 = vpop.f32.mrf.mxu0
    %v1887 = vpop.f32.mrf.mxu0
    %v1888 = vadd.f32 %v1799, %v1887
    %v1889 = vpop.f32.mrf.mxu0
    %1890 = vmatprep.mubr.bf16.mxu0 0
    %1891 = vmatmul.mubr.bf16.gmra.mxu0 %v1734
    %v1892 = vpop.f32.mrf.mxu0
    %v1893 = vadd.f32 %v1804, %v1892
    %v1894 = vpop.f32.mrf.mxu0
    %v1895 = vpop.f32.mrf.mxu0
    %v1896 = vadd.f32 %v1807, %v1895
    %v1897 = vpop.f32.mrf.mxu0
    %1898 = vmatprep.mubr.bf16.mxu0 0
    %1899 = vmatmul.mubr.bf16.gmra.mxu0 %v1737
    %v1900 = vpop.f32.mrf.mxu0
    %v1901 = vadd.f32 %v1812, %v1900
    %v1902 = vpop.f32.mrf.mxu0
    %v1903 = vpop.f32.mrf.mxu0
    %v1904 = vadd.f32 %v1815, %v1903
    %v1905 = vpop.f32.mrf.mxu0
    %1906 = vmatprep.mubr.bf16.mxu0 0
    %1907 = vmatmul.mubr.bf16.gmra.mxu0 %v1740
    %v1908 = vpop.f32.mrf.mxu0
    %v1909 = vadd.f32 %v1820, %v1908
    %v1910 = vpop.f32.mrf.mxu0
    %v1911 = vpop.f32.mrf.mxu0
    %v1912 = vadd.f32 %v1823, %v1911
    %v1913 = vpop.f32.mrf.mxu0
    %1914 = vmatprep.mubr.bf16.mxu0 0
    %1915 = vmatmul.mubr.bf16.gmra.mxu0 %v1743
    %v1916 = vpop.f32.mrf.mxu0
    %v1917 = vadd.f32 %v1828, %v1916
    %v1918 = vpop.f32.mrf.mxu0
    %v1919 = vpop.f32.mrf.mxu0
    %v1920 = vadd.f32 %v1831, %v1919
    %v1921 = vpop.f32.mrf.mxu0
    %1922 = vdwg.mxu0
    %v1923 = vmax.f32 %v1869, 0.0
    %v1924 = vmax.f32 %v1872, 0.0
    %v1925 = vmax.f32 %v1877, 0.0
    %v1926 = vmax.f32 %v1880, 0.0
    %v1927 = vmax.f32 %v1885, 0.0
    %v1928 = vmax.f32 %v1888, 0.0
    %v1929 = vmax.f32 %v1893, 0.0
    %v1930 = vmax.f32 %v1896, 0.0
    %v1931 = vmax.f32 %v1901, 0.0
    %v1932 = vmax.f32 %v1904, 0.0
    %v1933 = vmax.f32 %v1909, 0.0
    %v1934 = vmax.f32 %v1912, 0.0
    %v1935 = vmax.f32 %v1917, 0.0
    %v1936 = vmax.f32 %v1920, 0.0
    %1937 = vst.msk [vmem:[#allocation2 + $0x10] sm:$0xff] %vm37, %v1923
    %1938 = vst.msk [vmem:[#allocation2 + $0x18] sm:$0xff] %vm37, %v1924
    %1939 = vst.msk [vmem:[#allocation2 + $0x20] sm:$0xff] %vm37, %v1925
    %1940 = vst.msk [vmem:[#allocation2 + $0x28] sm:$0xff] %vm37, %v1926
    %1941 = vst.msk [vmem:[#allocation2 + $0x30] sm:$0xff] %vm37, %v1927
    %1942 = vst.msk [vmem:[#allocation2 + $0x38] sm:$0xff] %vm37, %v1928
    %1943 = vst.msk [vmem:[#allocation2 + $0x40] sm:$0xff] %vm37, %v1929
    %1944 = vst.msk [vmem:[#allocation2 + $0x48] sm:$0xff] %vm37, %v1930
    %1945 = vst.msk [vmem:[#allocation2 + $0x50] sm:$0xff] %vm37, %v1931
    %1946 = vst.msk [vmem:[#allocation2 + $0x58] sm:$0xff] %vm37, %v1932
    %1947 = vst.msk [vmem:[#allocation2 + $0x60] sm:$0xff] %vm37, %v1933
    %1948 = vst.msk [vmem:[#allocation2 + $0x68] sm:$0xff] %vm37, %v1934
    %1949 = vst.msk [vmem:[#allocation2 + $0x70] sm:$0xff] %vm37, %v1935
    %1950 = vst.msk [vmem:[#allocation2 + $0x78] sm:$0xff] %vm37, %v1936
    %v1951 = vld [vmem:[#allocation2 + $0x10] sm:$0xff]
    %v1952 = vld [vmem:[#allocation2 + $0x18] sm:$0xff]
    %v1953 = vld [vmem:[#allocation2 + $0x20] sm:$0xff]
    %v1954 = vld [vmem:[#allocation2 + $0x28] sm:$0xff]
    %v1955 = vld [vmem:[#allocation2 + $0x30] sm:$0xff]
    %v1956 = vld [vmem:[#allocation2 + $0x38] sm:$0xff]
    %v1957 = vld [vmem:[#allocation2 + $0x40] sm:$0xff]
    %v1958 = vld [vmem:[#allocation2 + $0x48] sm:$0xff]
    %v1959 = vld [vmem:[#allocation2 + $0x50] sm:$0xff]
    %v1960 = vld [vmem:[#allocation2 + $0x58] sm:$0xff]
    %v1961 = vld [vmem:[#allocation2 + $0x60] sm:$0xff]
    %v1962 = vld [vmem:[#allocation2 + $0x68] sm:$0xff]
    %v1963 = vld [vmem:[#allocation2 + $0x70] sm:$0xff]
    %v1964 = vld [vmem:[#allocation2 + $0x78] sm:$0xff]
    %v1965 = vld [vmem:[#allocation2 + $0x11] sm:$0xff]
    %v1966 = vld [vmem:[#allocation2 + $0x19] sm:$0xff]
    %v1967 = vld [vmem:[#allocation2 + $0x21] sm:$0xff]
    %v1968 = vld [vmem:[#allocation2 + $0x29] sm:$0xff]
    %v1969 = vld [vmem:[#allocation2 + $0x31] sm:$0xff]
    %v1970 = vld [vmem:[#allocation2 + $0x39] sm:$0xff]
    %v1971 = vld [vmem:[#allocation2 + $0x41] sm:$0xff]
    %v1972 = vld [vmem:[#allocation2 + $0x49] sm:$0xff]
    %v1973 = vld [vmem:[#allocation2 + $0x51] sm:$0xff]
    %v1974 = vld [vmem:[#allocation2 + $0x59] sm:$0xff]
    %v1975 = vld [vmem:[#allocation2 + $0x61] sm:$0xff]
    %v1976 = vld [vmem:[#allocation2 + $0x69] sm:$0xff]
    %v1977 = vld [vmem:[#allocation2 + $0x71] sm:$0xff]
    %v1978 = vld [vmem:[#allocation2 + $0x79] sm:$0xff]
    %v1979 = vld [vmem:[#allocation2 + $0x80] sm:$0xff]
    %v1980 = vld [vmem:[#allocation2 + $0x81] sm:$0xff]
    %v1981 = vmax.f32 %v1951, %v1965
    %v1982 = vmax.f32 %v1952, %v1966
    %v1983 = vmax.f32 %v1953, %v1967
    %v1984 = vmax.f32 %v1954, %v1968
    %v1985 = vmax.f32 %v1955, %v1969
    %v1986 = vmax.f32 %v1956, %v1970
    %v1987 = vmax.f32 %v1957, %v1971
    %v1988 = vmax.f32 %v1958, %v1972
    %v1989 = vmax.f32 %v1959, %v1973
    %v1990 = vmax.f32 %v1960, %v1974
    %v1991 = vmax.f32 %v1961, %v1975
    %v1992 = vmax.f32 %v1962, %v1976
    %v1993 = vmax.f32 %v1963, %v1977
    %v1994 = vmax.f32 %v1964, %v1978
    %v1995 = vmax.f32 %v1979, %v1980
    %v1996 = vmax.f32 %v1981, %v1982
    %v1997 = vmax.f32 %v1982, %v1983
    %v1998 = vmax.f32 %v1983, %v1984
    %v1999 = vmax.f32 %v1984, %v1985
    %v2000 = vmax.f32 %v1985, %v1986
    %v2001 = vmax.f32 %v1986, %v1987
    %v2002 = vmax.f32 %v1987, %v1988
    %v2003 = vmax.f32 %v1988, %v1989
    %v2004 = vmax.f32 %v1989, %v1990
    %v2005 = vmax.f32 %v1990, %v1991
    %v2006 = vmax.f32 %v1991, %v1992
    %v2007 = vmax.f32 %v1992, %v1993
    %v2008 = vmax.f32 %v1993, %v1994
    %v2009 = vmax.f32 %v1994, %v1995
    %v2010 = vld [vmem:[%s1] sm:$0xff]
    %v2011 = vld [vmem:[%s1 + $0x8] sm:$0xff]
    %v2012 = vld [vmem:[%s1 + $0x10] sm:$0xff]
    %v2013 = vld [vmem:[%s1 + $0x18] sm:$0xff]
    %v2014 = vld [vmem:[%s1 + $0x20] sm:$0xff]
    %v2015 = vld [vmem:[%s1 + $0x28] sm:$0xff]
    %v2016 = vld [vmem:[%s1 + $0x30] sm:$0xff]
    %v2017 = vld [vmem:[%s1 + $0x38] sm:$0xff]
    %v2018 = vld [vmem:[%s1 + $0x40] sm:$0xff]
    %v2019 = vld [vmem:[%s1 + $0x48] sm:$0xff]
    %v2020 = vld [vmem:[%s1 + $0x50] sm:$0xff]
    %v2021 = vld [vmem:[%s1 + $0x58] sm:$0xff]
    %v2022 = vld [vmem:[%s1 + $0x60] sm:$0xff]
    %v2023 = vld [vmem:[%s1 + $0x68] sm:$0xff]
    %2025 = vset.pattern.permute.xlu0 0
    %2026 = vperm.xlu0 %2025, %v2010
    %v2027 = vpop.permute.xlu0 %2026
    %2030 = vset.pattern.permute.xlu0 0
    %2031 = vperm.xlu0 %2030, %v2011
    %v2032 = vpop.permute.xlu0 %2031
    %2035 = vset.pattern.permute.xlu0 0
    %2036 = vperm.xlu0 %2035, %v2012
    %v2037 = vpop.permute.xlu0 %2036
    %2040 = vset.pattern.permute.xlu0 0
    %2041 = vperm.xlu0 %2040, %v2013
    %v2042 = vpop.permute.xlu0 %2041
    %2045 = vset.pattern.permute.xlu0 0
    %2046 = vperm.xlu0 %2045, %v2014
    %v2047 = vpop.permute.xlu0 %2046
    %2050 = vset.pattern.permute.xlu0 0
    %2051 = vperm.xlu0 %2050, %v2015
    %v2052 = vpop.permute.xlu0 %2051
    %2055 = vset.pattern.permute.xlu0 0
    %2056 = vperm.xlu0 %2055, %v2016
    %v2057 = vpop.permute.xlu0 %2056
    %2060 = vset.pattern.permute.xlu0 0
    %2061 = vperm.xlu0 %2060, %v2017
    %v2062 = vpop.permute.xlu0 %2061
    %2065 = vset.pattern.permute.xlu0 0
    %2066 = vperm.xlu0 %2065, %v2018
    %v2067 = vpop.permute.xlu0 %2066
    %2070 = vset.pattern.permute.xlu0 0
    %2071 = vperm.xlu0 %2070, %v2019
    %v2072 = vpop.permute.xlu0 %2071
    %2075 = vset.pattern.permute.xlu0 0
    %2076 = vperm.xlu0 %2075, %v2020
    %v2077 = vpop.permute.xlu0 %2076
    %2080 = vset.pattern.permute.xlu0 0
    %2081 = vperm.xlu0 %2080, %v2021
    %v2082 = vpop.permute.xlu0 %2081
    %2085 = vset.pattern.permute.xlu0 0
    %2086 = vperm.xlu0 %2085, %v2022
    %v2087 = vpop.permute.xlu0 %2086
    %2090 = vset.pattern.permute.xlu0 0
    %2091 = vperm.xlu0 %2090, %v2023
    %v2092 = vpop.permute.xlu0 %2091
    %v2094 = vmul.f32 %v1996, %v2027
    %v2095 = vmul.f32 %v1997, %v2032
    %v2096 = vmul.f32 %v1998, %v2037
    %v2097 = vmul.f32 %v1999, %v2042
    %v2098 = vmul.f32 %v2000, %v2047
    %v2099 = vmul.f32 %v2001, %v2052
    %v2100 = vmul.f32 %v2002, %v2057
    %v2101 = vmul.f32 %v2003, %v2062
    %v2102 = vmul.f32 %v2004, %v2067
    %v2103 = vmul.f32 %v2005, %v2072
    %v2104 = vmul.f32 %v2006, %v2077
    %v2105 = vmul.f32 %v2007, %v2082
    %v2106 = vmul.f32 %v2008, %v2087
    %v2107 = vmul.f32 %v2009, %v2092
    %2108 = vst.msk [vmem:[#allocation2 + $0x10] sm:$0xff] %vm37, %v2094
    %2109 = vst.msk [vmem:[#allocation2 + $0x18] sm:$0xff] %vm37, %v2095
    %2110 = vst.msk [vmem:[#allocation2 + $0x20] sm:$0xff] %vm37, %v2096
    %2111 = vst.msk [vmem:[#allocation2 + $0x28] sm:$0xff] %vm37, %v2097
    %2112 = vst.msk [vmem:[#allocation2 + $0x30] sm:$0xff] %vm37, %v2098
    %2113 = vst.msk [vmem:[#allocation2 + $0x38] sm:$0xff] %vm37, %v2099
    %2114 = vst.msk [vmem:[#allocation2 + $0x40] sm:$0xff] %vm37, %v2100
    %2115 = vst.msk [vmem:[#allocation2 + $0x48] sm:$0xff] %vm37, %v2101
    %2116 = vst.msk [vmem:[#allocation2 + $0x50] sm:$0xff] %vm37, %v2102
    %2117 = vst.msk [vmem:[#allocation2 + $0x58] sm:$0xff] %vm37, %v2103
    %2118 = vst.msk [vmem:[#allocation2 + $0x60] sm:$0xff] %vm37, %v2104
    %2119 = vst.msk [vmem:[#allocation2 + $0x68] sm:$0xff] %vm37, %v2105
    %2120 = vst.msk [vmem:[#allocation2 + $0x70] sm:$0xff] %vm37, %v2106
    %2121 = vst.msk [vmem:[#allocation2 + $0x78] sm:$0xff] %vm37, %v2107
    %v2122 = vld [vmem:[#allocation2 + $0x7] sm:$0xff]
    %v2123 = vld [vmem:[#allocation2 + $0xf] sm:$0xff]
    %v2124 = vld [vmem:[#allocation2 + $0x17] sm:$0xff]
    %v2125 = vld [vmem:[#allocation2 + $0x1f] sm:$0xff]
    %v2126 = vld [vmem:[#allocation2 + $0x27] sm:$0xff]
    %v2127 = vld [vmem:[#allocation2 + $0x2f] sm:$0xff]
    %v2128 = vld [vmem:[#allocation2 + $0x37] sm:$0xff]
    %v2129 = vld [vmem:[#allocation2 + $0x3f] sm:$0xff]
    %v2130 = vld [vmem:[#allocation2 + $0x47] sm:$0xff]
    %v2131 = vld [vmem:[#allocation2 + $0x4f] sm:$0xff]
    %v2132 = vld [vmem:[#allocation2 + $0x57] sm:$0xff]
    %v2133 = vld [vmem:[#allocation2 + $0x5f] sm:$0xff]
    %v2134 = vld [vmem:[#allocation2 + $0x67] sm:$0xff]
    %v2135 = vld [vmem:[#allocation2 + $0x6f] sm:$0xff]
    %v2136 = vpack.c.bf16 %v2123, %v2122
    %v2137 = vpack.c.bf16 %v2125, %v2124
    %v2138 = vpack.c.bf16 %v2127, %v2126
    %v2139 = vpack.c.bf16 %v2129, %v2128
    %v2140 = vpack.c.bf16 %v2131, %v2130
    %v2141 = vpack.c.bf16 %v2133, %v2132
    %v2142 = vpack.c.bf16 %v2135, %v2134
    %v2150 = vunpack.c.l.b16 %v2136
    %v2151 = vunpack.c.h.b16 %v2136
    %v2152 = vunpack.c.l.b16 %v2137
    %v2153 = vunpack.c.h.b16 %v2137
    %v2154 = vunpack.c.l.b16 %v2138
    %v2155 = vunpack.c.h.b16 %v2138
    %v2156 = vunpack.c.l.b16 %v2139
    %v2157 = vunpack.c.h.b16 %v2139
    %v2158 = vunpack.c.l.b16 %v2140
    %v2159 = vunpack.c.h.b16 %v2140
    %v2160 = vunpack.c.l.b16 %v2141
    %v2161 = vunpack.c.h.b16 %v2141
    %v2162 = vunpack.c.l.b16 %v2142
    %v2163 = vunpack.c.h.b16 %v2142
    %v2164 = vpack.c.b16 %v2150, %v2150
    %v2165 = vpack.c.b16 %v2151, %v2151
    %v2166 = vpack.c.b16 %v2152, %v2152
    %v2167 = vpack.c.b16 %v2153, %v2153
    %v2168 = vpack.c.b16 %v2154, %v2154
    %v2169 = vpack.c.b16 %v2155, %v2155
    %v2170 = vpack.c.b16 %v2156, %v2156
    %v2171 = vpack.c.b16 %v2157, %v2157
    %v2172 = vpack.c.b16 %v2158, %v2158
    %v2173 = vpack.c.b16 %v2159, %v2159
    %v2174 = vpack.c.b16 %v2160, %v2160
    %v2175 = vpack.c.b16 %v2161, %v2161
    %v2176 = vpack.c.b16 %v2162, %v2162
    %v2177 = vpack.c.b16 %v2163, %v2163
    %2192 = vst.msk [vmem:[#allocation3] sm:$0xf] %vm204, %v2164
    %2193 = vst.msk [vmem:[#allocation3 + $0xc] sm:$0xf] %vm204, %v2165
    %2194 = vst.msk [vmem:[#allocation3 + $0x18] sm:$0xf] %vm204, %v2166
    %2195 = vst.msk [vmem:[#allocation3 + $0x24] sm:$0xf] %vm204, %v2167
    %2196 = vst.msk [vmem:[#allocation3 + $0x30] sm:$0xf] %vm204, %v2168
    %2197 = vst.msk [vmem:[#allocation3 + $0x3c] sm:$0xf] %vm204, %v2169
    %2198 = vst.msk [vmem:[#allocation3 + $0x48] sm:$0xf] %vm204, %v2170
    %2199 = vst.msk [vmem:[#allocation3 + $0x54] sm:$0xf] %vm204, %v2171
    %2200 = vst.msk [vmem:[#allocation3 + $0x60] sm:$0xf] %vm204, %v2172
    %2201 = vst.msk [vmem:[#allocation3 + $0x6c] sm:$0xf] %vm204, %v2173
    %2202 = vst.msk [vmem:[#allocation3 + $0x78] sm:$0xf] %vm204, %v2174
    %2203 = vst.msk [vmem:[#allocation3 + $0x84] sm:$0xf] %vm204, %v2175
    %2204 = vst.msk [vmem:[#allocation3 + $0x90] sm:$0xf] %vm204, %v2176
    %2205 = vst.msk [vmem:[#allocation3 + $0x9c] sm:$0xf] %vm204, %v2177
    %v2206 = vld [vmem:[#allocation2 + $0x8] sm:$0xff]
    %v2207 = vld [vmem:[#allocation2 + $0x10] sm:$0xff]
    %v2208 = vld [vmem:[#allocation2 + $0x18] sm:$0xff]
    %v2209 = vld [vmem:[#allocation2 + $0x20] sm:$0xff]
    %v2210 = vld [vmem:[#allocation2 + $0x28] sm:$0xff]
    %v2211 = vld [vmem:[#allocation2 + $0x30] sm:$0xff]
    %v2212 = vld [vmem:[#allocation2 + $0x38] sm:$0xff]
    %v2213 = vld [vmem:[#allocation2 + $0x40] sm:$0xff]
    %v2214 = vld [vmem:[#allocation2 + $0x48] sm:$0xff]
    %v2215 = vld [vmem:[#allocation2 + $0x50] sm:$0xff]
    %v2216 = vld [vmem:[#allocation2 + $0x58] sm:$0xff]
    %v2217 = vld [vmem:[#allocation2 + $0x60] sm:$0xff]
    %v2218 = vld [vmem:[#allocation2 + $0x68] sm:$0xff]
    %v2219 = vld [vmem:[#allocation2 + $0x70] sm:$0xff]
    %v2220 = vpack.c.bf16 %v2207, %v2206
    %v2221 = vpack.c.bf16 %v2209, %v2208
    %v2222 = vpack.c.bf16 %v2211, %v2210
    %v2223 = vpack.c.bf16 %v2213, %v2212
    %v2224 = vpack.c.bf16 %v2215, %v2214
    %v2225 = vpack.c.bf16 %v2217, %v2216
    %v2226 = vpack.c.bf16 %v2219, %v2218
    %v2234 = vunpack.c.l.b16 %v2220
    %v2235 = vunpack.c.h.b16 %v2220
    %v2236 = vunpack.c.l.b16 %v2221
    %v2237 = vunpack.c.h.b16 %v2221
    %v2238 = vunpack.c.l.b16 %v2222
    %v2239 = vunpack.c.h.b16 %v2222
    %v2240 = vunpack.c.l.b16 %v2223
    %v2241 = vunpack.c.h.b16 %v2223
    %v2242 = vunpack.c.l.b16 %v2224
    %v2243 = vunpack.c.h.b16 %v2224
    %v2244 = vunpack.c.l.b16 %v2225
    %v2245 = vunpack.c.h.b16 %v2225
    %v2246 = vunpack.c.l.b16 %v2226
    %v2247 = vunpack.c.h.b16 %v2226
    %v2248 = vpack.c.b16 %v2234, %v2234
    %v2249 = vpack.c.b16 %v2235, %v2235
    %v2250 = vpack.c.b16 %v2236, %v2236
    %v2251 = vpack.c.b16 %v2237, %v2237
    %v2252 = vpack.c.b16 %v2238, %v2238
    %v2253 = vpack.c.b16 %v2239, %v2239
    %v2254 = vpack.c.b16 %v2240, %v2240
    %v2255 = vpack.c.b16 %v2241, %v2241
    %v2256 = vpack.c.b16 %v2242, %v2242
    %v2257 = vpack.c.b16 %v2243, %v2243
    %v2258 = vpack.c.b16 %v2244, %v2244
    %v2259 = vpack.c.b16 %v2245, %v2245
    %v2260 = vpack.c.b16 %v2246, %v2246
    %v2261 = vpack.c.b16 %v2247, %v2247
    %2262 = vrot.lane.b32.xlu0 %v2248, 32
    %v2263 = vpop.permute.xlu0 %2262
    %2264 = vrot.lane.b32.xlu0 %v2249, 32
    %v2265 = vpop.permute.xlu0 %2264
    %2266 = vrot.lane.b32.xlu0 %v2250, 32
    %v2267 = vpop.permute.xlu0 %2266
    %2268 = vrot.lane.b32.xlu0 %v2251, 32
    %v2269 = vpop.permute.xlu0 %2268
    %2270 = vrot.lane.b32.xlu0 %v2252, 32
    %v2271 = vpop.permute.xlu0 %2270
    %2272 = vrot.lane.b32.xlu0 %v2253, 32
    %v2273 = vpop.permute.xlu0 %2272
    %2274 = vrot.lane.b32.xlu0 %v2254, 32
    %v2275 = vpop.permute.xlu0 %2274
    %2276 = vrot.lane.b32.xlu0 %v2255, 32
    %v2277 = vpop.permute.xlu0 %2276
    %2278 = vrot.lane.b32.xlu0 %v2256, 32
    %v2279 = vpop.permute.xlu0 %2278
    %2280 = vrot.lane.b32.xlu0 %v2257, 32
    %v2281 = vpop.permute.xlu0 %2280
    %2282 = vrot.lane.b32.xlu0 %v2258, 32
    %v2283 = vpop.permute.xlu0 %2282
    %2284 = vrot.lane.b32.xlu0 %v2259, 32
    %v2285 = vpop.permute.xlu0 %2284
    %2286 = vrot.lane.b32.xlu0 %v2260, 32
    %v2287 = vpop.permute.xlu0 %2286
    %2288 = vrot.lane.b32.xlu0 %v2261, 32
    %v2289 = vpop.permute.xlu0 %2288
    %2304 = vst.msk [vmem:[#allocation3] sm:$0xf] %vm289, %v2263
    %2305 = vst.msk [vmem:[#allocation3 + $0xc] sm:$0xf] %vm289, %v2265
    %2306 = vst.msk [vmem:[#allocation3 + $0x18] sm:$0xf] %vm289, %v2267
    %2307 = vst.msk [vmem:[#allocation3 + $0x24] sm:$0xf] %vm289, %v2269
    %2308 = vst.msk [vmem:[#allocation3 + $0x30] sm:$0xf] %vm289, %v2271
    %2309 = vst.msk [vmem:[#allocation3 + $0x3c] sm:$0xf] %vm289, %v2273
    %2310 = vst.msk [vmem:[#allocation3 + $0x48] sm:$0xf] %vm289, %v2275
    %2311 = vst.msk [vmem:[#allocation3 + $0x54] sm:$0xf] %vm289, %v2277
    %2312 = vst.msk [vmem:[#allocation3 + $0x60] sm:$0xf] %vm289, %v2279
    %2313 = vst.msk [vmem:[#allocation3 + $0x6c] sm:$0xf] %vm289, %v2281
    %2314 = vst.msk [vmem:[#allocation3 + $0x78] sm:$0xf] %vm289, %v2283
    %2315 = vst.msk [vmem:[#allocation3 + $0x84] sm:$0xf] %vm289, %v2285
    %2316 = vst.msk [vmem:[#allocation3 + $0x90] sm:$0xf] %vm289, %v2287
    %2317 = vst.msk [vmem:[#allocation3 + $0x9c] sm:$0xf] %vm289, %v2289
    %v2318 = vld [vmem:[#allocation2 + $0x9] sm:$0xff]
    %v2319 = vld [vmem:[#allocation2 + $0x11] sm:$0xff]
    %v2320 = vld [vmem:[#allocation2 + $0x19] sm:$0xff]
    %v2321 = vld [vmem:[#allocation2 + $0x21] sm:$0xff]
    %v2322 = vld [vmem:[#allocation2 + $0x29] sm:$0xff]
    %v2323 = vld [vmem:[#allocation2 + $0x31] sm:$0xff]
    %v2324 = vld [vmem:[#allocation2 + $0x39] sm:$0xff]
    %v2325 = vld [vmem:[#allocation2 + $0x41] sm:$0xff]
    %v2326 = vld [vmem:[#allocation2 + $0x49] sm:$0xff]
    %v2327 = vld [vmem:[#allocation2 + $0x51] sm:$0xff]
    %v2328 = vld [vmem:[#allocation2 + $0x59] sm:$0xff]
    %v2329 = vld [vmem:[#allocation2 + $0x61] sm:$0xff]
    %v2330 = vld [vmem:[#allocation2 + $0x69] sm:$0xff]
    %v2331 = vld [vmem:[#allocation2 + $0x71] sm:$0xff]
    %v2332 = vpack.c.bf16 %v2319, %v2318
    %v2333 = vpack.c.bf16 %v2321, %v2320
    %v2334 = vpack.c.bf16 %v2323, %v2322
    %v2335 = vpack.c.bf16 %v2325, %v2324
    %v2336 = vpack.c.bf16 %v2327, %v2326
    %v2337 = vpack.c.bf16 %v2329, %v2328
    %v2338 = vpack.c.bf16 %v2331, %v2330
    %v2346 = vunpack.c.l.b16 %v2332
    %v2347 = vunpack.c.h.b16 %v2332
    %v2348 = vunpack.c.l.b16 %v2333
    %v2349 = vunpack.c.h.b16 %v2333
    %v2350 = vunpack.c.l.b16 %v2334
    %v2351 = vunpack.c.h.b16 %v2334
    %v2352 = vunpack.c.l.b16 %v2335
    %v2353 = vunpack.c.h.b16 %v2335
    %v2354 = vunpack.c.l.b16 %v2336
    %v2355 = vunpack.c.h.b16 %v2336
    %v2356 = vunpack.c.l.b16 %v2337
    %v2357 = vunpack.c.h.b16 %v2337
    %v2358 = vunpack.c.l.b16 %v2338
    %v2359 = vunpack.c.h.b16 %v2338
    %v2360 = vpack.c.b16 %v2346, %v2346
    %v2361 = vpack.c.b16 %v2347, %v2347
    %v2362 = vpack.c.b16 %v2348, %v2348
    %v2363 = vpack.c.b16 %v2349, %v2349
    %v2364 = vpack.c.b16 %v2350, %v2350
    %v2365 = vpack.c.b16 %v2351, %v2351
    %v2366 = vpack.c.b16 %v2352, %v2352
    %v2367 = vpack.c.b16 %v2353, %v2353
    %v2368 = vpack.c.b16 %v2354, %v2354
    %v2369 = vpack.c.b16 %v2355, %v2355
    %v2370 = vpack.c.b16 %v2356, %v2356
    %v2371 = vpack.c.b16 %v2357, %v2357
    %v2372 = vpack.c.b16 %v2358, %v2358
    %v2373 = vpack.c.b16 %v2359, %v2359
    %2374 = vrot.lane.b32.xlu0 %v2360, 64
    %v2375 = vpop.permute.xlu0 %2374
    %2376 = vrot.lane.b32.xlu0 %v2361, 64
    %v2377 = vpop.permute.xlu0 %2376
    %2378 = vrot.lane.b32.xlu0 %v2362, 64
    %v2379 = vpop.permute.xlu0 %2378
    %2380 = vrot.lane.b32.xlu0 %v2363, 64
    %v2381 = vpop.permute.xlu0 %2380
    %2382 = vrot.lane.b32.xlu0 %v2364, 64
    %v2383 = vpop.permute.xlu0 %2382
    %2384 = vrot.lane.b32.xlu0 %v2365, 64
    %v2385 = vpop.permute.xlu0 %2384
    %2386 = vrot.lane.b32.xlu0 %v2366, 64
    %v2387 = vpop.permute.xlu0 %2386
    %2388 = vrot.lane.b32.xlu0 %v2367, 64
    %v2389 = vpop.permute.xlu0 %2388
    %2390 = vrot.lane.b32.xlu0 %v2368, 64
    %v2391 = vpop.permute.xlu0 %2390
    %2392 = vrot.lane.b32.xlu0 %v2369, 64
    %v2393 = vpop.permute.xlu0 %2392
    %2394 = vrot.lane.b32.xlu0 %v2370, 64
    %v2395 = vpop.permute.xlu0 %2394
    %2396 = vrot.lane.b32.xlu0 %v2371, 64
    %v2397 = vpop.permute.xlu0 %2396
    %2398 = vrot.lane.b32.xlu0 %v2372, 64
    %v2399 = vpop.permute.xlu0 %2398
    %2400 = vrot.lane.b32.xlu0 %v2373, 64
    %v2401 = vpop.permute.xlu0 %2400
    %2416 = vst.msk [vmem:[#allocation3] sm:$0xf] %vm508, %v2375
    %2417 = vst.msk [vmem:[#allocation3 + $0xc] sm:$0xf] %vm508, %v2377
    %2418 = vst.msk [vmem:[#allocation3 + $0x18] sm:$0xf] %vm508, %v2379
    %2419 = vst.msk [vmem:[#allocation3 + $0x24] sm:$0xf] %vm508, %v2381
    %2420 = vst.msk [vmem:[#allocation3 + $0x30] sm:$0xf] %vm508, %v2383
    %2421 = vst.msk [vmem:[#allocation3 + $0x3c] sm:$0xf] %vm508, %v2385
    %2422 = vst.msk [vmem:[#allocation3 + $0x48] sm:$0xf] %vm508, %v2387
    %2423 = vst.msk [vmem:[#allocation3 + $0x54] sm:$0xf] %vm508, %v2389
    %2424 = vst.msk [vmem:[#allocation3 + $0x60] sm:$0xf] %vm508, %v2391
    %2425 = vst.msk [vmem:[#allocation3 + $0x6c] sm:$0xf] %vm508, %v2393
    %2426 = vst.msk [vmem:[#allocation3 + $0x78] sm:$0xf] %vm508, %v2395
    %2427 = vst.msk [vmem:[#allocation3 + $0x84] sm:$0xf] %vm508, %v2397
    %2428 = vst.msk [vmem:[#allocation3 + $0x90] sm:$0xf] %vm508, %v2399
    %2429 = vst.msk [vmem:[#allocation3 + $0x9c] sm:$0xf] %vm508, %v2401
    %v2430 = vld [vmem:[#allocation2 + $0xf] sm:$0xff]
    %v2431 = vld [vmem:[#allocation2 + $0x17] sm:$0xff]
    %v2432 = vld [vmem:[#allocation2 + $0x1f] sm:$0xff]
    %v2433 = vld [vmem:[#allocation2 + $0x27] sm:$0xff]
    %v2434 = vld [vmem:[#allocation2 + $0x2f] sm:$0xff]
    %v2435 = vld [vmem:[#allocation2 + $0x37] sm:$0xff]
    %v2436 = vld [vmem:[#allocation2 + $0x3f] sm:$0xff]
    %v2437 = vld [vmem:[#allocation2 + $0x47] sm:$0xff]
    %v2438 = vld [vmem:[#allocation2 + $0x4f] sm:$0xff]
    %v2439 = vld [vmem:[#allocation2 + $0x57] sm:$0xff]
    %v2440 = vld [vmem:[#allocation2 + $0x5f] sm:$0xff]
    %v2441 = vld [vmem:[#allocation2 + $0x67] sm:$0xff]
    %v2442 = vld [vmem:[#allocation2 + $0x6f] sm:$0xff]
    %v2443 = vld [vmem:[#allocation2 + $0x77] sm:$0xff]
    %v2444 = vpack.c.bf16 %v2431, %v2430
    %v2445 = vpack.c.bf16 %v2433, %v2432
    %v2446 = vpack.c.bf16 %v2435, %v2434
    %v2447 = vpack.c.bf16 %v2437, %v2436
    %v2448 = vpack.c.bf16 %v2439, %v2438
    %v2449 = vpack.c.bf16 %v2441, %v2440
    %v2450 = vpack.c.bf16 %v2443, %v2442
    %v2458 = vunpack.c.l.b16 %v2444
    %v2459 = vunpack.c.h.b16 %v2444
    %v2460 = vunpack.c.l.b16 %v2445
    %v2461 = vunpack.c.h.b16 %v2445
    %v2462 = vunpack.c.l.b16 %v2446
    %v2463 = vunpack.c.h.b16 %v2446
    %v2464 = vunpack.c.l.b16 %v2447
    %v2465 = vunpack.c.h.b16 %v2447
    %v2466 = vunpack.c.l.b16 %v2448
    %v2467 = vunpack.c.h.b16 %v2448
    %v2468 = vunpack.c.l.b16 %v2449
    %v2469 = vunpack.c.h.b16 %v2449
    %v2470 = vunpack.c.l.b16 %v2450
    %v2471 = vunpack.c.h.b16 %v2450
    %v2472 = vpack.c.b16 %v2458, %v2458
    %v2473 = vpack.c.b16 %v2459, %v2459
    %v2474 = vpack.c.b16 %v2460, %v2460
    %v2475 = vpack.c.b16 %v2461, %v2461
    %v2476 = vpack.c.b16 %v2462, %v2462
    %v2477 = vpack.c.b16 %v2463, %v2463
    %v2478 = vpack.c.b16 %v2464, %v2464
    %v2479 = vpack.c.b16 %v2465, %v2465
    %v2480 = vpack.c.b16 %v2466, %v2466
    %v2481 = vpack.c.b16 %v2467, %v2467
    %v2482 = vpack.c.b16 %v2468, %v2468
    %v2483 = vpack.c.b16 %v2469, %v2469
    %v2484 = vpack.c.b16 %v2470, %v2470
    %v2485 = vpack.c.b16 %v2471, %v2471
    %2486 = vrot.lane.b32.xlu0 %v2472, 96
    %v2487 = vpop.permute.xlu0 %2486
    %2488 = vrot.lane.b32.xlu0 %v2473, 96
    %v2489 = vpop.permute.xlu0 %2488
    %2490 = vrot.lane.b32.xlu0 %v2474, 96
    %v2491 = vpop.permute.xlu0 %2490
    %2492 = vrot.lane.b32.xlu0 %v2475, 96
    %v2493 = vpop.permute.xlu0 %2492
    %2494 = vrot.lane.b32.xlu0 %v2476, 96
    %v2495 = vpop.permute.xlu0 %2494
    %2496 = vrot.lane.b32.xlu0 %v2477, 96
    %v2497 = vpop.permute.xlu0 %2496
    %2498 = vrot.lane.b32.xlu0 %v2478, 96
    %v2499 = vpop.permute.xlu0 %2498
    %2500 = vrot.lane.b32.xlu0 %v2479, 96
    %v2501 = vpop.permute.xlu0 %2500
    %2502 = vrot.lane.b32.xlu0 %v2480, 96
    %v2503 = vpop.permute.xlu0 %2502
    %2504 = vrot.lane.b32.xlu0 %v2481, 96
    %v2505 = vpop.permute.xlu0 %2504
    %2506 = vrot.lane.b32.xlu0 %v2482, 96
    %v2507 = vpop.permute.xlu0 %2506
    %2508 = vrot.lane.b32.xlu0 %v2483, 96
    %v2509 = vpop.permute.xlu0 %2508
    %2510 = vrot.lane.b32.xlu0 %v2484, 96
    %v2511 = vpop.permute.xlu0 %2510
    %2512 = vrot.lane.b32.xlu0 %v2485, 96
    %v2513 = vpop.permute.xlu0 %2512
    %2528 = vst.msk [vmem:[#allocation3] sm:$0xf] %vm710, %v2487
    %2529 = vst.msk [vmem:[#allocation3 + $0xc] sm:$0xf] %vm710, %v2489
    %2530 = vst.msk [vmem:[#allocation3 + $0x18] sm:$0xf] %vm710, %v2491
    %2531 = vst.msk [vmem:[#allocation3 + $0x24] sm:$0xf] %vm710, %v2493
    %2532 = vst.msk [vmem:[#allocation3 + $0x30] sm:$0xf] %vm710, %v2495
    %2533 = vst.msk [vmem:[#allocation3 + $0x3c] sm:$0xf] %vm710, %v2497
    %2534 = vst.msk [vmem:[#allocation3 + $0x48] sm:$0xf] %vm710, %v2499
    %2535 = vst.msk [vmem:[#allocation3 + $0x54] sm:$0xf] %vm710, %v2501
    %2536 = vst.msk [vmem:[#allocation3 + $0x60] sm:$0xf] %vm710, %v2503
    %2537 = vst.msk [vmem:[#allocation3 + $0x6c] sm:$0xf] %vm710, %v2505
    %2538 = vst.msk [vmem:[#allocation3 + $0x78] sm:$0xf] %vm710, %v2507
    %2539 = vst.msk [vmem:[#allocation3 + $0x84] sm:$0xf] %vm710, %v2509
    %2540 = vst.msk [vmem:[#allocation3 + $0x90] sm:$0xf] %vm710, %v2511
    %2541 = vst.msk [vmem:[#allocation3 + $0x9c] sm:$0xf] %vm710, %v2513
    %v2542 = vld [vmem:[#allocation2 + $0x10] sm:$0xff]
    %v2543 = vld [vmem:[#allocation2 + $0x18] sm:$0xff]
    %v2544 = vld [vmem:[#allocation2 + $0x20] sm:$0xff]
    %v2545 = vld [vmem:[#allocation2 + $0x28] sm:$0xff]
    %v2546 = vld [vmem:[#allocation2 + $0x30] sm:$0xff]
    %v2547 = vld [vmem:[#allocation2 + $0x38] sm:$0xff]
    %v2548 = vld [vmem:[#allocation2 + $0x40] sm:$0xff]
    %v2549 = vld [vmem:[#allocation2 + $0x48] sm:$0xff]
    %v2550 = vld [vmem:[#allocation2 + $0x50] sm:$0xff]
    %v2551 = vld [vmem:[#allocation2 + $0x58] sm:$0xff]
    %v2552 = vld [vmem:[#allocation2 + $0x60] sm:$0xff]
    %v2553 = vld [vmem:[#allocation2 + $0x68] sm:$0xff]
    %v2554 = vld [vmem:[#allocation2 + $0x70] sm:$0xff]
    %v2555 = vld [vmem:[#allocation2 + $0x78] sm:$0xff]
    %v2556 = vpack.c.bf16 %v2543, %v2542
    %v2557 = vpack.c.bf16 %v2545, %v2544
    %v2558 = vpack.c.bf16 %v2547, %v2546
    %v2559 = vpack.c.bf16 %v2549, %v2548
    %v2560 = vpack.c.bf16 %v2551, %v2550
    %v2561 = vpack.c.bf16 %v2553, %v2552
    %v2562 = vpack.c.bf16 %v2555, %v2554
    %v2570 = vunpack.c.l.b16 %v2556
    %v2571 = vunpack.c.h.b16 %v2556
    %v2572 = vunpack.c.l.b16 %v2557
    %v2573 = vunpack.c.h.b16 %v2557
    %v2574 = vunpack.c.l.b16 %v2558
    %v2575 = vunpack.c.h.b16 %v2558
    %v2576 = vunpack.c.l.b16 %v2559
    %v2577 = vunpack.c.h.b16 %v2559
    %v2578 = vunpack.c.l.b16 %v2560
    %v2579 = vunpack.c.h.b16 %v2560
    %v2580 = vunpack.c.l.b16 %v2561
    %v2581 = vunpack.c.h.b16 %v2561
    %v2582 = vunpack.c.l.b16 %v2562
    %v2583 = vunpack.c.h.b16 %v2562
    %v2584 = vpack.c.b16 %v2570, %v2570
    %v2585 = vpack.c.b16 %v2571, %v2571
    %v2586 = vpack.c.b16 %v2572, %v2572
    %v2587 = vpack.c.b16 %v2573, %v2573
    %v2588 = vpack.c.b16 %v2574, %v2574
    %v2589 = vpack.c.b16 %v2575, %v2575
    %v2590 = vpack.c.b16 %v2576, %v2576
    %v2591 = vpack.c.b16 %v2577, %v2577
    %v2592 = vpack.c.b16 %v2578, %v2578
    %v2593 = vpack.c.b16 %v2579, %v2579
    %v2594 = vpack.c.b16 %v2580, %v2580
    %v2595 = vpack.c.b16 %v2581, %v2581
    %v2596 = vpack.c.b16 %v2582, %v2582
    %v2597 = vpack.c.b16 %v2583, %v2583
    %2612 = vst.msk [vmem:[#allocation3 + $0x4] sm:$0xf] %vm204, %v2584
    %2613 = vst.msk [vmem:[#allocation3 + $0x10] sm:$0xf] %vm204, %v2585
    %2614 = vst.msk [vmem:[#allocation3 + $0x1c] sm:$0xf] %vm204, %v2586
    %2615 = vst.msk [vmem:[#allocation3 + $0x28] sm:$0xf] %vm204, %v2587
    %2616 = vst.msk [vmem:[#allocation3 + $0x34] sm:$0xf] %vm204, %v2588
    %2617 = vst.msk [vmem:[#allocation3 + $0x40] sm:$0xf] %vm204, %v2589
    %2618 = vst.msk [vmem:[#allocation3 + $0x4c] sm:$0xf] %vm204, %v2590
    %2619 = vst.msk [vmem:[#allocation3 + $0x58] sm:$0xf] %vm204, %v2591
    %2620 = vst.msk [vmem:[#allocation3 + $0x64] sm:$0xf] %vm204, %v2592
    %2621 = vst.msk [vmem:[#allocation3 + $0x70] sm:$0xf] %vm204, %v2593
    %2622 = vst.msk [vmem:[#allocation3 + $0x7c] sm:$0xf] %vm204, %v2594
    %2623 = vst.msk [vmem:[#allocation3 + $0x88] sm:$0xf] %vm204, %v2595
    %2624 = vst.msk [vmem:[#allocation3 + $0x94] sm:$0xf] %vm204, %v2596
    %2625 = vst.msk [vmem:[#allocation3 + $0xa0] sm:$0xf] %vm204, %v2597
    %v2626 = vld [vmem:[#allocation2 + $0x11] sm:$0xff]
    %v2627 = vld [vmem:[#allocation2 + $0x19] sm:$0xff]
    %v2628 = vld [vmem:[#allocation2 + $0x21] sm:$0xff]
    %v2629 = vld [vmem:[#allocation2 + $0x29] sm:$0xff]
    %v2630 = vld [vmem:[#allocation2 + $0x31] sm:$0xff]
    %v2631 = vld [vmem:[#allocation2 + $0x39] sm:$0xff]
    %v2632 = vld [vmem:[#allocation2 + $0x41] sm:$0xff]
    %v2633 = vld [vmem:[#allocation2 + $0x49] sm:$0xff]
    %v2634 = vld [vmem:[#allocation2 + $0x51] sm:$0xff]
    %v2635 = vld [vmem:[#allocation2 + $0x59] sm:$0xff]
    %v2636 = vld [vmem:[#allocation2 + $0x61] sm:$0xff]
    %v2637 = vld [vmem:[#allocation2 + $0x69] sm:$0xff]
    %v2638 = vld [vmem:[#allocation2 + $0x71] sm:$0xff]
    %v2639 = vld [vmem:[#allocation2 + $0x79] sm:$0xff]
    %v2640 = vpack.c.bf16 %v2627, %v2626
    %v2641 = vpack.c.bf16 %v2629, %v2628
    %v2642 = vpack.c.bf16 %v2631, %v2630
    %v2643 = vpack.c.bf16 %v2633, %v2632
    %v2644 = vpack.c.bf16 %v2635, %v2634
    %v2645 = vpack.c.bf16 %v2637, %v2636
    %v2646 = vpack.c.bf16 %v2639, %v2638
    %v2654 = vunpack.c.l.b16 %v2640
    %v2655 = vunpack.c.h.b16 %v2640
    %v2656 = vunpack.c.l.b16 %v2641
    %v2657 = vunpack.c.h.b16 %v2641
    %v2658 = vunpack.c.l.b16 %v2642
    %v2659 = vunpack.c.h.b16 %v2642
    %v2660 = vunpack.c.l.b16 %v2643
    %v2661 = vunpack.c.h.b16 %v2643
    %v2662 = vunpack.c.l.b16 %v2644
    %v2663 = vunpack.c.h.b16 %v2644
    %v2664 = vunpack.c.l.b16 %v2645
    %v2665 = vunpack.c.h.b16 %v2645
    %v2666 = vunpack.c.l.b16 %v2646
    %v2667 = vunpack.c.h.b16 %v2646
    %v2668 = vpack.c.b16 %v2654, %v2654
    %v2669 = vpack.c.b16 %v2655, %v2655
    %v2670 = vpack.c.b16 %v2656, %v2656
    %v2671 = vpack.c.b16 %v2657, %v2657
    %v2672 = vpack.c.b16 %v2658, %v2658
    %v2673 = vpack.c.b16 %v2659, %v2659
    %v2674 = vpack.c.b16 %v2660, %v2660
    %v2675 = vpack.c.b16 %v2661, %v2661
    %v2676 = vpack.c.b16 %v2662, %v2662
    %v2677 = vpack.c.b16 %v2663, %v2663
    %v2678 = vpack.c.b16 %v2664, %v2664
    %v2679 = vpack.c.b16 %v2665, %v2665
    %v2680 = vpack.c.b16 %v2666, %v2666
    %v2681 = vpack.c.b16 %v2667, %v2667
    %2682 = vrot.lane.b32.xlu0 %v2668, 32
    %v2683 = vpop.permute.xlu0 %2682
    %2684 = vrot.lane.b32.xlu0 %v2669, 32
    %v2685 = vpop.permute.xlu0 %2684
    %2686 = vrot.lane.b32.xlu0 %v2670, 32
    %v2687 = vpop.permute.xlu0 %2686
    %2688 = vrot.lane.b32.xlu0 %v2671, 32
    %v2689 = vpop.permute.xlu0 %2688
    %2690 = vrot.lane.b32.xlu0 %v2672, 32
    %v2691 = vpop.permute.xlu0 %2690
    %2692 = vrot.lane.b32.xlu0 %v2673, 32
    %v2693 = vpop.permute.xlu0 %2692
    %2694 = vrot.lane.b32.xlu0 %v2674, 32
    %v2695 = vpop.permute.xlu0 %2694
    %2696 = vrot.lane.b32.xlu0 %v2675, 32
    %v2697 = vpop.permute.xlu0 %2696
    %2698 = vrot.lane.b32.xlu0 %v2676, 32
    %v2699 = vpop.permute.xlu0 %2698
    %2700 = vrot.lane.b32.xlu0 %v2677, 32
    %v2701 = vpop.permute.xlu0 %2700
    %2702 = vrot.lane.b32.xlu0 %v2678, 32
    %v2703 = vpop.permute.xlu0 %2702
    %2704 = vrot.lane.b32.xlu0 %v2679, 32
    %v2705 = vpop.permute.xlu0 %2704
    %2706 = vrot.lane.b32.xlu0 %v2680, 32
    %v2707 = vpop.permute.xlu0 %2706
    %2708 = vrot.lane.b32.xlu0 %v2681, 32
    %v2709 = vpop.permute.xlu0 %2708
    %2724 = vst.msk [vmem:[#allocation3 + $0x4] sm:$0xf] %vm289, %v2683
    %2725 = vst.msk [vmem:[#allocation3 + $0x10] sm:$0xf] %vm289, %v2685
    %2726 = vst.msk [vmem:[#allocation3 + $0x1c] sm:$0xf] %vm289, %v2687
    %2727 = vst.msk [vmem:[#allocation3 + $0x28] sm:$0xf] %vm289, %v2689
    %2728 = vst.msk [vmem:[#allocation3 + $0x34] sm:$0xf] %vm289, %v2691
    %2729 = vst.msk [vmem:[#allocation3 + $0x40] sm:$0xf] %vm289, %v2693
    %2730 = vst.msk [vmem:[#allocation3 + $0x4c] sm:$0xf] %vm289, %v2695
    %2731 = vst.msk [vmem:[#allocation3 + $0x58] sm:$0xf] %vm289, %v2697
    %2732 = vst.msk [vmem:[#allocation3 + $0x64] sm:$0xf] %vm289, %v2699
    %2733 = vst.msk [vmem:[#allocation3 + $0x70] sm:$0xf] %vm289, %v2701
    %2734 = vst.msk [vmem:[#allocation3 + $0x7c] sm:$0xf] %vm289, %v2703
    %2735 = vst.msk [vmem:[#allocation3 + $0x88] sm:$0xf] %vm289, %v2705
    %2736 = vst.msk [vmem:[#allocation3 + $0x94] sm:$0xf] %vm289, %v2707
    %2737 = vst.msk [vmem:[#allocation3 + $0xa0] sm:$0xf] %vm289, %v2709
    %v2738 = vld [vmem:[#allocation2 + $0x17] sm:$0xff]
    %v2739 = vld [vmem:[#allocation2 + $0x1f] sm:$0xff]
    %v2740 = vld [vmem:[#allocation2 + $0x27] sm:$0xff]
    %v2741 = vld [vmem:[#allocation2 + $0x2f] sm:$0xff]
    %v2742 = vld [vmem:[#allocation2 + $0x37] sm:$0xff]
    %v2743 = vld [vmem:[#allocation2 + $0x3f] sm:$0xff]
    %v2744 = vld [vmem:[#allocation2 + $0x47] sm:$0xff]
    %v2745 = vld [vmem:[#allocation2 + $0x4f] sm:$0xff]
    %v2746 = vld [vmem:[#allocation2 + $0x57] sm:$0xff]
    %v2747 = vld [vmem:[#allocation2 + $0x5f] sm:$0xff]
    %v2748 = vld [vmem:[#allocation2 + $0x67] sm:$0xff]
    %v2749 = vld [vmem:[#allocation2 + $0x6f] sm:$0xff]
    %v2750 = vld [vmem:[#allocation2 + $0x77] sm:$0xff]
    %v2751 = vld [vmem:[#allocation2 + $0x7f] sm:$0xff]
    %v2752 = vpack.c.bf16 %v2739, %v2738
    %v2753 = vpack.c.bf16 %v2741, %v2740
    %v2754 = vpack.c.bf16 %v2743, %v2742
    %v2755 = vpack.c.bf16 %v2745, %v2744
    %v2756 = vpack.c.bf16 %v2747, %v2746
    %v2757 = vpack.c.bf16 %v2749, %v2748
    %v2758 = vpack.c.bf16 %v2751, %v2750
    %v2766 = vunpack.c.l.b16 %v2752
    %v2767 = vunpack.c.h.b16 %v2752
    %v2768 = vunpack.c.l.b16 %v2753
    %v2769 = vunpack.c.h.b16 %v2753
    %v2770 = vunpack.c.l.b16 %v2754
    %v2771 = vunpack.c.h.b16 %v2754
    %v2772 = vunpack.c.l.b16 %v2755
    %v2773 = vunpack.c.h.b16 %v2755
    %v2774 = vunpack.c.l.b16 %v2756
    %v2775 = vunpack.c.h.b16 %v2756
    %v2776 = vunpack.c.l.b16 %v2757
    %v2777 = vunpack.c.h.b16 %v2757
    %v2778 = vunpack.c.l.b16 %v2758
    %v2779 = vunpack.c.h.b16 %v2758
    %v2780 = vpack.c.b16 %v2766, %v2766
    %v2781 = vpack.c.b16 %v2767, %v2767
    %v2782 = vpack.c.b16 %v2768, %v2768
    %v2783 = vpack.c.b16 %v2769, %v2769
    %v2784 = vpack.c.b16 %v2770, %v2770
    %v2785 = vpack.c.b16 %v2771, %v2771
    %v2786 = vpack.c.b16 %v2772, %v2772
    %v2787 = vpack.c.b16 %v2773, %v2773
    %v2788 = vpack.c.b16 %v2774, %v2774
    %v2789 = vpack.c.b16 %v2775, %v2775
    %v2790 = vpack.c.b16 %v2776, %v2776
    %v2791 = vpack.c.b16 %v2777, %v2777
    %v2792 = vpack.c.b16 %v2778, %v2778
    %v2793 = vpack.c.b16 %v2779, %v2779
    %2794 = vrot.lane.b32.xlu0 %v2780, 64
    %v2795 = vpop.permute.xlu0 %2794
    %2796 = vrot.lane.b32.xlu0 %v2781, 64
    %v2797 = vpop.permute.xlu0 %2796
    %2798 = vrot.lane.b32.xlu0 %v2782, 64
    %v2799 = vpop.permute.xlu0 %2798
    %2800 = vrot.lane.b32.xlu0 %v2783, 64
    %v2801 = vpop.permute.xlu0 %2800
    %2802 = vrot.lane.b32.xlu0 %v2784, 64
    %v2803 = vpop.permute.xlu0 %2802
    %2804 = vrot.lane.b32.xlu0 %v2785, 64
    %v2805 = vpop.permute.xlu0 %2804
    %2806 = vrot.lane.b32.xlu0 %v2786, 64
    %v2807 = vpop.permute.xlu0 %2806
    %2808 = vrot.lane.b32.xlu0 %v2787, 64
    %v2809 = vpop.permute.xlu0 %2808
    %2810 = vrot.lane.b32.xlu0 %v2788, 64
    %v2811 = vpop.permute.xlu0 %2810
    %2812 = vrot.lane.b32.xlu0 %v2789, 64
    %v2813 = vpop.permute.xlu0 %2812
    %2814 = vrot.lane.b32.xlu0 %v2790, 64
    %v2815 = vpop.permute.xlu0 %2814
    %2816 = vrot.lane.b32.xlu0 %v2791, 64
    %v2817 = vpop.permute.xlu0 %2816
    %2818 = vrot.lane.b32.xlu0 %v2792, 64
    %v2819 = vpop.permute.xlu0 %2818
    %2820 = vrot.lane.b32.xlu0 %v2793, 64
    %v2821 = vpop.permute.xlu0 %2820
    %2836 = vst.msk [vmem:[#allocation3 + $0x4] sm:$0xf] %vm508, %v2795
    %2837 = vst.msk [vmem:[#allocation3 + $0x10] sm:$0xf] %vm508, %v2797
    %2838 = vst.msk [vmem:[#allocation3 + $0x1c] sm:$0xf] %vm508, %v2799
    %2839 = vst.msk [vmem:[#allocation3 + $0x28] sm:$0xf] %vm508, %v2801
    %2840 = vst.msk [vmem:[#allocation3 + $0x34] sm:$0xf] %vm508, %v2803
    %2841 = vst.msk [vmem:[#allocation3 + $0x40] sm:$0xf] %vm508, %v2805
    %2842 = vst.msk [vmem:[#allocation3 + $0x4c] sm:$0xf] %vm508, %v2807
    %2843 = vst.msk [vmem:[#allocation3 + $0x58] sm:$0xf] %vm508, %v2809
    %2844 = vst.msk [vmem:[#allocation3 + $0x64] sm:$0xf] %vm508, %v2811
    %2845 = vst.msk [vmem:[#allocation3 + $0x70] sm:$0xf] %vm508, %v2813
    %2846 = vst.msk [vmem:[#allocation3 + $0x7c] sm:$0xf] %vm508, %v2815
    %2847 = vst.msk [vmem:[#allocation3 + $0x88] sm:$0xf] %vm508, %v2817
    %2848 = vst.msk [vmem:[#allocation3 + $0x94] sm:$0xf] %vm508, %v2819
    %2849 = vst.msk [vmem:[#allocation3 + $0xa0] sm:$0xf] %vm508, %v2821
    %v2850 = vld [vmem:[#allocation2 + $0x18] sm:$0xff]
    %v2851 = vld [vmem:[#allocation2 + $0x20] sm:$0xff]
    %v2852 = vld [vmem:[#allocation2 + $0x28] sm:$0xff]
    %v2853 = vld [vmem:[#allocation2 + $0x30] sm:$0xff]
    %v2854 = vld [vmem:[#allocation2 + $0x38] sm:$0xff]
    %v2855 = vld [vmem:[#allocation2 + $0x40] sm:$0xff]
    %v2856 = vld [vmem:[#allocation2 + $0x48] sm:$0xff]
    %v2857 = vld [vmem:[#allocation2 + $0x50] sm:$0xff]
    %v2858 = vld [vmem:[#allocation2 + $0x58] sm:$0xff]
    %v2859 = vld [vmem:[#allocation2 + $0x60] sm:$0xff]
    %v2860 = vld [vmem:[#allocation2 + $0x68] sm:$0xff]
    %v2861 = vld [vmem:[#allocation2 + $0x70] sm:$0xff]
    %v2862 = vld [vmem:[#allocation2 + $0x78] sm:$0xff]
    %v2863 = vld [vmem:[#allocation2 + $0x80] sm:$0xff]
    %v2864 = vpack.c.bf16 %v2851, %v2850
    %v2865 = vpack.c.bf16 %v2853, %v2852
    %v2866 = vpack.c.bf16 %v2855, %v2854
    %v2867 = vpack.c.bf16 %v2857, %v2856
    %v2868 = vpack.c.bf16 %v2859, %v2858
    %v2869 = vpack.c.bf16 %v2861, %v2860
    %v2870 = vpack.c.bf16 %v2863, %v2862
    %v2878 = vunpack.c.l.b16 %v2864
    %v2879 = vunpack.c.h.b16 %v2864
    %v2880 = vunpack.c.l.b16 %v2865
    %v2881 = vunpack.c.h.b16 %v2865
    %v2882 = vunpack.c.l.b16 %v2866
    %v2883 = vunpack.c.h.b16 %v2866
    %v2884 = vunpack.c.l.b16 %v2867
    %v2885 = vunpack.c.h.b16 %v2867
    %v2886 = vunpack.c.l.b16 %v2868
    %v2887 = vunpack.c.h.b16 %v2868
    %v2888 = vunpack.c.l.b16 %v2869
    %v2889 = vunpack.c.h.b16 %v2869
    %v2890 = vunpack.c.l.b16 %v2870
    %v2891 = vunpack.c.h.b16 %v2870
    %v2892 = vpack.c.b16 %v2878, %v2878
    %v2893 = vpack.c.b16 %v2879, %v2879
    %v2894 = vpack.c.b16 %v2880, %v2880
    %v2895 = vpack.c.b16 %v2881, %v2881
    %v2896 = vpack.c.b16 %v2882, %v2882
    %v2897 = vpack.c.b16 %v2883, %v2883
    %v2898 = vpack.c.b16 %v2884, %v2884
    %v2899 = vpack.c.b16 %v2885, %v2885
    %v2900 = vpack.c.b16 %v2886, %v2886
    %v2901 = vpack.c.b16 %v2887, %v2887
    %v2902 = vpack.c.b16 %v2888, %v2888
    %v2903 = vpack.c.b16 %v2889, %v2889
    %v2904 = vpack.c.b16 %v2890, %v2890
    %v2905 = vpack.c.b16 %v2891, %v2891
    %2906 = vrot.lane.b32.xlu0 %v2892, 96
    %v2907 = vpop.permute.xlu0 %2906
    %2908 = vrot.lane.b32.xlu0 %v2893, 96
    %v2909 = vpop.permute.xlu0 %2908
    %2910 = vrot.lane.b32.xlu0 %v2894, 96
    %v2911 = vpop.permute.xlu0 %2910
    %2912 = vrot.lane.b32.xlu0 %v2895, 96
    %v2913 = vpop.permute.xlu0 %2912
    %2914 = vrot.lane.b32.xlu0 %v2896, 96
    %v2915 = vpop.permute.xlu0 %2914
    %2916 = vrot.lane.b32.xlu0 %v2897, 96
    %v2917 = vpop.permute.xlu0 %2916
    %2918 = vrot.lane.b32.xlu0 %v2898, 96
    %v2919 = vpop.permute.xlu0 %2918
    %2920 = vrot.lane.b32.xlu0 %v2899, 96
    %v2921 = vpop.permute.xlu0 %2920
    %2922 = vrot.lane.b32.xlu0 %v2900, 96
    %v2923 = vpop.permute.xlu0 %2922
    %2924 = vrot.lane.b32.xlu0 %v2901, 96
    %v2925 = vpop.permute.xlu0 %2924
    %2926 = vrot.lane.b32.xlu0 %v2902, 96
    %v2927 = vpop.permute.xlu0 %2926
    %2928 = vrot.lane.b32.xlu0 %v2903, 96
    %v2929 = vpop.permute.xlu0 %2928
    %2930 = vrot.lane.b32.xlu0 %v2904, 96
    %v2931 = vpop.permute.xlu0 %2930
    %2932 = vrot.lane.b32.xlu0 %v2905, 96
    %v2933 = vpop.permute.xlu0 %2932
    %2948 = vst.msk [vmem:[#allocation3 + $0x4] sm:$0xf] %vm710, %v2907
    %2949 = vst.msk [vmem:[#allocation3 + $0x10] sm:$0xf] %vm710, %v2909
    %2950 = vst.msk [vmem:[#allocation3 + $0x1c] sm:$0xf] %vm710, %v2911
    %2951 = vst.msk [vmem:[#allocation3 + $0x28] sm:$0xf] %vm710, %v2913
    %2952 = vst.msk [vmem:[#allocation3 + $0x34] sm:$0xf] %vm710, %v2915
    %2953 = vst.msk [vmem:[#allocation3 + $0x40] sm:$0xf] %vm710, %v2917
    %2954 = vst.msk [vmem:[#allocation3 + $0x4c] sm:$0xf] %vm710, %v2919
    %2955 = vst.msk [vmem:[#allocation3 + $0x58] sm:$0xf] %vm710, %v2921
    %2956 = vst.msk [vmem:[#allocation3 + $0x64] sm:$0xf] %vm710, %v2923
    %2957 = vst.msk [vmem:[#allocation3 + $0x70] sm:$0xf] %vm710, %v2925
    %2958 = vst.msk [vmem:[#allocation3 + $0x7c] sm:$0xf] %vm710, %v2927
    %2959 = vst.msk [vmem:[#allocation3 + $0x88] sm:$0xf] %vm710, %v2929
    %2960 = vst.msk [vmem:[#allocation3 + $0x94] sm:$0xf] %vm710, %v2931
    %2961 = vst.msk [vmem:[#allocation3 + $0xa0] sm:$0xf] %vm710, %v2933
    %v2962 = vld [vmem:[#allocation2 + $0x19] sm:$0xff]
    %v2963 = vld [vmem:[#allocation2 + $0x21] sm:$0xff]
    %v2964 = vld [vmem:[#allocation2 + $0x29] sm:$0xff]
    %v2965 = vld [vmem:[#allocation2 + $0x31] sm:$0xff]
    %v2966 = vld [vmem:[#allocation2 + $0x39] sm:$0xff]
    %v2967 = vld [vmem:[#allocation2 + $0x41] sm:$0xff]
    %v2968 = vld [vmem:[#allocation2 + $0x49] sm:$0xff]
    %v2969 = vld [vmem:[#allocation2 + $0x51] sm:$0xff]
    %v2970 = vld [vmem:[#allocation2 + $0x59] sm:$0xff]
    %v2971 = vld [vmem:[#allocation2 + $0x61] sm:$0xff]
    %v2972 = vld [vmem:[#allocation2 + $0x69] sm:$0xff]
    %v2973 = vld [vmem:[#allocation2 + $0x71] sm:$0xff]
    %v2974 = vld [vmem:[#allocation2 + $0x79] sm:$0xff]
    %v2975 = vld [vmem:[#allocation2 + $0x81] sm:$0xff]
    %v2976 = vpack.c.bf16 %v2963, %v2962
    %v2977 = vpack.c.bf16 %v2965, %v2964
    %v2978 = vpack.c.bf16 %v2967, %v2966
    %v2979 = vpack.c.bf16 %v2969, %v2968
    %v2980 = vpack.c.bf16 %v2971, %v2970
    %v2981 = vpack.c.bf16 %v2973, %v2972
    %v2982 = vpack.c.bf16 %v2975, %v2974
    %v2990 = vunpack.c.l.b16 %v2976
    %v2991 = vunpack.c.h.b16 %v2976
    %v2992 = vunpack.c.l.b16 %v2977
    %v2993 = vunpack.c.h.b16 %v2977
    %v2994 = vunpack.c.l.b16 %v2978
    %v2995 = vunpack.c.h.b16 %v2978
    %v2996 = vunpack.c.l.b16 %v2979
    %v2997 = vunpack.c.h.b16 %v2979
    %v2998 = vunpack.c.l.b16 %v2980
    %v2999 = vunpack.c.h.b16 %v2980
    %v3000 = vunpack.c.l.b16 %v2981
    %v3001 = vunpack.c.h.b16 %v2981
    %v3002 = vunpack.c.l.b16 %v2982
    %v3003 = vunpack.c.h.b16 %v2982
    %v3004 = vpack.c.b16 %v2990, %v2990
    %v3005 = vpack.c.b16 %v2991, %v2991
    %v3006 = vpack.c.b16 %v2992, %v2992
    %v3007 = vpack.c.b16 %v2993, %v2993
    %v3008 = vpack.c.b16 %v2994, %v2994
    %v3009 = vpack.c.b16 %v2995, %v2995
    %v3010 = vpack.c.b16 %v2996, %v2996
    %v3011 = vpack.c.b16 %v2997, %v2997
    %v3012 = vpack.c.b16 %v2998, %v2998
    %v3013 = vpack.c.b16 %v2999, %v2999
    %v3014 = vpack.c.b16 %v3000, %v3000
    %v3015 = vpack.c.b16 %v3001, %v3001
    %v3016 = vpack.c.b16 %v3002, %v3002
    %v3017 = vpack.c.b16 %v3003, %v3003
    %3032 = vst.msk [vmem:[#allocation3 + $0x8] sm:$0xf] %vm204, %v3004
    %3033 = vst.msk [vmem:[#allocation3 + $0x14] sm:$0xf] %vm204, %v3005
    %3034 = vst.msk [vmem:[#allocation3 + $0x20] sm:$0xf] %vm204, %v3006
    %3035 = vst.msk [vmem:[#allocation3 + $0x2c] sm:$0xf] %vm204, %v3007
    %3036 = vst.msk [vmem:[#allocation3 + $0x38] sm:$0xf] %vm204, %v3008
    %3037 = vst.msk [vmem:[#allocation3 + $0x44] sm:$0xf] %vm204, %v3009
    %3038 = vst.msk [vmem:[#allocation3 + $0x50] sm:$0xf] %vm204, %v3010
    %3039 = vst.msk [vmem:[#allocation3 + $0x5c] sm:$0xf] %vm204, %v3011
    %3040 = vst.msk [vmem:[#allocation3 + $0x68] sm:$0xf] %vm204, %v3012
    %3041 = vst.msk [vmem:[#allocation3 + $0x74] sm:$0xf] %vm204, %v3013
    %3042 = vst.msk [vmem:[#allocation3 + $0x80] sm:$0xf] %vm204, %v3014
    %3043 = vst.msk [vmem:[#allocation3 + $0x8c] sm:$0xf] %vm204, %v3015
    %3044 = vst.msk [vmem:[#allocation3 + $0x98] sm:$0xf] %vm204, %v3016
    %3045 = vst.msk [vmem:[#allocation3 + $0xa4] sm:$0xf] %vm204, %v3017
    %v3046 = vld [vmem:[#allocation3] sm:$0xff]
    %v3047 = vld [vmem:[#allocation3 + $0x8] sm:$0xf]
    %v3048 = vld [vmem:[#allocation3 + $0xc] sm:$0xff]
    %v3049 = vld [vmem:[#allocation3 + $0x14] sm:$0xf]
    %v3050 = vld [vmem:[#allocation3 + $0x18] sm:$0xff]
    %v3051 = vld [vmem:[#allocation3 + $0x20] sm:$0xf]
    %v3052 = vld [vmem:[#allocation3 + $0x24] sm:$0xff]
    %v3053 = vld [vmem:[#allocation3 + $0x2c] sm:$0xf]
    %v3054 = vld [vmem:[#allocation3 + $0x30] sm:$0xff]
    %v3055 = vld [vmem:[#allocation3 + $0x38] sm:$0xf]
    %v3056 = vld [vmem:[#allocation3 + $0x3c] sm:$0xff]
    %v3057 = vld [vmem:[#allocation3 + $0x44] sm:$0xf]
    %v3058 = vld [vmem:[#allocation3 + $0x48] sm:$0xff]
    %v3059 = vld [vmem:[#allocation3 + $0x50] sm:$0xf]
    %v3060 = vld [vmem:[#allocation3 + $0x54] sm:$0xff]
    %v3061 = vld [vmem:[#allocation3 + $0x5c] sm:$0xf]
    %v3062 = vld [vmem:[#allocation3 + $0x60] sm:$0xff]
    %v3063 = vld [vmem:[#allocation3 + $0x68] sm:$0xf]
    %v3064 = vld [vmem:[#allocation3 + $0x6c] sm:$0xff]
    %v3065 = vld [vmem:[#allocation3 + $0x74] sm:$0xf]
    %v3066 = vld [vmem:[#allocation3 + $0x78] sm:$0xff]
    %v3067 = vld [vmem:[#allocation3 + $0x80] sm:$0xf]
    %v3068 = vld [vmem:[#allocation3 + $0x84] sm:$0xff]
    %v3069 = vld [vmem:[#allocation3 + $0x8c] sm:$0xf]
    %v3070 = vld [vmem:[#allocation3 + $0x90] sm:$0xff]
    %v3071 = vld [vmem:[#allocation3 + $0x98] sm:$0xf]
    %v3072 = vld [vmem:[#allocation3 + $0x9c] sm:$0xff]
    %v3073 = vld [vmem:[#allocation3 + $0xa4] sm:$0xf]
    %v3074 = vld [vmem:[%s4] sm:$0xf]
    %v3075 = vld [vmem:[%s4 + $0x4] sm:$0xf]
    %v3076 = vld [vmem:[%s4 + $0x8] sm:$0xf]
    %v3077 = vld [vmem:[%s4 + $0xc] sm:$0xf]
    %v3078 = vld [vmem:[%s4 + $0x10] sm:$0xf]
    %v3079 = vld [vmem:[%s4 + $0x14] sm:$0xf]
    %v3080 = vld [vmem:[%s4 + $0x18] sm:$0xf]
    %v3081 = vld [vmem:[%s4 + $0x1c] sm:$0xf]
    %v3082 = vld [vmem:[%s4 + $0x20] sm:$0xf]
    %v3083 = vld [vmem:[%s4 + $0x24] sm:$0xf]
    %v3084 = vld [vmem:[%s4 + $0x28] sm:$0xf]
    %v3085 = vld [vmem:[%s4 + $0x2c] sm:$0xf]
    %v3086 = vld [vmem:[%s4 + $0x30] sm:$0xf]
    %v3087 = vld [vmem:[%s4 + $0x34] sm:$0xf]
    %v3088 = vld [vmem:[%s4 + $0x38] sm:$0xf]
    %v3089 = vld [vmem:[%s4 + $0x3c] sm:$0xf]
    %v3090 = vld [vmem:[%s4 + $0x40] sm:$0xf]
    %v3091 = vld [vmem:[%s4 + $0x44] sm:$0xf]
    %v3092 = vld [vmem:[%s4 + $0x48] sm:$0xf]
    %v3093 = vld [vmem:[%s4 + $0x4c] sm:$0xf]
    %v3094 = vld [vmem:[%s4 + $0x50] sm:$0xf]
    %v3095 = vld [vmem:[%s4 + $0x54] sm:$0xf]
    %v3096 = vld [vmem:[%s4 + $0x58] sm:$0xf]
    %v3097 = vld [vmem:[%s4 + $0x5c] sm:$0xf]
    %v3098 = vld [vmem:[%s4 + $0x60] sm:$0xf]
    %v3099 = vld [vmem:[%s4 + $0x64] sm:$0xf]
    %v3100 = vld [vmem:[%s4 + $0x68] sm:$0xf]
    %v3101 = vld [vmem:[%s4 + $0x6c] sm:$0xf]
    %v3102 = vld [vmem:[%s4 + $0x70] sm:$0xf]
    %v3103 = vld [vmem:[%s4 + $0x74] sm:$0xf]
    %v3104 = vld [vmem:[%s4 + $0x78] sm:$0xf]
    %v3105 = vld [vmem:[%s4 + $0x7c] sm:$0xf]
    %v3106 = vld [vmem:[%s4 + $0x80] sm:$0xf]
    %v3107 = vld [vmem:[%s4 + $0x84] sm:$0xf]
    %v3108 = vld [vmem:[%s4 + $0x88] sm:$0xf]
    %v3109 = vld [vmem:[%s4 + $0x8c] sm:$0xf]
    %v3110 = vld [vmem:[%s5] sm:$0x1]
    %v3112 = vlaneseq
    %v3113 = vshrl.u32 %v3112, 7
    %v3114 = vsub.s32 0, %v3113
    %v3115 = vrot.slane %v3110, %v3114
    %v3145 = vunpack.c.l.b16 %v3046
    %v3146 = vunpack.c.h.b16 %v3046
    %v3147 = vunpack.c.l.b16 %v3047
    %v3148 = vunpack.c.l.b16 %v3048
    %v3149 = vunpack.c.h.b16 %v3048
    %v3150 = vunpack.c.l.b16 %v3049
    %v3151 = vunpack.c.l.b16 %v3050
    %v3152 = vunpack.c.h.b16 %v3050
    %v3153 = vunpack.c.l.b16 %v3051
    %v3154 = vunpack.c.l.b16 %v3052
    %v3155 = vunpack.c.h.b16 %v3052
    %v3156 = vunpack.c.l.b16 %v3053
    %v3157 = vunpack.c.l.b16 %v3054
    %v3158 = vunpack.c.h.b16 %v3054
    %v3159 = vunpack.c.l.b16 %v3055
    %v3160 = vunpack.c.l.b16 %v3056
    %v3161 = vunpack.c.h.b16 %v3056
    %v3162 = vunpack.c.l.b16 %v3057
    %v3163 = vunpack.c.l.b16 %v3058
    %v3164 = vunpack.c.h.b16 %v3058
    %v3165 = vunpack.c.l.b16 %v3059
    %v3166 = vunpack.c.l.b16 %v3060
    %v3167 = vunpack.c.h.b16 %v3060
    %v3168 = vunpack.c.l.b16 %v3061
    %v3169 = vunpack.c.l.b16 %v3062
    %v3170 = vunpack.c.h.b16 %v3062
    %v3171 = vunpack.c.l.b16 %v3063
    %v3172 = vunpack.c.l.b16 %v3064
    %v3173 = vunpack.c.h.b16 %v3064
    %v3174 = vunpack.c.l.b16 %v3065
    %v3175 = vunpack.c.l.b16 %v3066
    %v3176 = vunpack.c.h.b16 %v3066
    %v3177 = vunpack.c.l.b16 %v3067
    %v3178 = vunpack.c.l.b16 %v3068
    %v3179 = vunpack.c.h.b16 %v3068
    %v3180 = vunpack.c.l.b16 %v3069
    %v3181 = vunpack.c.l.b16 %v3070
    %v3182 = vunpack.c.h.b16 %v3070
    %v3183 = vunpack.c.l.b16 %v3071
    %v3184 = vunpack.c.l.b16 %v3072
    %v3185 = vunpack.c.h.b16 %v3072
    %v3186 = vunpack.c.l.b16 %v3073
    %v3187 = vpack.c.b16 %v3148, %v3145
    %v3188 = vpack.c.b16 %v3149, %v3146
    %v3189 = vpack.c.b16 %v3150, %v3147
    %v3190 = vpack.c.b16 %v3154, %v3151
    %v3191 = vpack.c.b16 %v3155, %v3152
    %v3192 = vpack.c.b16 %v3156, %v3153
    %v3193 = vpack.c.b16 %v3160, %v3157
    %v3194 = vpack.c.b16 %v3161, %v3158
    %v3195 = vpack.c.b16 %v3162, %v3159
    %v3196 = vpack.c.b16 %v3166, %v3163
    %v3197 = vpack.c.b16 %v3167, %v3164
    %v3198 = vpack.c.b16 %v3168, %v3165
    %v3199 = vpack.c.b16 %v3172, %v3169
    %v3200 = vpack.c.b16 %v3173, %v3170
    %v3201 = vpack.c.b16 %v3174, %v3171
    %v3202 = vpack.c.b16 %v3178, %v3175
    %v3203 = vpack.c.b16 %v3179, %v3176
    %v3204 = vpack.c.b16 %v3180, %v3177
    %v3205 = vpack.c.b16 %v3184, %v3181
    %v3206 = vpack.c.b16 %v3185, %v3182
    %v3207 = vpack.c.b16 %v3186, %v3183
    %v3258 = vunpack.c.l.b16 %v3074
    %v3259 = vunpack.c.l.b16 %v3075
    %v3260 = vunpack.c.l.b16 %v3076
    %v3261 = vunpack.c.l.b16 %v3077
    %v3262 = vunpack.c.l.b16 %v3078
    %v3263 = vunpack.c.l.b16 %v3079
    %v3264 = vunpack.c.l.b16 %v3080
    %v3265 = vunpack.c.l.b16 %v3081
    %v3266 = vunpack.c.l.b16 %v3082
    %v3267 = vunpack.c.l.b16 %v3083
    %v3268 = vunpack.c.l.b16 %v3084
    %v3269 = vunpack.c.l.b16 %v3085
    %v3270 = vunpack.c.l.b16 %v3086
    %v3271 = vunpack.c.l.b16 %v3087
    %v3272 = vunpack.c.l.b16 %v3088
    %v3273 = vunpack.c.l.b16 %v3089
    %v3274 = vunpack.c.l.b16 %v3090
    %v3275 = vunpack.c.l.b16 %v3091
    %v3276 = vunpack.c.l.b16 %v3092
    %v3277 = vunpack.c.l.b16 %v3093
    %v3278 = vunpack.c.l.b16 %v3094
    %v3279 = vunpack.c.l.b16 %v3095
    %v3280 = vunpack.c.l.b16 %v3096
    %v3281 = vunpack.c.l.b16 %v3097
    %v3282 = vunpack.c.l.b16 %v3098
    %v3283 = vunpack.c.l.b16 %v3099
    %v3284 = vunpack.c.l.b16 %v3100
    %v3285 = vunpack.c.l.b16 %v3101
    %v3286 = vunpack.c.l.b16 %v3102
    %v3287 = vunpack.c.l.b16 %v3103
    %v3288 = vunpack.c.l.b16 %v3104
    %v3289 = vunpack.c.l.b16 %v3105
    %v3290 = vunpack.c.l.b16 %v3106
    %v3291 = vunpack.c.l.b16 %v3107
    %v3292 = vunpack.c.l.b16 %v3108
    %v3293 = vunpack.c.l.b16 %v3109
    %v3294 = vpack.c.b16 %v3259, %v3258
    %v3295 = vpack.c.b16 %v3261, %v3260
    %v3296 = vpack.c.b16 %v3263, %v3262
    %v3297 = vpack.c.b16 %v3265, %v3264
    %v3298 = vpack.c.b16 %v3267, %v3266
    %v3299 = vpack.c.b16 %v3269, %v3268
    %v3300 = vpack.c.b16 %v3271, %v3270
    %v3301 = vpack.c.b16 %v3273, %v3272
    %v3302 = vpack.c.b16 %v3275, %v3274
    %v3303 = vpack.c.b16 %v3277, %v3276
    %v3304 = vpack.c.b16 %v3279, %v3278
    %v3305 = vpack.c.b16 %v3281, %v3280
    %v3306 = vpack.c.b16 %v3283, %v3282
    %v3307 = vpack.c.b16 %v3285, %v3284
    %v3308 = vpack.c.b16 %v3287, %v3286
    %v3309 = vpack.c.b16 %v3289, %v3288
    %v3310 = vpack.c.b16 %v3291, %v3290
    %v3311 = vpack.c.b16 %v3293, %v3292
    %v3331 = vsel %vm37, %v3189, 0
    %v3334 = vsel %vm37, %v3192, 0
    %v3337 = vsel %vm37, %v3195, 0
    %v3340 = vsel %vm37, %v3198, 0
    %v3343 = vsel %vm37, %v3201, 0
    %v3346 = vsel %vm37, %v3204, 0
    %v3349 = vsel %vm37, %v3207, 0
    %3351 = vmatprep.subr.bf16.mxu0 0
    %3352 = vmatpush1.bf16.msra.mxu0 %v3301
    %3353 = vmatprep.subr.bf16.mxu0 0
    %3354 = vmatpush1.bf16.msra.mxu0 %v3300
    %3355 = vmatprep.subr.bf16.mxu0 0
    %3356 = vmatpush1.bf16.msra.mxu0 %v3299
    %3357 = vmatprep.subr.bf16.mxu0 0
    %3358 = vmatpush1.bf16.msra.mxu0 %v3298
    %3359 = vmatprep.subr.bf16.mxu0 0
    %3360 = vmatpush1.bf16.msra.mxu0 %v3297
    %3361 = vmatprep.subr.bf16.mxu0 0
    %3362 = vmatpush1.bf16.msra.mxu0 %v3296
    %3363 = vmatprep.subr.bf16.mxu0 0
    %3364 = vmatpush1.bf16.msra.mxu0 %v3295
    %3365 = vmatprep.subr.bf16.mxu0 0
    %3366 = vmatpush1.bf16.msra.mxu0 %v3294
    %3367 = vmatprep.subr.bf16.mxu0 0
    %3368 = vmatpush2.bf16.msra.mxu0 %v3309
    %3369 = vmatprep.subr.bf16.mxu0 0
    %3370 = vmatpush2.bf16.msra.mxu0 %v3308
    %3371 = vmatprep.subr.bf16.mxu0 0
    %3372 = vmatpush2.bf16.msra.mxu0 %v3307
    %3373 = vmatprep.subr.bf16.mxu0 0
    %3374 = vmatpush2.bf16.msra.mxu0 %v3306
    %3375 = vmatprep.subr.bf16.mxu0 0
    %3376 = vmatpush2.bf16.msra.mxu0 %v3305
    %3377 = vmatprep.subr.bf16.mxu0 0
    %3378 = vmatpush2.bf16.msra.mxu0 %v3304
    %3379 = vmatprep.subr.bf16.mxu0 0
    %3380 = vmatpush2.bf16.msra.mxu0 %v3303
    %3381 = vmatprep.subr.bf16.mxu0 0
    %3382 = vmatpush2.bf16.msra.mxu0 %v3302
    %3383 = vmatprep.mubr.bf16.mxu0 %v3188
    %3384 = vmatmul.mubr.bf16.gmra.mxu0 %v3187
    %v3385 = vpop.f32.mrf.mxu0
    %v3386 = vadd.f32 %v3115, %v3385
    %v3387 = vpop.f32.mrf.mxu0
    %v3388 = vpop.f32.mrf.mxu0
    %v3389 = vadd.f32 %v3115, %v3388
    %v3390 = vpop.f32.mrf.mxu0
    %3391 = vmatprep.mubr.bf16.mxu0 %v3191
    %3392 = vmatmul.mubr.bf16.gmra.mxu0 %v3190
    %v3393 = vpop.f32.mrf.mxu0
    %v3394 = vadd.f32 %v3115, %v3393
    %v3395 = vpop.f32.mrf.mxu0
    %v3396 = vpop.f32.mrf.mxu0
    %v3397 = vadd.f32 %v3115, %v3396
    %v3398 = vpop.f32.mrf.mxu0
    %3399 = vmatprep.mubr.bf16.mxu0 %v3194
    %3400 = vmatmul.mubr.bf16.gmra.mxu0 %v3193
    %v3401 = vpop.f32.mrf.mxu0
    %v3402 = vadd.f32 %v3115, %v3401
    %v3403 = vpop.f32.mrf.mxu0
    %v3404 = vpop.f32.mrf.mxu0
    %v3405 = vadd.f32 %v3115, %v3404
    %v3406 = vpop.f32.mrf.mxu0
    %3407 = vmatprep.mubr.bf16.mxu0 %v3197
    %3408 = vmatmul.mubr.bf16.gmra.mxu0 %v3196
    %v3409 = vpop.f32.mrf.mxu0
    %v3410 = vadd.f32 %v3115, %v3409
    %v3411 = vpop.f32.mrf.mxu0
    %v3412 = vpop.f32.mrf.mxu0
    %v3413 = vadd.f32 %v3115, %v3412
    %v3414 = vpop.f32.mrf.mxu0
    %3415 = vmatprep.mubr.bf16.mxu0 %v3200
    %3416 = vmatmul.mubr.bf16.gmra.mxu0 %v3199
    %v3417 = vpop.f32.mrf.mxu0
    %v3418 = vadd.f32 %v3115, %v3417
    %v3419 = vpop.f32.mrf.mxu0
    %v3420 = vpop.f32.mrf.mxu0
    %v3421 = vadd.f32 %v3115, %v3420
    %v3422 = vpop.f32.mrf.mxu0
    %3423 = vmatprep.mubr.bf16.mxu0 %v3203
    %3424 = vmatmul.mubr.bf16.gmra.mxu0 %v3202
    %v3425 = vpop.f32.mrf.mxu0
    %v3426 = vadd.f32 %v3115, %v3425
    %v3427 = vpop.f32.mrf.mxu0
    %v3428 = vpop.f32.mrf.mxu0
    %v3429 = vadd.f32 %v3115, %v3428
    %v3430 = vpop.f32.mrf.mxu0
    %3431 = vmatprep.mubr.bf16.mxu0 %v3206
    %3432 = vmatmul.mubr.bf16.gmra.mxu0 %v3205
    %v3433 = vpop.f32.mrf.mxu0
    %v3434 = vadd.f32 %v3115, %v3433
    %v3435 = vpop.f32.mrf.mxu0
    %v3436 = vpop.f32.mrf.mxu0
    %v3437 = vadd.f32 %v3115, %v3436
    %v3438 = vpop.f32.mrf.mxu0
    %3439 = vdwg.mxu0
    %3440 = vmatprep.subr.bf16.mxu0 0
    %3441 = vmatpush1.bf16.msra.mxu0 0
    %3442 = vmatprep.subr.bf16.mxu0 0
    %3443 = vmatpush1.bf16.msra.mxu0 0
    %3444 = vmatprep.subr.bf16.mxu0 0
    %3445 = vmatpush1.bf16.msra.mxu0 0
    %3446 = vmatprep.subr.bf16.mxu0 0
    %3447 = vmatpush1.bf16.msra.mxu0 0
    %3448 = vmatprep.subr.bf16.mxu0 0
    %3449 = vmatpush1.bf16.msra.mxu0 0
    %3450 = vmatprep.subr.bf16.mxu0 0
    %3451 = vmatpush1.bf16.msra.mxu0 0
    %3452 = vmatprep.subr.bf16.mxu0 0
    %3453 = vmatpush1.bf16.msra.mxu0 %v3311
    %3454 = vmatprep.subr.bf16.mxu0 0
    %3455 = vmatpush1.bf16.msra.mxu0 %v3310
    %3456 = vmatprep.subr.bf16.mxu0 0
    %3457 = vmatpush2.bf16.msra.mxu0 0
    %3458 = vmatprep.subr.bf16.mxu0 0
    %3459 = vmatpush2.bf16.msra.mxu0 0
    %3460 = vmatprep.subr.bf16.mxu0 0
    %3461 = vmatpush2.bf16.msra.mxu0 0
    %3462 = vmatprep.subr.bf16.mxu0 0
    %3463 = vmatpush2.bf16.msra.mxu0 0
    %3464 = vmatprep.subr.bf16.mxu0 0
    %3465 = vmatpush2.bf16.msra.mxu0 0
    %3466 = vmatprep.subr.bf16.mxu0 0
    %3467 = vmatpush2.bf16.msra.mxu0 0
    %3468 = vmatprep.subr.bf16.mxu0 0
    %3469 = vmatpush2.bf16.msra.mxu0 0
    %3470 = vmatprep.subr.bf16.mxu0 0
    %3471 = vmatpush2.bf16.msra.mxu0 0
    %3472 = vmatprep.mubr.bf16.mxu0 0
    %3473 = vmatmul.mubr.bf16.gmra.mxu0 %v3331
    %v3474 = vpop.f32.mrf.mxu0
    %v3475 = vadd.f32 %v3386, %v3474
    %v3476 = vpop.f32.mrf.mxu0
    %v3477 = vpop.f32.mrf.mxu0
    %v3478 = vadd.f32 %v3389, %v3477
    %v3479 = vpop.f32.mrf.mxu0
    %3480 = vmatprep.mubr.bf16.mxu0 0
    %3481 = vmatmul.mubr.bf16.gmra.mxu0 %v3334
    %v3482 = vpop.f32.mrf.mxu0
    %v3483 = vadd.f32 %v3394, %v3482
    %v3484 = vpop.f32.mrf.mxu0
    %v3485 = vpop.f32.mrf.mxu0
    %v3486 = vadd.f32 %v3397, %v3485
    %v3487 = vpop.f32.mrf.mxu0
    %3488 = vmatprep.mubr.bf16.mxu0 0
    %3489 = vmatmul.mubr.bf16.gmra.mxu0 %v3337
    %v3490 = vpop.f32.mrf.mxu0
    %v3491 = vadd.f32 %v3402, %v3490
    %v3492 = vpop.f32.mrf.mxu0
    %v3493 = vpop.f32.mrf.mxu0
    %v3494 = vadd.f32 %v3405, %v3493
    %v3495 = vpop.f32.mrf.mxu0
    %3496 = vmatprep.mubr.bf16.mxu0 0
    %3497 = vmatmul.mubr.bf16.gmra.mxu0 %v3340
    %v3498 = vpop.f32.mrf.mxu0
    %v3499 = vadd.f32 %v3410, %v3498
    %v3500 = vpop.f32.mrf.mxu0
    %v3501 = vpop.f32.mrf.mxu0
    %v3502 = vadd.f32 %v3413, %v3501
    %v3503 = vpop.f32.mrf.mxu0
    %3504 = vmatprep.mubr.bf16.mxu0 0
    %3505 = vmatmul.mubr.bf16.gmra.mxu0 %v3343
    %v3506 = vpop.f32.mrf.mxu0
    %v3507 = vadd.f32 %v3418, %v3506
    %v3508 = vpop.f32.mrf.mxu0
    %v3509 = vpop.f32.mrf.mxu0
    %v3510 = vadd.f32 %v3421, %v3509
    %v3511 = vpop.f32.mrf.mxu0
    %3512 = vmatprep.mubr.bf16.mxu0 0
    %3513 = vmatmul.mubr.bf16.gmra.mxu0 %v3346
    %v3514 = vpop.f32.mrf.mxu0
    %v3515 = vadd.f32 %v3426, %v3514
    %v3516 = vpop.f32.mrf.mxu0
    %v3517 = vpop.f32.mrf.mxu0
    %v3518 = vadd.f32 %v3429, %v3517
    %v3519 = vpop.f32.mrf.mxu0
    %3520 = vmatprep.mubr.bf16.mxu0 0
    %3521 = vmatmul.mubr.bf16.gmra.mxu0 %v3349
    %v3522 = vpop.f32.mrf.mxu0
    %v3523 = vadd.f32 %v3434, %v3522
    %v3524 = vpop.f32.mrf.mxu0
    %v3525 = vpop.f32.mrf.mxu0
    %v3526 = vadd.f32 %v3437, %v3525
    %v3527 = vpop.f32.mrf.mxu0
    %3528 = vdwg.mxu0
    %v3529 = vmax.f32 %v3475, 0.0
    %v3530 = vmax.f32 %v3478, 0.0
    %v3531 = vmax.f32 %v3483, 0.0
    %v3532 = vmax.f32 %v3486, 0.0
    %v3533 = vmax.f32 %v3491, 0.0
    %v3534 = vmax.f32 %v3494, 0.0
    %v3535 = vmax.f32 %v3499, 0.0
    %v3536 = vmax.f32 %v3502, 0.0
    %v3537 = vmax.f32 %v3507, 0.0
    %v3538 = vmax.f32 %v3510, 0.0
    %v3539 = vmax.f32 %v3515, 0.0
    %v3540 = vmax.f32 %v3518, 0.0
    %v3541 = vmax.f32 %v3523, 0.0
    %v3542 = vmax.f32 %v3526, 0.0
    %3543 = vst.msk [vmem:[#allocation2 + $0x10] sm:$0xff] %vm37, %v3529
    %3544 = vst.msk [vmem:[#allocation2 + $0x18] sm:$0xff] %vm37, %v3530
    %3545 = vst.msk [vmem:[#allocation2 + $0x20] sm:$0xff] %vm37, %v3531
    %3546 = vst.msk [vmem:[#allocation2 + $0x28] sm:$0xff] %vm37, %v3532
    %3547 = vst.msk [vmem:[#allocation2 + $0x30] sm:$0xff] %vm37, %v3533
    %3548 = vst.msk [vmem:[#allocation2 + $0x38] sm:$0xff] %vm37, %v3534
    %3549 = vst.msk [vmem:[#allocation2 + $0x40] sm:$0xff] %vm37, %v3535
    %3550 = vst.msk [vmem:[#allocation2 + $0x48] sm:$0xff] %vm37, %v3536
    %3551 = vst.msk [vmem:[#allocation2 + $0x50] sm:$0xff] %vm37, %v3537
    %3552 = vst.msk [vmem:[#allocation2 + $0x58] sm:$0xff] %vm37, %v3538
    %3553 = vst.msk [vmem:[#allocation2 + $0x60] sm:$0xff] %vm37, %v3539
    %3554 = vst.msk [vmem:[#allocation2 + $0x68] sm:$0xff] %vm37, %v3540
    %3555 = vst.msk [vmem:[#allocation2 + $0x70] sm:$0xff] %vm37, %v3541
    %3556 = vst.msk [vmem:[#allocation2 + $0x78] sm:$0xff] %vm37, %v3542
    %v3557 = vld [vmem:[#allocation2 + $0x10] sm:$0xff]
    %v3558 = vld [vmem:[#allocation2 + $0x18] sm:$0xff]
    %v3559 = vld [vmem:[#allocation2 + $0x20] sm:$0xff]
    %v3560 = vld [vmem:[#allocation2 + $0x28] sm:$0xff]
    %v3561 = vld [vmem:[#allocation2 + $0x30] sm:$0xff]
    %v3562 = vld [vmem:[#allocation2 + $0x38] sm:$0xff]
    %v3563 = vld [vmem:[#allocation2 + $0x40] sm:$0xff]
    %v3564 = vld [vmem:[#allocation2 + $0x48] sm:$0xff]
    %v3565 = vld [vmem:[#allocation2 + $0x50] sm:$0xff]
    %v3566 = vld [vmem:[#allocation2 + $0x58] sm:$0xff]
    %v3567 = vld [vmem:[#allocation2 + $0x60] sm:$0xff]
    %v3568 = vld [vmem:[#allocation2 + $0x68] sm:$0xff]
    %v3569 = vld [vmem:[#allocation2 + $0x70] sm:$0xff]
    %v3570 = vld [vmem:[#allocation2 + $0x78] sm:$0xff]
    %v3571 = vld [vmem:[#allocation2 + $0x11] sm:$0xff]
    %v3572 = vld [vmem:[#allocation2 + $0x19] sm:$0xff]
    %v3573 = vld [vmem:[#allocation2 + $0x21] sm:$0xff]
    %v3574 = vld [vmem:[#allocation2 + $0x29] sm:$0xff]
    %v3575 = vld [vmem:[#allocation2 + $0x31] sm:$0xff]
    %v3576 = vld [vmem:[#allocation2 + $0x39] sm:$0xff]
    %v3577 = vld [vmem:[#allocation2 + $0x41] sm:$0xff]
    %v3578 = vld [vmem:[#allocation2 + $0x49] sm:$0xff]
    %v3579 = vld [vmem:[#allocation2 + $0x51] sm:$0xff]
    %v3580 = vld [vmem:[#allocation2 + $0x59] sm:$0xff]
    %v3581 = vld [vmem:[#allocation2 + $0x61] sm:$0xff]
    %v3582 = vld [vmem:[#allocation2 + $0x69] sm:$0xff]
    %v3583 = vld [vmem:[#allocation2 + $0x71] sm:$0xff]
    %v3584 = vld [vmem:[#allocation2 + $0x79] sm:$0xff]
    %v3585 = vld [vmem:[#allocation2 + $0x80] sm:$0xff]
    %v3586 = vld [vmem:[#allocation2 + $0x81] sm:$0xff]
    %v3587 = vmax.f32 %v3557, %v3571
    %v3588 = vmax.f32 %v3558, %v3572
    %v3589 = vmax.f32 %v3559, %v3573
    %v3590 = vmax.f32 %v3560, %v3574
    %v3591 = vmax.f32 %v3561, %v3575
    %v3592 = vmax.f32 %v3562, %v3576
    %v3593 = vmax.f32 %v3563, %v3577
    %v3594 = vmax.f32 %v3564, %v3578
    %v3595 = vmax.f32 %v3565, %v3579
    %v3596 = vmax.f32 %v3566, %v3580
    %v3597 = vmax.f32 %v3567, %v3581
    %v3598 = vmax.f32 %v3568, %v3582
    %v3599 = vmax.f32 %v3569, %v3583
    %v3600 = vmax.f32 %v3570, %v3584
    %v3601 = vmax.f32 %v3585, %v3586
    %v3602 = vmax.f32 %v3587, %v3588
    %v3603 = vmax.f32 %v3588, %v3589
    %v3604 = vmax.f32 %v3589, %v3590
    %v3605 = vmax.f32 %v3590, %v3591
    %v3606 = vmax.f32 %v3591, %v3592
    %v3607 = vmax.f32 %v3592, %v3593
    %v3608 = vmax.f32 %v3593, %v3594
    %v3609 = vmax.f32 %v3594, %v3595
    %v3610 = vmax.f32 %v3595, %v3596
    %v3611 = vmax.f32 %v3596, %v3597
    %v3612 = vmax.f32 %v3597, %v3598
    %v3613 = vmax.f32 %v3598, %v3599
    %v3614 = vmax.f32 %v3599, %v3600
    %v3615 = vmax.f32 %v3600, %v3601
    %3616 = vst.msk [vmem:[#allocation2 + $0x10] sm:$0xff] %vm37, %v3602
    %3617 = vst.msk [vmem:[#allocation2 + $0x18] sm:$0xff] %vm37, %v3603
    %3618 = vst.msk [vmem:[#allocation2 + $0x20] sm:$0xff] %vm37, %v3604
    %3619 = vst.msk [vmem:[#allocation2 + $0x28] sm:$0xff] %vm37, %v3605
    %3620 = vst.msk [vmem:[#allocation2 + $0x30] sm:$0xff] %vm37, %v3606
    %3621 = vst.msk [vmem:[#allocation2 + $0x38] sm:$0xff] %vm37, %v3607
    %3622 = vst.msk [vmem:[#allocation2 + $0x40] sm:$0xff] %vm37, %v3608
    %3623 = vst.msk [vmem:[#allocation2 + $0x48] sm:$0xff] %vm37, %v3609
    %3624 = vst.msk [vmem:[#allocation2 + $0x50] sm:$0xff] %vm37, %v3610
    %3625 = vst.msk [vmem:[#allocation2 + $0x58] sm:$0xff] %vm37, %v3611
    %3626 = vst.msk [vmem:[#allocation2 + $0x60] sm:$0xff] %vm37, %v3612
    %3627 = vst.msk [vmem:[#allocation2 + $0x68] sm:$0xff] %vm37, %v3613
    %3628 = vst.msk [vmem:[#allocation2 + $0x70] sm:$0xff] %vm37, %v3614
    %3629 = vst.msk [vmem:[#allocation2 + $0x78] sm:$0xff] %vm37, %v3615
    %s3630 = scalar_lea.vmem [#allocation2], 25
    %v3631 = vld [vmem:[%s3630] ss:$56 sm:$0x3]
    %v3632 = vpack.c.bf16 %v3631, %v3631
    %vm3633 = vcmask 253952
    %3634 = vst.msk [vmem:[#allocation3] sm:$0x1] %vm3633, %v3632
    %s3635 = scalar_lea.vmem [#allocation2], 26
    %v3636 = vld [vmem:[%s3635] ss:$56 sm:$0x3]
    %v3637 = vpack.c.bf16 %v3636, %v3636
    %v3639 = vunpack.c.l.b16 %v3637
    %v3640 = vpack.c.b16 %v3639, %v3639
    %3641 = vrot.lane.b32.xlu0 %v3640, 32
    %v3642 = vpop.permute.xlu0 %3641
    %vm3644 = vcmask 516352
    %3645 = vst.msk [vmem:[#allocation3] sm:$0x1] %vm3644, %v3642
    %s3646 = scalar_lea.vmem [#allocation2], 27
    %v3647 = vld [vmem:[%s3646] ss:$56 sm:$0x3]
    %v3648 = vpack.c.bf16 %v3647, %v3647
    %v3650 = vunpack.c.l.b16 %v3648
    %v3651 = vpack.c.b16 %v3650, %v3650
    %3652 = vrot.lane.b32.xlu0 %v3651, 64
    %v3653 = vpop.permute.xlu0 %3652
    %vm3655 = vcmask 778752
    %3656 = vst.msk [vmem:[#allocation3] sm:$0x1] %vm3655, %v3653
    %s3657 = scalar_lea.vmem [#allocation2], 33
    %v3658 = vld [vmem:[%s3657] ss:$56 sm:$0x3]
    %v3659 = vpack.c.bf16 %v3658, %v3658
    %v3661 = vunpack.c.l.b16 %v3659
    %v3662 = vpack.c.b16 %v3661, %v3661
    %3663 = vrot.lane.b32.xlu0 %v3662, 96
    %v3664 = vpop.permute.xlu0 %3663
    %vm3666 = vcmask 1041152
    %3667 = vst.msk [vmem:[#allocation3] sm:$0x1] %vm3666, %v3664
    %s3668 = scalar_lea.vmem [#allocation2], 34
    %v3669 = vld [vmem:[%s3668] ss:$56 sm:$0x3]
    %v3670 = vpack.c.bf16 %v3669, %v3669
    %3671 = vst.msk [vmem:[#allocation3 + $0x4] sm:$0x1] %vm3633, %v3670
    %s3672 = scalar_lea.vmem [#allocation2], 35
    %v3673 = vld [vmem:[%s3672] ss:$56 sm:$0x3]
    %v3674 = vpack.c.bf16 %v3673, %v3673
    %v3676 = vunpack.c.l.b16 %v3674
    %v3677 = vpack.c.b16 %v3676, %v3676
    %3678 = vrot.lane.b32.xlu0 %v3677, 32
    %v3679 = vpop.permute.xlu0 %3678
    %3681 = vst.msk [vmem:[#allocation3 + $0x4] sm:$0x1] %vm3644, %v3679
    %s3682 = scalar_lea.vmem [#allocation2], 41
    %v3683 = vld [vmem:[%s3682] ss:$56 sm:$0x3]
    %v3684 = vpack.c.bf16 %v3683, %v3683
    %v3686 = vunpack.c.l.b16 %v3684
    %v3687 = vpack.c.b16 %v3686, %v3686
    %3688 = vrot.lane.b32.xlu0 %v3687, 64
    %v3689 = vpop.permute.xlu0 %3688
    %3691 = vst.msk [vmem:[#allocation3 + $0x4] sm:$0x1] %vm3655, %v3689
    %s3692 = scalar_lea.vmem [#allocation2], 42
    %v3693 = vld [vmem:[%s3692] ss:$56 sm:$0x3]
    %v3694 = vpack.c.bf16 %v3693, %v3693
    %v3696 = vunpack.c.l.b16 %v3694
    %v3697 = vpack.c.b16 %v3696, %v3696
    %3698 = vrot.lane.b32.xlu0 %v3697, 96
    %v3699 = vpop.permute.xlu0 %3698
    %3701 = vst.msk [vmem:[#allocation3 + $0x4] sm:$0x1] %vm3666, %v3699
    %s3702 = scalar_lea.vmem [#allocation2], 43
    %v3703 = vld [vmem:[%s3702] ss:$56 sm:$0x3]
    %v3704 = vpack.c.bf16 %v3703, %v3703
    %3705 = vst.msk [vmem:[#allocation3 + $0x8] sm:$0x1] %vm3633, %v3704
    %v3706 = vld [vmem:[#allocation3] sm:$0x11]
    %v3707 = vld [vmem:[#allocation3 + $0x8] sm:$0x1]
    %v3708 = vld [vmem:[%s6] sm:$0xf]
    %v3709 = vld [vmem:[%s6 + $0x4] sm:$0xf]
    %v3710 = vld [vmem:[%s6 + $0x8] sm:$0xf]
    %v3711 = vld [vmem:[%s6 + $0xc] sm:$0xf]
    %v3712 = vld [vmem:[%s6 + $0x10] sm:$0xf]
    %v3713 = vld [vmem:[%s6 + $0x14] sm:$0xf]
    %v3714 = vld [vmem:[%s6 + $0x18] sm:$0xf]
    %v3715 = vld [vmem:[%s6 + $0x1c] sm:$0xf]
    %v3716 = vld [vmem:[%s6 + $0x20] sm:$0xf]
    %v3717 = vld [vmem:[%s6 + $0x24] sm:$0xf]
    %v3718 = vld [vmem:[%s6 + $0x28] sm:$0xf]
    %v3719 = vld [vmem:[%s6 + $0x2c] sm:$0xf]
    %v3720 = vld [vmem:[%s6 + $0x30] sm:$0xf]
    %v3721 = vld [vmem:[%s6 + $0x34] sm:$0xf]
    %v3722 = vld [vmem:[%s6 + $0x38] sm:$0xf]
    %v3723 = vld [vmem:[%s6 + $0x3c] sm:$0xf]
    %v3724 = vld [vmem:[%s6 + $0x40] sm:$0xf]
    %v3725 = vld [vmem:[%s6 + $0x44] sm:$0xf]
    %v3726 = vld [vmem:[%s6 + $0x48] sm:$0xf]
    %v3727 = vld [vmem:[%s6 + $0x4c] sm:$0xf]
    %v3728 = vld [vmem:[%s6 + $0x50] sm:$0xf]
    %v3729 = vld [vmem:[%s6 + $0x54] sm:$0xf]
    %v3730 = vld [vmem:[%s6 + $0x58] sm:$0xf]
    %v3731 = vld [vmem:[%s6 + $0x5c] sm:$0xf]
    %v3732 = vld [vmem:[%s6 + $0x60] sm:$0xf]
    %v3733 = vld [vmem:[%s6 + $0x64] sm:$0xf]
    %v3734 = vld [vmem:[%s6 + $0x68] sm:$0xf]
    %v3735 = vld [vmem:[%s6 + $0x6c] sm:$0xf]
    %v3736 = vld [vmem:[%s6 + $0x70] sm:$0xf]
    %v3737 = vld [vmem:[%s6 + $0x74] sm:$0xf]
    %v3738 = vld [vmem:[%s6 + $0x78] sm:$0xf]
    %v3739 = vld [vmem:[%s6 + $0x7c] sm:$0xf]
    %v3740 = vld [vmem:[%s6 + $0x80] sm:$0xf]
    %v3741 = vld [vmem:[%s6 + $0x84] sm:$0xf]
    %v3742 = vld [vmem:[%s6 + $0x88] sm:$0xf]
    %v3743 = vld [vmem:[%s6 + $0x8c] sm:$0xf]
    %v3744 = vld [vmem:[%s7] sm:$0x1]
    %v3746 = vlaneseq
    %v3747 = vshrl.u32 %v3746, 7
    %v3748 = vsub.s32 0, %v3747
    %v3749 = vrot.slane %v3744, %v3748
    %v3753 = vunpack.c.l.b16 %v3706
    %v3754 = vunpack.c.h.b16 %v3706
    %v3755 = vunpack.c.l.b16 %v3707
    %v3756 = vpack.c.b16 %v3753, %v3753
    %v3757 = vpack.c.b16 %v3754, %v3754
    %v3758 = vpack.c.b16 %v3755, %v3755
    %v3797 = vunpack.c.l.b16 %v3708
    %v3798 = vunpack.c.l.b16 %v3709
    %v3799 = vunpack.c.l.b16 %v3710
    %v3800 = vunpack.c.l.b16 %v3711
    %v3801 = vunpack.c.l.b16 %v3712
    %v3802 = vunpack.c.l.b16 %v3713
    %v3803 = vunpack.c.l.b16 %v3714
    %v3804 = vunpack.c.l.b16 %v3715
    %v3805 = vunpack.c.l.b16 %v3716
    %v3806 = vunpack.c.l.b16 %v3717
    %v3807 = vunpack.c.l.b16 %v3718
    %v3808 = vunpack.c.l.b16 %v3719
    %v3809 = vunpack.c.l.b16 %v3720
    %v3810 = vunpack.c.l.b16 %v3721
    %v3811 = vunpack.c.l.b16 %v3722
    %v3812 = vunpack.c.l.b16 %v3723
    %v3813 = vunpack.c.l.b16 %v3724
    %v3814 = vunpack.c.l.b16 %v3725
    %v3815 = vunpack.c.l.b16 %v3726
    %v3816 = vunpack.c.l.b16 %v3727
    %v3817 = vunpack.c.l.b16 %v3728
    %v3818 = vunpack.c.l.b16 %v3729
    %v3819 = vunpack.c.l.b16 %v3730
    %v3820 = vunpack.c.l.b16 %v3731
    %v3821 = vunpack.c.l.b16 %v3732
    %v3822 = vunpack.c.l.b16 %v3733
    %v3823 = vunpack.c.l.b16 %v3734
    %v3824 = vunpack.c.l.b16 %v3735
    %v3825 = vunpack.c.l.b16 %v3736
    %v3826 = vunpack.c.l.b16 %v3737
    %v3827 = vunpack.c.l.b16 %v3738
    %v3828 = vunpack.c.l.b16 %v3739
    %v3829 = vunpack.c.l.b16 %v3740
    %v3830 = vunpack.c.l.b16 %v3741
    %v3831 = vunpack.c.l.b16 %v3742
    %v3832 = vunpack.c.l.b16 %v3743
    %v3833 = vpack.c.b16 %v3798, %v3797
    %v3834 = vpack.c.b16 %v3800, %v3799
    %v3835 = vpack.c.b16 %v3802, %v3801
    %v3836 = vpack.c.b16 %v3804, %v3803
    %v3837 = vpack.c.b16 %v3806, %v3805
    %v3838 = vpack.c.b16 %v3808, %v3807
    %v3839 = vpack.c.b16 %v3810, %v3809
    %v3840 = vpack.c.b16 %v3812, %v3811
    %v3841 = vpack.c.b16 %v3814, %v3813
    %v3842 = vpack.c.b16 %v3816, %v3815
    %v3843 = vpack.c.b16 %v3818, %v3817
    %v3844 = vpack.c.b16 %v3820, %v3819
    %v3845 = vpack.c.b16 %v3822, %v3821
    %v3846 = vpack.c.b16 %v3824, %v3823
    %v3847 = vpack.c.b16 %v3826, %v3825
    %v3848 = vpack.c.b16 %v3828, %v3827
    %v3849 = vpack.c.b16 %v3830, %v3829
    %v3850 = vpack.c.b16 %v3832, %v3831
    %v3870 = vsel %vm37, %v3758, 0
    %3872 = vmatprep.subr.bf16.mxu0 0
    %3873 = vmatpush1.bf16.msra.mxu0 %v3840
    %3874 = vmatprep.subr.bf16.mxu0 0
    %3875 = vmatpush1.bf16.msra.mxu0 %v3839
    %3876 = vmatprep.subr.bf16.mxu0 0
    %3877 = vmatpush1.bf16.msra.mxu0 %v3838
    %3878 = vmatprep.subr.bf16.mxu0 0
    %3879 = vmatpush1.bf16.msra.mxu0 %v3837
    %3880 = vmatprep.subr.bf16.mxu0 0
    %3881 = vmatpush1.bf16.msra.mxu0 %v3836
    %3882 = vmatprep.subr.bf16.mxu0 0
    %3883 = vmatpush1.bf16.msra.mxu0 %v3835
    %3884 = vmatprep.subr.bf16.mxu0 0
    %3885 = vmatpush1.bf16.msra.mxu0 %v3834
    %3886 = vmatprep.subr.bf16.mxu0 0
    %3887 = vmatpush1.bf16.msra.mxu0 %v3833
    %3888 = vmatprep.subr.bf16.mxu0 0
    %3889 = vmatpush2.bf16.msra.mxu0 %v3848
    %3890 = vmatprep.subr.bf16.mxu0 0
    %3891 = vmatpush2.bf16.msra.mxu0 %v3847
    %3892 = vmatprep.subr.bf16.mxu0 0
    %3893 = vmatpush2.bf16.msra.mxu0 %v3846
    %3894 = vmatprep.subr.bf16.mxu0 0
    %3895 = vmatpush2.bf16.msra.mxu0 %v3845
    %3896 = vmatprep.subr.bf16.mxu0 0
    %3897 = vmatpush2.bf16.msra.mxu0 %v3844
    %3898 = vmatprep.subr.bf16.mxu0 0
    %3899 = vmatpush2.bf16.msra.mxu0 %v3843
    %3900 = vmatprep.subr.bf16.mxu0 0
    %3901 = vmatpush2.bf16.msra.mxu0 %v3842
    %3902 = vmatprep.subr.bf16.mxu0 0
    %3903 = vmatpush2.bf16.msra.mxu0 %v3841
    %3904 = vmatprep.mubr.bf16.mxu0 %v3757
    %3905 = vmatmul.mubr.bf16.gmra.mxu0 %v3756
    %v3906 = vpop.f32.mrf.mxu0
    %v3907 = vadd.f32 %v3749, %v3906
    %v3908 = vpop.f32.mrf.mxu0
    %v3909 = vpop.f32.mrf.mxu0
    %v3910 = vpop.f32.mrf.mxu0
    %3911 = vdwg.mxu0
    %3912 = vmatprep.subr.bf16.mxu0 0
    %3913 = vmatpush1.bf16.msra.mxu0 0
    %3914 = vmatprep.subr.bf16.mxu0 0
    %3915 = vmatpush1.bf16.msra.mxu0 0
    %3916 = vmatprep.subr.bf16.mxu0 0
    %3917 = vmatpush1.bf16.msra.mxu0 0
    %3918 = vmatprep.subr.bf16.mxu0 0
    %3919 = vmatpush1.bf16.msra.mxu0 0
    %3920 = vmatprep.subr.bf16.mxu0 0
    %3921 = vmatpush1.bf16.msra.mxu0 0
    %3922 = vmatprep.subr.bf16.mxu0 0
    %3923 = vmatpush1.bf16.msra.mxu0 0
    %3924 = vmatprep.subr.bf16.mxu0 0
    %3925 = vmatpush1.bf16.msra.mxu0 %v3850
    %3926 = vmatprep.subr.bf16.mxu0 0
    %3927 = vmatpush1.bf16.msra.mxu0 %v3849
    %3928 = vmatprep.subr.bf16.mxu0 0
    %3929 = vmatpush2.bf16.msra.mxu0 0
    %3930 = vmatprep.subr.bf16.mxu0 0
    %3931 = vmatpush2.bf16.msra.mxu0 0
    %3932 = vmatprep.subr.bf16.mxu0 0
    %3933 = vmatpush2.bf16.msra.mxu0 0
    %3934 = vmatprep.subr.bf16.mxu0 0
    %3935 = vmatpush2.bf16.msra.mxu0 0
    %3936 = vmatprep.subr.bf16.mxu0 0
    %3937 = vmatpush2.bf16.msra.mxu0 0
    %3938 = vmatprep.subr.bf16.mxu0 0
    %3939 = vmatpush2.bf16.msra.mxu0 0
    %3940 = vmatprep.subr.bf16.mxu0 0
    %3941 = vmatpush2.bf16.msra.mxu0 0
    %3942 = vmatprep.subr.bf16.mxu0 0
    %3943 = vmatpush2.bf16.msra.mxu0 0
    %3944 = vmatprep.mubr.bf16.mxu0 0
    %3945 = vmatmul.mubr.bf16.gmra.mxu0 %v3870
    %v3946 = vpop.f32.mrf.mxu0
    %v3947 = vadd.f32 %v3907, %v3946
    %v3948 = vpop.f32.mrf.mxu0
    %v3949 = vpop.f32.mrf.mxu0
    %v3950 = vpop.f32.mrf.mxu0
    %3951 = vdwg.mxu0
    %v3952 = vpack.c.bf16 %v3947, %v3947
    %v3953 = vld [vmem:[%s8] sm:$0xf]
    %v3954 = vld [vmem:[%s8 + $0x4] sm:$0xf]
    %v3955 = vld [vmem:[%s8 + $0x8] sm:$0xf]
    %v3956 = vld [vmem:[%s8 + $0xc] sm:$0xf]
    %v3957 = vld [vmem:[%s8 + $0x10] sm:$0xf]
    %v3958 = vld [vmem:[%s8 + $0x14] sm:$0xf]
    %v3959 = vld [vmem:[%s8 + $0x18] sm:$0xf]
    %v3960 = vld [vmem:[%s8 + $0x1c] sm:$0xf]
    %v3961 = vld [vmem:[%s8 + $0x20] sm:$0xf]
    %v3962 = vld [vmem:[%s8 + $0x24] sm:$0xf]
    %v3963 = vld [vmem:[%s8 + $0x28] sm:$0xf]
    %v3964 = vld [vmem:[%s8 + $0x2c] sm:$0xf]
    %v3965 = vld [vmem:[%s8 + $0x30] sm:$0xf]
    %v3966 = vld [vmem:[%s8 + $0x34] sm:$0xf]
    %v3967 = vld [vmem:[%s8 + $0x38] sm:$0xf]
    %v3968 = vld [vmem:[%s8 + $0x3c] sm:$0xf]
    %v3969 = vld [vmem:[%s9] sm:$0x1]
    %v3971 = vlaneseq
    %v3972 = vshrl.u32 %v3971, 7
    %v3973 = vsub.s32 0, %v3972
    %v3974 = vrot.slane %v3969, %v3973
    %v3992 = vunpack.c.l.b16 %v3953
    %v3993 = vunpack.c.l.b16 %v3954
    %v3994 = vunpack.c.l.b16 %v3955
    %v3995 = vunpack.c.l.b16 %v3956
    %v3996 = vunpack.c.l.b16 %v3957
    %v3997 = vunpack.c.l.b16 %v3958
    %v3998 = vunpack.c.l.b16 %v3959
    %v3999 = vunpack.c.l.b16 %v3960
    %v4000 = vunpack.c.l.b16 %v3961
    %v4001 = vunpack.c.l.b16 %v3962
    %v4002 = vunpack.c.l.b16 %v3963
    %v4003 = vunpack.c.l.b16 %v3964
    %v4004 = vunpack.c.l.b16 %v3965
    %v4005 = vunpack.c.l.b16 %v3966
    %v4006 = vunpack.c.l.b16 %v3967
    %v4007 = vunpack.c.l.b16 %v3968
    %v4008 = vpack.c.b16 %v3993, %v3992
    %v4009 = vpack.c.b16 %v3995, %v3994
    %v4010 = vpack.c.b16 %v3997, %v3996
    %v4011 = vpack.c.b16 %v3999, %v3998
    %v4012 = vpack.c.b16 %v4001, %v4000
    %v4013 = vpack.c.b16 %v4003, %v4002
    %v4014 = vpack.c.b16 %v4005, %v4004
    %v4015 = vpack.c.b16 %v4007, %v4006
    %4024 = vmatprep.subr.bf16.mxu0 0
    %4025 = vmatpush1.bf16.msra.mxu0 %v4015
    %4026 = vmatprep.subr.bf16.mxu0 0
    %4027 = vmatpush1.bf16.msra.mxu0 %v4014
    %4028 = vmatprep.subr.bf16.mxu0 0
    %4029 = vmatpush1.bf16.msra.mxu0 %v4013
    %4030 = vmatprep.subr.bf16.mxu0 0
    %4031 = vmatpush1.bf16.msra.mxu0 %v4012
    %4032 = vmatprep.subr.bf16.mxu0 0
    %4033 = vmatpush1.bf16.msra.mxu0 %v4011
    %4034 = vmatprep.subr.bf16.mxu0 0
    %4035 = vmatpush1.bf16.msra.mxu0 %v4010
    %4036 = vmatprep.subr.bf16.mxu0 0
    %4037 = vmatpush1.bf16.msra.mxu0 %v4009
    %4038 = vmatprep.subr.bf16.mxu0 0
    %4039 = vmatpush1.bf16.msra.mxu0 %v4008
    %4040 = vmatprep.subr.bf16.mxu0 0
    %4041 = vmatpush2.bf16.msra.mxu0 0
    %4042 = vmatprep.subr.bf16.mxu0 0
    %4043 = vmatpush2.bf16.msra.mxu0 0
    %4044 = vmatprep.subr.bf16.mxu0 0
    %4045 = vmatpush2.bf16.msra.mxu0 0
    %4046 = vmatprep.subr.bf16.mxu0 0
    %4047 = vmatpush2.bf16.msra.mxu0 0
    %4048 = vmatprep.subr.bf16.mxu0 0
    %4049 = vmatpush2.bf16.msra.mxu0 0
    %4050 = vmatprep.subr.bf16.mxu0 0
    %4051 = vmatpush2.bf16.msra.mxu0 0
    %4052 = vmatprep.subr.bf16.mxu0 0
    %4053 = vmatpush2.bf16.msra.mxu0 0
    %4054 = vmatprep.subr.bf16.mxu0 0
    %4055 = vmatpush2.bf16.msra.mxu0 0
    %4056 = vmatprep.mubr.bf16.mxu0 0
    %4057 = vmatmul.mubr.bf16.gmra.mxu0 %v3952
    %v4058 = vpop.f32.mrf.mxu0
    %v4059 = vadd.f32 %v3974, %v4058
    %v4060 = vpop.f32.mrf.mxu0
    %v4061 = vpop.f32.mrf.mxu0
    %v4062 = vpop.f32.mrf.mxu0
    %4063 = vdwg.mxu0
    %4064 = vst [vmem:[#allocation4] sm:$0x3] %v4059
    // Predicated region
    $region42: #{mynet2_forward.1} parent=1 // pred_check
      _
    $region43: #{mynet2_forward.1} parent=1 // pred_check_branch
      %4066 = sbr.rel (0) target = $region45
    $region44: #{mynet2_forward.1} parent=1 // pred_region
      %s4068 = ssub.s32 32, 32
      %4069 = vsyncadd [#allocation5], %s4068
      %s4071 = sshll.u32 [#allocation4], 4
      %s4072 = int_to_ptr.vmem [resolvable:$true] %s4071
      %4074 = dma.vmem_to_hbm [thread:$0]  %s4072, 32, %s10, [#allocation5]
    $region45: #{mynet2_forward.1} parent=1 // pred_fallthru
      _
    // Predicated region
    $region46: #{mynet2_forward.1} parent=1 // pred_check
      _
    $region47: #{mynet2_forward.1} parent=1 // pred_check_branch
      %4076 = sbr.rel (0) target = $region49
    $region48: #{mynet2_forward.1} parent=1 // pred_region
      %4077 = dma.done [#allocation5], 32
    $region49: #{mynet2_forward.1} parent=1 // pred_fallthru
      _
    %4078 = vsyncpa [#allocation5], 1

</llo_original>
